<compile_context>
chip_gen: v6e
topology: v6e:2x2x1
jax: 0.10.0
libtpu: 0.0.40
codegen_flags: <defaults>
</compile_context>

<pallas_src>
import functools

import jax
import jax.numpy as jnp
from jax.experimental import pallas as pl
from jax.experimental.pallas import tpu as pltpu


# ---------------------------------------------------------------------------
# configuration (mirrors args.*)
# ---------------------------------------------------------------------------
PAD = 128                 # lane-padded feature width (vreg lane count)
KERNEL_SIZE = 3
CHANNELS = [16, 32]       # channels[-1] == embed_size so attention dims line up
POOL_SIZES = [2, 2]
SENT_BLOCK = 16           # sentences per encoder grid step -> 256-row matmuls


# ---------------------------------------------------------------------------
# Fused SentenceCNN encoder kernel (SENT_BLOCK sentences per grid step)
# ---------------------------------------------------------------------------
def _shift_rows(z, dk):
    """result[r] = z[r + dk]; the dk tail rows are don't-care (filled with 0).

    Pure sublane copy work (VPU/load-store), no MXU, no iota/select matrices.
    """
    if dk == 0:
        return z
    return jnp.concatenate(
        [z[dk:, :], jnp.zeros((dk, z.shape[1]), z.dtype)], axis=0)


def _encoder_kernel(x_ref, w1_ref, b1_ref, w2_ref, b2_ref, o_ref, *,
                    kernel_size, pool1, pool2, sent_len, n_sent_blk):
    """conv1 -> ReLU -> maxpool(p1) -> conv2 -> ReLU -> maxpool(p2) -> global max.

    Everything is expressed on a flat [n_sent_blk*sent_len, PAD] row slab:
      * each conv tap is ONE big bf16 MXU matmul over the whole slab,
      * row shifts / pooling are elementwise ops on shifted slabs,
      * stage-2 conv is "dilated" by pool1 in flat row coordinates,
      * final pool2 + global max = masked row-max per sentence (exact because
        values are post-ReLU >= 0).

    x_ref : [n_sent_blk*sent_len, PAD] bf16
    w*_ref: [K, PAD, PAD] bf16 (per-tap conv weights, zero-padded)
    b*_ref: [1, PAD] f32
    o_ref : [n_sent_blk, PAD] f32 (sentence encodings, lane-dense)
    """
    L = sent_len
    P = x_ref.shape[-1]

    T1 = L - kernel_size + 1          # conv1 valid length
    T1p = T1 // pool1                 # after pool1
    T2 = T1p - kernel_size + 1        # conv2 valid length
    T2p = T2 // pool2                 # after pool2
    n_valid = T2p * pool2             # rows entering the global max
    # TODO(synk): very short sentences (n_valid == 0) silently encode to 0 here,
    #             where PyTorch MaxPool1d would raise.

    x = x_ref[...]                                                 # [M, P] bf16

    # ---- stage 1: conv1 (one matmul per tap over the whole slab) + bias + ReLU
    acc1 = jnp.zeros(x.shape, jnp.float32)
    for dk in range(kernel_size):
        z = jnp.dot(x, w1_ref[dk], preferred_element_type=jnp.float32)
        acc1 = acc1 + _shift_rows(z, dk)
    y1 = jnp.maximum(acc1 + b1_ref[...], 0.0)                      # [M, P] f32

    # ---- pool1: window-max lives at the window's first row -----------------
    m1 = y1
    for i in range(1, pool1):
        m1 = jnp.maximum(m1, _shift_rows(y1, i))
    m1 = m1.astype(jnp.bfloat16)

    # ---- stage 2: conv2, dilated by pool1 in flat row coordinates ----------
    acc2 = jnp.zeros(x.shape, jnp.float32)
    for dk in range(kernel_size):
        z = jnp.dot(m1, w2_ref[dk], preferred_element_type=jnp.float32)
        acc2 = acc2 + _shift_rows(z, pool1 * dk)
    y2 = jnp.maximum(acc2 + b2_ref[...], 0.0)                      # [M, P] f32

    # ---- pool2 + global max == per-sentence max over rows {pool1*j, j<n_valid}
    # (exact: y2 >= 0 post-ReLU, so masking invalid rows to 0 never wins) ----
    y2 = y2.reshape(n_sent_blk, L, P)                              # layout-trivial
    row = jax.lax.broadcasted_iota(jnp.int32, (L, P), 0)
    valid = (row < pool1 * n_valid) & ((row % pool1) == 0)
    o_ref[...] = jnp.max(jnp.where(valid[None, :, :], y2, 0.0), axis=1)


def pallas_sentence_encoder(x_flat, w1, b1, w2, b2, *, sent_len, kernel_size,
                            pool_sizes, sent_block):
    """x_flat: [n_sent*sent_len, PAD] bf16 (n_sent % sent_block == 0)
       -> [n_sent, PAD] f32 sentence encodings (one fused pallas_call)."""
    total_rows, P = x_flat.shape
    n_sent = total_rows // sent_len
    assert n_sent % sent_block == 0
    kern = functools.partial(
        _encoder_kernel, kernel_size=kernel_size,
        pool1=pool_sizes[0], pool2=pool_sizes[1],
        sent_len=sent_len, n_sent_blk=sent_block)
    return pl.pallas_call(
        kern,
        out_shape=jax.ShapeDtypeStruct((n_sent, P), jnp.float32),
        grid=(n_sent // sent_block,),
        in_specs=[
            pl.BlockSpec((sent_block * sent_len, P), lambda i: (i, 0)),
            pl.BlockSpec((kernel_size, P, P), lambda i: (0, 0, 0)),
            pl.BlockSpec((1, P), lambda i: (0, 0)),
            pl.BlockSpec((kernel_size, P, P), lambda i: (0, 0, 0)),
            pl.BlockSpec((1, P), lambda i: (0, 0)),
        ],
        out_specs=pl.BlockSpec((sent_block, P), lambda i: (i, 0)),
        compiler_params=pltpu.CompilerParams(
            dimension_semantics=("parallel",)),   # 2-TC sharding on v7x
    )(x_flat, w1, b1, w2, b2)


# ---------------------------------------------------------------------------
# Fused head kernel: doc-attend + option-attend + concat + MLP + sigmoid
# (consumes the flat encoder output directly: rows per batch element are
#  [qa, doc_0..doc_{S-1}, opt_0..opt_{O-1}] at static offsets)
# ---------------------------------------------------------------------------
def _head_kernel(enc_ref, maskT_ref, wdoc_ref, wopt_ref,
                 pw1_ref, pb1_ref, pw2_ref, pb2_ref, o_ref, *,
                 batch, n_sent, n_opt):
    enc = enc_ref[...]                               # [n_pad, P] f32
    maskT = maskT_ref[...]                           # [S, B] f32 (0 / -1e9)
    stride = 1 + n_sent + n_opt

    def attend(sents, qa_b, w_ref, add_mask):
        # sents: [Sx, P] f32 ; qa_b: [1, P] bf16 ; add_mask: [Sx, 1] or None
        t = jnp.dot(qa_b, w_ref[...], preferred_element_type=jnp.float32)  # [1,P]
        scores = jnp.sum(sents * t, axis=-1, keepdims=True)                # [Sx,1]
        if add_mask is not None:
            scores = scores + add_mask
        scores = scores - jnp.max(scores, axis=0, keepdims=True)
        p = jnp.exp(scores)
        denom = jnp.sum(p, axis=0, keepdims=True)
        alpha = p * pl.reciprocal(denom, approx=True)                      # EUP
        return jnp.sum(alpha * sents, axis=0, keepdims=True)               # [1,P]

    out_rows = []
    for b in range(batch):                           # static, tiny batch
        base = b * stride
        qa = enc[base:base + 1, :]                                  # [1, P]
        doc = enc[base + 1:base + 1 + n_sent, :]                    # [S, P]
        opt = enc[base + 1 + n_sent:base + stride, :]               # [O, P]
        qa_b = qa.astype(jnp.bfloat16)
        mask_col = maskT[:, b:b + 1]                                # [S, 1]

        d_attn = attend(doc, qa_b, wdoc_ref, mask_col)
        o_attn = attend(opt, qa_b, wopt_ref, None)

        # h = concat([doc_attn, qa, opt_attn], -1) @ pw1  ==  3 block matmuls
        h1 = (jnp.dot(d_attn.astype(jnp.bfloat16), pw1_ref[0],
                      preferred_element_type=jnp.float32)
              + jnp.dot(qa_b, pw1_ref[1], preferred_element_type=jnp.float32)
              + jnp.dot(o_attn.astype(jnp.bfloat16), pw1_ref[2],
                        preferred_element_type=jnp.float32)
              + pb1_ref[...])
        h1 = jnp.maximum(h1, 0.0)
        logits = (jnp.dot(h1.astype(jnp.bfloat16), pw2_ref[...],
                          preferred_element_type=jnp.float32) + pb2_ref[...])
        out_rows.append(jax.nn.sigmoid(logits))                    # [1, PO]

    o_ref[...] = jnp.concatenate(out_rows, axis=0)                 # [B, PO]


def pallas_attend_mlp_head(enc_flat, doc_maskT, params, *, batch, n_sent, n_opt):
    n_pad, P = enc_flat.shape
    S, B = doc_maskT.shape
    K3, _, H = params["pw1"].shape
    PO = params["pw2"].shape[-1]
    kern = functools.partial(_head_kernel, batch=batch, n_sent=n_sent,
                             n_opt=n_opt)
    return pl.pallas_call(
        kern,
        out_shape=jax.ShapeDtypeStruct((batch, PO), jnp.float32),
        grid=(1,),
        in_specs=[
            pl.BlockSpec((n_pad, P), lambda i: (0, 0)),
            pl.BlockSpec((S, B), lambda i: (0, 0)),
            pl.BlockSpec((P, P), lambda i: (0, 0)),
            pl.BlockSpec((P, P), lambda i: (0, 0)),
            pl.BlockSpec((K3, P, H), lambda i: (0, 0, 0)),
            pl.BlockSpec((1, H), lambda i: (0, 0)),
            pl.BlockSpec((H, PO), lambda i: (0, 0)),
            pl.BlockSpec((1, PO), lambda i: (0, 0)),
        ],
        out_specs=pl.BlockSpec((batch, PO), lambda i: (0, 0)),
        compiler_params=pltpu.CompilerParams(
            dimension_semantics=("arbitrary",)),
    )(enc_flat, doc_maskT, params["w_doc"], params["w_opt"],
      params["pw1"], params["pb1"], params["pw2"], params["pb2"])


# ---------------------------------------------------------------------------
# Model forward (glue in plain JAX, heavy work in the two fused kernels)
# ---------------------------------------------------------------------------
def model_forward(params, q_tokens, doc_tokens, doc_lengths, option_tokens):
    """q:[B,L] int, doc:([B,S,L] int, [B] int), options:[B,O,L] int -> [B] f32."""
    B, S, L = doc_tokens.shape
    O = option_tokens.shape[1]

    # Single gather + ONE fused encoder pass over all qa/doc/option sentences.
    # TODO(synk): at real vocab sizes, fuse the embedding gather into the encoder
    #             via scalar-prefetch token ids + manual DMA from an HBM table.
    tokens = jnp.concatenate(
        [q_tokens[:, None, :], doc_tokens, option_tokens], axis=1)   # [B,1+S+O,L]
    n_sent = B * (1 + S + O)
    x = params["embedding"][tokens.reshape(n_sent * L)]              # [N*L,PAD] bf16

    n_pad = pl.cdiv(n_sent, SENT_BLOCK) * SENT_BLOCK
    if n_pad != n_sent:
        x = jnp.pad(x, ((0, (n_pad - n_sent) * L), (0, 0)))

    enc = pallas_sentence_encoder(
        x, params["w1"], params["b1"], params["w2"], params["b2"],
        sent_len=L, kernel_size=KERNEL_SIZE, pool_sizes=POOL_SIZES,
        sent_block=SENT_BLOCK)                                       # [n_pad,PAD]

    # doc mask, transposed so the kernel can slice a [S, 1] column per element
    doc_maskT = jnp.where(jnp.arange(S)[:, None] < doc_lengths[None, :],
                          0.0, -1e9).astype(jnp.float32)             # [S, B]

    out = pallas_attend_mlp_head(enc, doc_maskT, params,
                                 batch=B, n_sent=S, n_opt=O)         # [B, PAD]
    return out[:, 0]                                                 # [B]


# ---------------------------------------------------------------------------
# Deterministic parameter construction (logical sizes, zero-padded to 128)
# ---------------------------------------------------------------------------
def _zero_pad(a, target_shape):
    pads = [(0, t - s) for s, t in zip(a.shape, target_shape)]
    return jnp.pad(a, pads)


def build_params(key, vocab_size, embed_size, kernel_size, channels,
                 pool_sizes, hidden_size):
    del pool_sizes  # structural only
    ks = jax.random.split(key, 12)
    c1, c2 = channels
    p = {}

    emb = 0.1 * jax.random.normal(ks[0], (vocab_size, embed_size), jnp.float32)
    p["embedding"] = _zero_pad(emb, (vocab_size, PAD)).astype(jnp.bfloat16)

    w1 = 0.1 * jax.random.normal(ks[1], (kernel_size, embed_size, c1), jnp.float32)
    b1 = 0.01 * jax.random.normal(ks[2], (c1,), jnp.float32)
    p["w1"] = _zero_pad(w1, (kernel_size, PAD, PAD)).astype(jnp.bfloat16)
    p["b1"] = _zero_pad(b1.reshape(1, c1), (1, PAD))

    w2 = 0.1 * jax.random.normal(ks[3], (kernel_size, c1, c2), jnp.float32)
    b2 = 0.01 * jax.random.normal(ks[4], (c2,), jnp.float32)
    p["w2"] = _zero_pad(w2, (kernel_size, PAD, PAD)).astype(jnp.bfloat16)
    p["b2"] = _zero_pad(b2.reshape(1, c2), (1, PAD))

    enc_dim = c2                                  # == embed_size
    wd = 0.1 * jax.random.normal(ks[5], (enc_dim, enc_dim), jnp.float32)
    wo = 0.1 * jax.random.normal(ks[6], (enc_dim, enc_dim), jnp.float32)
    p["w_doc"] = _zero_pad(wd, (PAD, PAD)).astype(jnp.bfloat16)
    p["w_opt"] = _zero_pad(wo, (PAD, PAD)).astype(jnp.bfloat16)

    # prediction MLP: Linear(3*enc_dim -> hidden) -> ReLU -> Linear(hidden -> 1)
    pw1 = 0.1 * jax.random.normal(ks[7], (3 * enc_dim, hidden_size), jnp.float32)
    pb1 = jnp.zeros((hidden_size,), jnp.float32)
    pw1_split = pw1.reshape(3, enc_dim, hidden_size)      # [doc | qa | opt] blocks
    p["pw1"] = _zero_pad(pw1_split, (3, PAD, PAD)).astype(jnp.bfloat16)
    p["pb1"] = _zero_pad(pb1.reshape(1, hidden_size), (1, PAD))

    pw2 = 0.1 * jax.random.normal(ks[8], (hidden_size, 1), jnp.float32)
    pb2 = jnp.zeros((1,), jnp.float32)
    p["pw2"] = _zero_pad(pw2, (PAD, PAD)).astype(jnp.bfloat16)   # only col 0 real
    p["pb2"] = _zero_pad(pb2.reshape(1, 1), (1, PAD))
    return p


# ---------------------------------------------------------------------------
# Example run
# ---------------------------------------------------------------------------
if __name__ == "__main__":
    B = 2            # batch_size
    S = 4            # sentence_count (doc)
    O = 5            # number of options
    L = 16           # seq_length
    E = 32           # embed_size  (== CHANNELS[-1])
    H = 32           # hidden_size
    VOCAB = 50

    key = jax.random.PRNGKey(0)
    k_param, k_q, k_doc, k_opt, k_len = jax.random.split(key, 5)

    params = build_params(k_param, VOCAB, E, KERNEL_SIZE, CHANNELS,
                          POOL_SIZES, H)

    q = jax.random.randint(k_q, (B, L), 0, VOCAB, dtype=jnp.int32)
    doc_tokens = jax.random.randint(k_doc, (B, S, L), 0, VOCAB, dtype=jnp.int32)
    options = jax.random.randint(k_opt, (B, O, L), 0, VOCAB, dtype=jnp.int32)
    doc_lengths = jax.random.randint(k_len, (B,), 1, S + 1, dtype=jnp.int32)

    fwd = jax.jit(model_forward)
    out = jax.block_until_ready(fwd(params, q, doc_tokens, doc_lengths, options))

    assert out.shape == (B,)
    assert bool(jnp.all(jnp.isfinite(out)))
    assert bool(jnp.all((out > 0.0) & (out < 1.0)))   # sigmoid output range
    print("KERNEL_OK")
</pallas_src>

<mosaic_0001>
module attributes {stable_mosaic.version = 11 : i64} {
  func.func @_head_kernel(%arg0: i32, %arg1: memref<32x128xf32, #tpu.memory_space<vmem>>, %arg2: memref<4x2xf32, #tpu.memory_space<vmem>>, %arg3: memref<128x128xbf16, #tpu.memory_space<vmem>>, %arg4: memref<128x128xbf16, #tpu.memory_space<vmem>>, %arg5: memref<3x128x128xbf16, #tpu.memory_space<vmem>>, %arg6: memref<1x128xf32, #tpu.memory_space<vmem>>, %arg7: memref<128x128xbf16, #tpu.memory_space<vmem>>, %arg8: memref<1x128xf32, #tpu.memory_space<vmem>>, %arg9: memref<2x128xf32, #tpu.memory_space<vmem>>) attributes {dimension_semantics = [#tpu.dimension_semantics<arbitrary>], iteration_bounds = array<i64: 1>, scalar_prefetch = 0 : i64, scratch_operands = 0 : i64, tpu.core_type = #tpu.core_type<tc>, window_params = [{pipeline_mode = #tpu.pipeline_mode<synchronous>, transform_indices = @transform_0, window_bounds = array<i64: 32, 128>}, {pipeline_mode = #tpu.pipeline_mode<synchronous>, transform_indices = @transform_1, window_bounds = array<i64: 4, 2>}, {pipeline_mode = #tpu.pipeline_mode<synchronous>, transform_indices = @transform_2, window_bounds = array<i64: 128, 128>}, {pipeline_mode = #tpu.pipeline_mode<synchronous>, transform_indices = @transform_3, window_bounds = array<i64: 128, 128>}, {pipeline_mode = #tpu.pipeline_mode<synchronous>, transform_indices = @transform_4, window_bounds = array<i64: 3, 128, 128>}, {pipeline_mode = #tpu.pipeline_mode<synchronous>, transform_indices = @transform_5, window_bounds = array<i64: 1, 128>}, {pipeline_mode = #tpu.pipeline_mode<synchronous>, transform_indices = @transform_6, window_bounds = array<i64: 128, 128>}, {pipeline_mode = #tpu.pipeline_mode<synchronous>, transform_indices = @transform_7, window_bounds = array<i64: 1, 128>}, {pipeline_mode = #tpu.pipeline_mode<synchronous>, transform_indices = @transform_8, window_bounds = array<i64: 2, 128>}]} {
    %c0 = arith.constant 0 : index
    %c0_0 = arith.constant 0 : index
    %0 = vector.load %arg1[%c0, %c0_0] : memref<32x128xf32, #tpu.memory_space<vmem>>, vector<32x128xf32>
    %c0_1 = arith.constant 0 : index
    %c0_2 = arith.constant 0 : index
    %1 = vector.load %arg2[%c0_1, %c0_2] : memref<4x2xf32, #tpu.memory_space<vmem>>, vector<4x2xf32>
    %2 = vector.extract_strided_slice %0 {offsets = [0, 0], sizes = [1, 128], strides = [1, 1]} : vector<32x128xf32> to vector<1x128xf32>
    %3 = vector.extract_strided_slice %0 {offsets = [1, 0], sizes = [4, 128], strides = [1, 1]} : vector<32x128xf32> to vector<4x128xf32>
    %4 = vector.extract_strided_slice %0 {offsets = [5, 0], sizes = [5, 128], strides = [1, 1]} : vector<32x128xf32> to vector<5x128xf32>
    %5 = arith.truncf %2 : vector<1x128xf32> to vector<1x128xbf16>
    %6 = vector.extract_strided_slice %1 {offsets = [0, 0], sizes = [4, 1], strides = [1, 1]} : vector<4x2xf32> to vector<4x1xf32>
    %c0_3 = arith.constant 0 : index
    %c0_4 = arith.constant 0 : index
    %7 = vector.load %arg3[%c0_3, %c0_4] : memref<128x128xbf16, #tpu.memory_space<vmem>>, vector<128x128xbf16>
    %cst = arith.constant dense<0.000000e+00> : vector<1x128xf32>
    %8 = tpu.matmul %5, %7, %cst {dimension_numbers = #tpu.dot_dimension_numbers<[1], [0], [0], [1], [0, 0, 1, 1], [], []>} : vector<1x128xbf16>, vector<128x128xbf16>, vector<1x128xf32> -> vector<1x128xf32>
    %9 = vector.broadcast %8 : vector<1x128xf32> to vector<4x128xf32>
    %10 = arith.mulf %3, %9 : vector<4x128xf32>
    %cst_5 = arith.constant dense<0.000000e+00> : vector<4xf32>
    %11 = vector.multi_reduction <add>, %10, %cst_5 [1] : vector<4x128xf32> to vector<4xf32>
    %12 = vector.shape_cast %11 : vector<4xf32> to vector<4x1xf32>
    %13 = arith.addf %12, %6 : vector<4x1xf32>
    %cst_6 = arith.constant dense<0xFF800000> : vector<1xf32>
    %14 = vector.multi_reduction <maximumf>, %13, %cst_6 [0] : vector<4x1xf32> to vector<1xf32>
    %15 = vector.shape_cast %14 : vector<1xf32> to vector<1x1xf32>
    %16 = vector.broadcast %15 : vector<1x1xf32> to vector<4x1xf32>
    %17 = arith.subf %13, %16 : vector<4x1xf32>
    %18 = math.exp %17 : vector<4x1xf32>
    %cst_7 = arith.constant dense<0.000000e+00> : vector<1xf32>
    %19 = vector.multi_reduction <add>, %18, %cst_7 [0] : vector<4x1xf32> to vector<1xf32>
    %20 = vector.shape_cast %19 : vector<1xf32> to vector<1x1xf32>
    %21 = tpu.reciprocal %20 {approx = true} : vector<1x1xf32> -> vector<1x1xf32>
    %22 = vector.broadcast %21 : vector<1x1xf32> to vector<4x1xf32>
    %23 = arith.mulf %18, %22 : vector<4x1xf32>
    %24 = vector.broadcast %23 : vector<4x1xf32> to vector<4x128xf32>
    %25 = arith.mulf %24, %3 : vector<4x128xf32>
    %cst_8 = arith.constant dense<0.000000e+00> : vector<128xf32>
    %26 = vector.multi_reduction <add>, %25, %cst_8 [0] : vector<4x128xf32> to vector<128xf32>
    %27 = vector.shape_cast %26 : vector<128xf32> to vector<1x128xf32>
    %c0_9 = arith.constant 0 : index
    %c0_10 = arith.constant 0 : index
    %28 = vector.load %arg4[%c0_9, %c0_10] : memref<128x128xbf16, #tpu.memory_space<vmem>>, vector<128x128xbf16>
    %cst_11 = arith.constant dense<0.000000e+00> : vector<1x128xf32>
    %29 = tpu.matmul %5, %28, %cst_11 {dimension_numbers = #tpu.dot_dimension_numbers<[1], [0], [0], [1], [0, 0, 1, 1], [], []>} : vector<1x128xbf16>, vector<128x128xbf16>, vector<1x128xf32> -> vector<1x128xf32>
    %30 = vector.broadcast %29 : vector<1x128xf32> to vector<5x128xf32>
    %31 = arith.mulf %4, %30 : vector<5x128xf32>
    %cst_12 = arith.constant dense<0.000000e+00> : vector<5xf32>
    %32 = vector.multi_reduction <add>, %31, %cst_12 [1] : vector<5x128xf32> to vector<5xf32>
    %33 = vector.shape_cast %32 : vector<5xf32> to vector<5x1xf32>
    %cst_13 = arith.constant dense<0xFF800000> : vector<1xf32>
    %34 = vector.multi_reduction <maximumf>, %33, %cst_13 [0] : vector<5x1xf32> to vector<1xf32>
    %35 = vector.shape_cast %34 : vector<1xf32> to vector<1x1xf32>
    %36 = vector.broadcast %35 : vector<1x1xf32> to vector<5x1xf32>
    %37 = arith.subf %33, %36 : vector<5x1xf32>
    %38 = math.exp %37 : vector<5x1xf32>
    %cst_14 = arith.constant dense<0.000000e+00> : vector<1xf32>
    %39 = vector.multi_reduction <add>, %38, %cst_14 [0] : vector<5x1xf32> to vector<1xf32>
    %40 = vector.shape_cast %39 : vector<1xf32> to vector<1x1xf32>
    %41 = tpu.reciprocal %40 {approx = true} : vector<1x1xf32> -> vector<1x1xf32>
    %42 = vector.broadcast %41 : vector<1x1xf32> to vector<5x1xf32>
    %43 = arith.mulf %38, %42 : vector<5x1xf32>
    %44 = vector.broadcast %43 : vector<5x1xf32> to vector<5x128xf32>
    %45 = arith.mulf %44, %4 : vector<5x128xf32>
    %cst_15 = arith.constant dense<0.000000e+00> : vector<128xf32>
    %46 = vector.multi_reduction <add>, %45, %cst_15 [0] : vector<5x128xf32> to vector<128xf32>
    %47 = vector.shape_cast %46 : vector<128xf32> to vector<1x128xf32>
    %48 = arith.truncf %27 : vector<1x128xf32> to vector<1x128xbf16>
    %c0_16 = arith.constant 0 : index
    %c0_17 = arith.constant 0 : index
    %c0_18 = arith.constant 0 : index
    %49 = vector.load %arg5[%c0_16, %c0_17, %c0_18] : memref<3x128x128xbf16, #tpu.memory_space<vmem>>, vector<1x128x128xbf16>
    %50 = vector.shape_cast %49 : vector<1x128x128xbf16> to vector<128x128xbf16>
    %cst_19 = arith.constant dense<0.000000e+00> : vector<1x128xf32>
    %51 = tpu.matmul %48, %50, %cst_19 {dimension_numbers = #tpu.dot_dimension_numbers<[1], [0], [0], [1], [0, 0, 1, 1], [], []>} : vector<1x128xbf16>, vector<128x128xbf16>, vector<1x128xf32> -> vector<1x128xf32>
    %c1 = arith.constant 1 : index
    %c0_20 = arith.constant 0 : index
    %c0_21 = arith.constant 0 : index
    %52 = vector.load %arg5[%c1, %c0_20, %c0_21] : memref<3x128x128xbf16, #tpu.memory_space<vmem>>, vector<1x128x128xbf16>
    %53 = vector.shape_cast %52 : vector<1x128x128xbf16> to vector<128x128xbf16>
    %cst_22 = arith.constant dense<0.000000e+00> : vector<1x128xf32>
    %54 = tpu.matmul %5, %53, %cst_22 {dimension_numbers = #tpu.dot_dimension_numbers<[1], [0], [0], [1], [0, 0, 1, 1], [], []>} : vector<1x128xbf16>, vector<128x128xbf16>, vector<1x128xf32> -> vector<1x128xf32>
    %55 = arith.addf %51, %54 : vector<1x128xf32>
    %56 = arith.truncf %47 : vector<1x128xf32> to vector<1x128xbf16>
    %c2 = arith.constant 2 : index
    %c0_23 = arith.constant 0 : index
    %c0_24 = arith.constant 0 : index
    %57 = vector.load %arg5[%c2, %c0_23, %c0_24] : memref<3x128x128xbf16, #tpu.memory_space<vmem>>, vector<1x128x128xbf16>
    %58 = vector.shape_cast %57 : vector<1x128x128xbf16> to vector<128x128xbf16>
    %cst_25 = arith.constant dense<0.000000e+00> : vector<1x128xf32>
    %59 = tpu.matmul %56, %58, %cst_25 {dimension_numbers = #tpu.dot_dimension_numbers<[1], [0], [0], [1], [0, 0, 1, 1], [], []>} : vector<1x128xbf16>, vector<128x128xbf16>, vector<1x128xf32> -> vector<1x128xf32>
    %60 = arith.addf %55, %59 : vector<1x128xf32>
    %c0_26 = arith.constant 0 : index
    %c0_27 = arith.constant 0 : index
    %61 = vector.load %arg6[%c0_26, %c0_27] : memref<1x128xf32, #tpu.memory_space<vmem>>, vector<1x128xf32>
    %62 = arith.addf %60, %61 : vector<1x128xf32>
    %cst_28 = arith.constant 0.000000e+00 : f32
    %63 = vector.broadcast %cst_28 : f32 to vector<1x128xf32>
    %64 = arith.maximumf %62, %63 : vector<1x128xf32>
    %65 = arith.truncf %64 : vector<1x128xf32> to vector<1x128xbf16>
    %c0_29 = arith.constant 0 : index
    %c0_30 = arith.constant 0 : index
    %66 = vector.load %arg7[%c0_29, %c0_30] : memref<128x128xbf16, #tpu.memory_space<vmem>>, vector<128x128xbf16>
    %cst_31 = arith.constant dense<0.000000e+00> : vector<1x128xf32>
    %67 = tpu.matmul %65, %66, %cst_31 {dimension_numbers = #tpu.dot_dimension_numbers<[1], [0], [0], [1], [0, 0, 1, 1], [], []>} : vector<1x128xbf16>, vector<128x128xbf16>, vector<1x128xf32> -> vector<1x128xf32>
    %c0_32 = arith.constant 0 : index
    %c0_33 = arith.constant 0 : index
    %68 = vector.load %arg8[%c0_32, %c0_33] : memref<1x128xf32, #tpu.memory_space<vmem>>, vector<1x128xf32>
    %69 = arith.addf %67, %68 : vector<1x128xf32>
    %70 = arith.negf %69 : vector<1x128xf32>
    %71 = math.exp %70 : vector<1x128xf32>
    %cst_34 = arith.constant 1.000000e+00 : f32
    %72 = vector.broadcast %cst_34 : f32 to vector<1x128xf32>
    %73 = arith.addf %72, %71 : vector<1x128xf32>
    %74 = arith.divf %72, %73 : vector<1x128xf32>
    %75 = vector.extract_strided_slice %0 {offsets = [10, 0], sizes = [1, 128], strides = [1, 1]} : vector<32x128xf32> to vector<1x128xf32>
    %76 = vector.extract_strided_slice %0 {offsets = [11, 0], sizes = [4, 128], strides = [1, 1]} : vector<32x128xf32> to vector<4x128xf32>
    %77 = vector.extract_strided_slice %0 {offsets = [15, 0], sizes = [5, 128], strides = [1, 1]} : vector<32x128xf32> to vector<5x128xf32>
    %78 = arith.truncf %75 : vector<1x128xf32> to vector<1x128xbf16>
    %79 = vector.extract_strided_slice %1 {offsets = [0, 1], sizes = [4, 1], strides = [1, 1]} : vector<4x2xf32> to vector<4x1xf32>
    %c0_35 = arith.constant 0 : index
    %c0_36 = arith.constant 0 : index
    %80 = vector.load %arg3[%c0_35, %c0_36] : memref<128x128xbf16, #tpu.memory_space<vmem>>, vector<128x128xbf16>
    %cst_37 = arith.constant dense<0.000000e+00> : vector<1x128xf32>
    %81 = tpu.matmul %78, %80, %cst_37 {dimension_numbers = #tpu.dot_dimension_numbers<[1], [0], [0], [1], [0, 0, 1, 1], [], []>} : vector<1x128xbf16>, vector<128x128xbf16>, vector<1x128xf32> -> vector<1x128xf32>
    %82 = vector.broadcast %81 : vector<1x128xf32> to vector<4x128xf32>
    %83 = arith.mulf %76, %82 : vector<4x128xf32>
    %cst_38 = arith.constant dense<0.000000e+00> : vector<4xf32>
    %84 = vector.multi_reduction <add>, %83, %cst_38 [1] : vector<4x128xf32> to vector<4xf32>
    %85 = vector.shape_cast %84 : vector<4xf32> to vector<4x1xf32>
    %86 = arith.addf %85, %79 : vector<4x1xf32>
    %cst_39 = arith.constant dense<0xFF800000> : vector<1xf32>
    %87 = vector.multi_reduction <maximumf>, %86, %cst_39 [0] : vector<4x1xf32> to vector<1xf32>
    %88 = vector.shape_cast %87 : vector<1xf32> to vector<1x1xf32>
    %89 = vector.broadcast %88 : vector<1x1xf32> to vector<4x1xf32>
    %90 = arith.subf %86, %89 : vector<4x1xf32>
    %91 = math.exp %90 : vector<4x1xf32>
    %cst_40 = arith.constant dense<0.000000e+00> : vector<1xf32>
    %92 = vector.multi_reduction <add>, %91, %cst_40 [0] : vector<4x1xf32> to vector<1xf32>
    %93 = vector.shape_cast %92 : vector<1xf32> to vector<1x1xf32>
    %94 = tpu.reciprocal %93 {approx = true} : vector<1x1xf32> -> vector<1x1xf32>
    %95 = vector.broadcast %94 : vector<1x1xf32> to vector<4x1xf32>
    %96 = arith.mulf %91, %95 : vector<4x1xf32>
    %97 = vector.broadcast %96 : vector<4x1xf32> to vector<4x128xf32>
    %98 = arith.mulf %97, %76 : vector<4x128xf32>
    %cst_41 = arith.constant dense<0.000000e+00> : vector<128xf32>
    %99 = vector.multi_reduction <add>, %98, %cst_41 [0] : vector<4x128xf32> to vector<128xf32>
    %100 = vector.shape_cast %99 : vector<128xf32> to vector<1x128xf32>
    %c0_42 = arith.constant 0 : index
    %c0_43 = arith.constant 0 : index
    %101 = vector.load %arg4[%c0_42, %c0_43] : memref<128x128xbf16, #tpu.memory_space<vmem>>, vector<128x128xbf16>
    %cst_44 = arith.constant dense<0.000000e+00> : vector<1x128xf32>
    %102 = tpu.matmul %78, %101, %cst_44 {dimension_numbers = #tpu.dot_dimension_numbers<[1], [0], [0], [1], [0, 0, 1, 1], [], []>} : vector<1x128xbf16>, vector<128x128xbf16>, vector<1x128xf32> -> vector<1x128xf32>
    %103 = vector.broadcast %102 : vector<1x128xf32> to vector<5x128xf32>
    %104 = arith.mulf %77, %103 : vector<5x128xf32>
    %cst_45 = arith.constant dense<0.000000e+00> : vector<5xf32>
    %105 = vector.multi_reduction <add>, %104, %cst_45 [1] : vector<5x128xf32> to vector<5xf32>
    %106 = vector.shape_cast %105 : vector<5xf32> to vector<5x1xf32>
    %cst_46 = arith.constant dense<0xFF800000> : vector<1xf32>
    %107 = vector.multi_reduction <maximumf>, %106, %cst_46 [0] : vector<5x1xf32> to vector<1xf32>
    %108 = vector.shape_cast %107 : vector<1xf32> to vector<1x1xf32>
    %109 = vector.broadcast %108 : vector<1x1xf32> to vector<5x1xf32>
    %110 = arith.subf %106, %109 : vector<5x1xf32>
    %111 = math.exp %110 : vector<5x1xf32>
    %cst_47 = arith.constant dense<0.000000e+00> : vector<1xf32>
    %112 = vector.multi_reduction <add>, %111, %cst_47 [0] : vector<5x1xf32> to vector<1xf32>
    %113 = vector.shape_cast %112 : vector<1xf32> to vector<1x1xf32>
    %114 = tpu.reciprocal %113 {approx = true} : vector<1x1xf32> -> vector<1x1xf32>
    %115 = vector.broadcast %114 : vector<1x1xf32> to vector<5x1xf32>
    %116 = arith.mulf %111, %115 : vector<5x1xf32>
    %117 = vector.broadcast %116 : vector<5x1xf32> to vector<5x128xf32>
    %118 = arith.mulf %117, %77 : vector<5x128xf32>
    %cst_48 = arith.constant dense<0.000000e+00> : vector<128xf32>
    %119 = vector.multi_reduction <add>, %118, %cst_48 [0] : vector<5x128xf32> to vector<128xf32>
    %120 = vector.shape_cast %119 : vector<128xf32> to vector<1x128xf32>
    %121 = arith.truncf %100 : vector<1x128xf32> to vector<1x128xbf16>
    %c0_49 = arith.constant 0 : index
    %c0_50 = arith.constant 0 : index
    %c0_51 = arith.constant 0 : index
    %122 = vector.load %arg5[%c0_49, %c0_50, %c0_51] : memref<3x128x128xbf16, #tpu.memory_space<vmem>>, vector<1x128x128xbf16>
    %123 = vector.shape_cast %122 : vector<1x128x128xbf16> to vector<128x128xbf16>
    %cst_52 = arith.constant dense<0.000000e+00> : vector<1x128xf32>
    %124 = tpu.matmul %121, %123, %cst_52 {dimension_numbers = #tpu.dot_dimension_numbers<[1], [0], [0], [1], [0, 0, 1, 1], [], []>} : vector<1x128xbf16>, vector<128x128xbf16>, vector<1x128xf32> -> vector<1x128xf32>
    %c1_53 = arith.constant 1 : index
    %c0_54 = arith.constant 0 : index
    %c0_55 = arith.constant 0 : index
    %125 = vector.load %arg5[%c1_53, %c0_54, %c0_55] : memref<3x128x128xbf16, #tpu.memory_space<vmem>>, vector<1x128x128xbf16>
    %126 = vector.shape_cast %125 : vector<1x128x128xbf16> to vector<128x128xbf16>
    %cst_56 = arith.constant dense<0.000000e+00> : vector<1x128xf32>
    %127 = tpu.matmul %78, %126, %cst_56 {dimension_numbers = #tpu.dot_dimension_numbers<[1], [0], [0], [1], [0, 0, 1, 1], [], []>} : vector<1x128xbf16>, vector<128x128xbf16>, vector<1x128xf32> -> vector<1x128xf32>
    %128 = arith.addf %124, %127 : vector<1x128xf32>
    %129 = arith.truncf %120 : vector<1x128xf32> to vector<1x128xbf16>
    %c2_57 = arith.constant 2 : index
    %c0_58 = arith.constant 0 : index
    %c0_59 = arith.constant 0 : index
    %130 = vector.load %arg5[%c2_57, %c0_58, %c0_59] : memref<3x128x128xbf16, #tpu.memory_space<vmem>>, vector<1x128x128xbf16>
    %131 = vector.shape_cast %130 : vector<1x128x128xbf16> to vector<128x128xbf16>
    %cst_60 = arith.constant dense<0.000000e+00> : vector<1x128xf32>
    %132 = tpu.matmul %129, %131, %cst_60 {dimension_numbers = #tpu.dot_dimension_numbers<[1], [0], [0], [1], [0, 0, 1, 1], [], []>} : vector<1x128xbf16>, vector<128x128xbf16>, vector<1x128xf32> -> vector<1x128xf32>
    %133 = arith.addf %128, %132 : vector<1x128xf32>
    %c0_61 = arith.constant 0 : index
    %c0_62 = arith.constant 0 : index
    %134 = vector.load %arg6[%c0_61, %c0_62] : memref<1x128xf32, #tpu.memory_space<vmem>>, vector<1x128xf32>
    %135 = arith.addf %133, %134 : vector<1x128xf32>
    %cst_63 = arith.constant 0.000000e+00 : f32
    %136 = vector.broadcast %cst_63 : f32 to vector<1x128xf32>
    %137 = arith.maximumf %135, %136 : vector<1x128xf32>
    %138 = arith.truncf %137 : vector<1x128xf32> to vector<1x128xbf16>
    %c0_64 = arith.constant 0 : index
    %c0_65 = arith.constant 0 : index
    %139 = vector.load %arg7[%c0_64, %c0_65] : memref<128x128xbf16, #tpu.memory_space<vmem>>, vector<128x128xbf16>
    %cst_66 = arith.constant dense<0.000000e+00> : vector<1x128xf32>
    %140 = tpu.matmul %138, %139, %cst_66 {dimension_numbers = #tpu.dot_dimension_numbers<[1], [0], [0], [1], [0, 0, 1, 1], [], []>} : vector<1x128xbf16>, vector<128x128xbf16>, vector<1x128xf32> -> vector<1x128xf32>
    %c0_67 = arith.constant 0 : index
    %c0_68 = arith.constant 0 : index
    %141 = vector.load %arg8[%c0_67, %c0_68] : memref<1x128xf32, #tpu.memory_space<vmem>>, vector<1x128xf32>
    %142 = arith.addf %140, %141 : vector<1x128xf32>
    %143 = arith.negf %142 : vector<1x128xf32>
    %144 = math.exp %143 : vector<1x128xf32>
    %cst_69 = arith.constant 1.000000e+00 : f32
    %145 = vector.broadcast %cst_69 : f32 to vector<1x128xf32>
    %146 = arith.addf %145, %144 : vector<1x128xf32>
    %147 = arith.divf %145, %146 : vector<1x128xf32>
    %148 = tpu.concatenate %74, %147 in 0 : vector<1x128xf32>, vector<1x128xf32> -> vector<2x128xf32>
    %c0_70 = arith.constant 0 : index
    %c0_71 = arith.constant 0 : index
    %149 = vector.load %arg9[%c0_70, %c0_71] : memref<2x128xf32, #tpu.memory_space<vmem>>, vector<2x128xf32>
    tpu.vector_store %arg9[%c0_70, %c0_71], %148 {strides = array<i32>} : memref<2x128xf32, #tpu.memory_space<vmem>>, vector<2x128xf32>,
    return
  }
  func.func @transform_0(%arg0: i32) -> (i32, i32) {
    %c0_i32 = arith.constant 0 : i32
    %c0_i32_0 = arith.constant 0 : i32
    %c0_i32_1 = arith.constant 0 : i32
    return %c0_i32, %c0_i32_0 : i32, i32
  }
  func.func @transform_1(%arg0: i32) -> (i32, i32) {
    %c0_i32 = arith.constant 0 : i32
    %c0_i32_0 = arith.constant 0 : i32
    %c0_i32_1 = arith.constant 0 : i32
    return %c0_i32, %c0_i32_0 : i32, i32
  }
  func.func @transform_2(%arg0: i32) -> (i32, i32) {
    %c0_i32 = arith.constant 0 : i32
    %c0_i32_0 = arith.constant 0 : i32
    %c0_i32_1 = arith.constant 0 : i32
    return %c0_i32, %c0_i32_0 : i32, i32
  }
  func.func @transform_3(%arg0: i32) -> (i32, i32) {
    %c0_i32 = arith.constant 0 : i32
    %c0_i32_0 = arith.constant 0 : i32
    %c0_i32_1 = arith.constant 0 : i32
    return %c0_i32, %c0_i32_0 : i32, i32
  }
  func.func @transform_4(%arg0: i32) -> (i32, i32, i32) {
    %c0_i32 = arith.constant 0 : i32
    %c0_i32_0 = arith.constant 0 : i32
    %c0_i32_1 = arith.constant 0 : i32
    %c0_i32_2 = arith.constant 0 : i32
    return %c0_i32, %c0_i32_0, %c0_i32_1 : i32, i32, i32
  }
  func.func @transform_5(%arg0: i32) -> (i32, i32) {
    %c0_i32 = arith.constant 0 : i32
    %c0_i32_0 = arith.constant 0 : i32
    %c0_i32_1 = arith.constant 0 : i32
    return %c0_i32, %c0_i32_0 : i32, i32
  }
  func.func @transform_6(%arg0: i32) -> (i32, i32) {
    %c0_i32 = arith.constant 0 : i32
    %c0_i32_0 = arith.constant 0 : i32
    %c0_i32_1 = arith.constant 0 : i32
    return %c0_i32, %c0_i32_0 : i32, i32
  }
  func.func @transform_7(%arg0: i32) -> (i32, i32) {
    %c0_i32 = arith.constant 0 : i32
    %c0_i32_0 = arith.constant 0 : i32
    %c0_i32_1 = arith.constant 0 : i32
    return %c0_i32, %c0_i32_0 : i32, i32
  }
  func.func @transform_8(%arg0: i32) -> (i32, i32) {
    %c0_i32 = arith.constant 0 : i32
    %c0_i32_0 = arith.constant 0 : i32
    %c0_i32_1 = arith.constant 0 : i32
    return %c0_i32, %c0_i32_0 : i32, i32
  }
}

module attributes {stable_mosaic.version = 11 : i64} {
  func.func @_encoder_kernel(%arg0: i32, %arg1: memref<256x128xbf16, #tpu.memory_space<vmem>>, %arg2: memref<3x128x128xbf16, #tpu.memory_space<vmem>>, %arg3: memref<1x128xf32, #tpu.memory_space<vmem>>, %arg4: memref<3x128x128xbf16, #tpu.memory_space<vmem>>, %arg5: memref<1x128xf32, #tpu.memory_space<vmem>>, %arg6: memref<16x128xf32, #tpu.memory_space<vmem>>) attributes {dimension_semantics = [#tpu.dimension_semantics<parallel>], iteration_bounds = array<i64: 2>, scalar_prefetch = 0 : i64, scratch_operands = 0 : i64, tpu.core_type = #tpu.core_type<tc>, window_params = [{transform_indices = @transform_0, window_bounds = array<i64: 256, 128>}, {pipeline_mode = #tpu.pipeline_mode<synchronous>, transform_indices = @transform_1, window_bounds = array<i64: 3, 128, 128>}, {pipeline_mode = #tpu.pipeline_mode<synchronous>, transform_indices = @transform_2, window_bounds = array<i64: 1, 128>}, {pipeline_mode = #tpu.pipeline_mode<synchronous>, transform_indices = @transform_3, window_bounds = array<i64: 3, 128, 128>}, {pipeline_mode = #tpu.pipeline_mode<synchronous>, transform_indices = @transform_4, window_bounds = array<i64: 1, 128>}, {transform_indices = @transform_5, window_bounds = array<i64: 16, 128>}]} {
    %c0 = arith.constant 0 : index
    %c0_0 = arith.constant 0 : index
    %0 = vector.load %arg1[%c0, %c0_0] : memref<256x128xbf16, #tpu.memory_space<vmem>>, vector<256x128xbf16>
    %cst = arith.constant 0.000000e+00 : f32
    %1 = vector.broadcast %cst : f32 to vector<256x128xf32>
    %c0_1 = arith.constant 0 : index
    %c0_2 = arith.constant 0 : index
    %c0_3 = arith.constant 0 : index
    %2 = vector.load %arg2[%c0_1, %c0_2, %c0_3] : memref<3x128x128xbf16, #tpu.memory_space<vmem>>, vector<1x128x128xbf16>
    %3 = vector.shape_cast %2 : vector<1x128x128xbf16> to vector<128x128xbf16>
    %cst_4 = arith.constant dense<0.000000e+00> : vector<256x128xf32>
    %4 = tpu.matmul %0, %3, %cst_4 {dimension_numbers = #tpu.dot_dimension_numbers<[1], [0], [0], [1], [0, 0, 1, 1], [], []>} : vector<256x128xbf16>, vector<128x128xbf16>, vector<256x128xf32> -> vector<256x128xf32>
    %5 = arith.addf %1, %4 : vector<256x128xf32>
    %c1 = arith.constant 1 : index
    %c0_5 = arith.constant 0 : index
    %c0_6 = arith.constant 0 : index
    %6 = vector.load %arg2[%c1, %c0_5, %c0_6] : memref<3x128x128xbf16, #tpu.memory_space<vmem>>, vector<1x128x128xbf16>
    %7 = vector.shape_cast %6 : vector<1x128x128xbf16> to vector<128x128xbf16>
    %cst_7 = arith.constant dense<0.000000e+00> : vector<256x128xf32>
    %8 = tpu.matmul %0, %7, %cst_7 {dimension_numbers = #tpu.dot_dimension_numbers<[1], [0], [0], [1], [0, 0, 1, 1], [], []>} : vector<256x128xbf16>, vector<128x128xbf16>, vector<256x128xf32> -> vector<256x128xf32>
    %9 = vector.extract_strided_slice %8 {offsets = [1, 0], sizes = [255, 128], strides = [1, 1]} : vector<256x128xf32> to vector<255x128xf32>
    %cst_8 = arith.constant 0.000000e+00 : f32
    %10 = vector.broadcast %cst_8 : f32 to vector<1x128xf32>
    %11 = tpu.concatenate %9, %10 in 0 : vector<255x128xf32>, vector<1x128xf32> -> vector<256x128xf32>
    %12 = arith.addf %5, %11 : vector<256x128xf32>
    %c2 = arith.constant 2 : index
    %c0_9 = arith.constant 0 : index
    %c0_10 = arith.constant 0 : index
    %13 = vector.load %arg2[%c2, %c0_9, %c0_10] : memref<3x128x128xbf16, #tpu.memory_space<vmem>>, vector<1x128x128xbf16>
    %14 = vector.shape_cast %13 : vector<1x128x128xbf16> to vector<128x128xbf16>
    %cst_11 = arith.constant dense<0.000000e+00> : vector<256x128xf32>
    %15 = tpu.matmul %0, %14, %cst_11 {dimension_numbers = #tpu.dot_dimension_numbers<[1], [0], [0], [1], [0, 0, 1, 1], [], []>} : vector<256x128xbf16>, vector<128x128xbf16>, vector<256x128xf32> -> vector<256x128xf32>
    %16 = vector.extract_strided_slice %15 {offsets = [2, 0], sizes = [254, 128], strides = [1, 1]} : vector<256x128xf32> to vector<254x128xf32>
    %cst_12 = arith.constant 0.000000e+00 : f32
    %17 = vector.broadcast %cst_12 : f32 to vector<2x128xf32>
    %18 = tpu.concatenate %16, %17 in 0 : vector<254x128xf32>, vector<2x128xf32> -> vector<256x128xf32>
    %19 = arith.addf %12, %18 : vector<256x128xf32>
    %c0_13 = arith.constant 0 : index
    %c0_14 = arith.constant 0 : index
    %20 = vector.load %arg3[%c0_13, %c0_14] : memref<1x128xf32, #tpu.memory_space<vmem>>, vector<1x128xf32>
    %21 = vector.broadcast %20 : vector<1x128xf32> to vector<256x128xf32>
    %22 = arith.addf %19, %21 : vector<256x128xf32>
    %cst_15 = arith.constant 0.000000e+00 : f32
    %23 = vector.broadcast %cst_15 : f32 to vector<256x128xf32>
    %24 = arith.maximumf %22, %23 : vector<256x128xf32>
    %25 = vector.extract_strided_slice %24 {offsets = [1, 0], sizes = [255, 128], strides = [1, 1]} : vector<256x128xf32> to vector<255x128xf32>
    %cst_16 = arith.constant 0.000000e+00 : f32
    %26 = vector.broadcast %cst_16 : f32 to vector<1x128xf32>
    %27 = tpu.concatenate %25, %26 in 0 : vector<255x128xf32>, vector<1x128xf32> -> vector<256x128xf32>
    %28 = arith.maximumf %24, %27 : vector<256x128xf32>
    %29 = arith.truncf %28 : vector<256x128xf32> to vector<256x128xbf16>
    %cst_17 = arith.constant 0.000000e+00 : f32
    %30 = vector.broadcast %cst_17 : f32 to vector<256x128xf32>
    %c0_18 = arith.constant 0 : index
    %c0_19 = arith.constant 0 : index
    %c0_20 = arith.constant 0 : index
    %31 = vector.load %arg4[%c0_18, %c0_19, %c0_20] : memref<3x128x128xbf16, #tpu.memory_space<vmem>>, vector<1x128x128xbf16>
    %32 = vector.shape_cast %31 : vector<1x128x128xbf16> to vector<128x128xbf16>
    %cst_21 = arith.constant dense<0.000000e+00> : vector<256x128xf32>
    %33 = tpu.matmul %29, %32, %cst_21 {dimension_numbers = #tpu.dot_dimension_numbers<[1], [0], [0], [1], [0, 0, 1, 1], [], []>} : vector<256x128xbf16>, vector<128x128xbf16>, vector<256x128xf32> -> vector<256x128xf32>
    %34 = arith.addf %30, %33 : vector<256x128xf32>
    %c1_22 = arith.constant 1 : index
    %c0_23 = arith.constant 0 : index
    %c0_24 = arith.constant 0 : index
    %35 = vector.load %arg4[%c1_22, %c0_23, %c0_24] : memref<3x128x128xbf16, #tpu.memory_space<vmem>>, vector<1x128x128xbf16>
    %36 = vector.shape_cast %35 : vector<1x128x128xbf16> to vector<128x128xbf16>
    %cst_25 = arith.constant dense<0.000000e+00> : vector<256x128xf32>
    %37 = tpu.matmul %29, %36, %cst_25 {dimension_numbers = #tpu.dot_dimension_numbers<[1], [0], [0], [1], [0, 0, 1, 1], [], []>} : vector<256x128xbf16>, vector<128x128xbf16>, vector<256x128xf32> -> vector<256x128xf32>
    %38 = vector.extract_strided_slice %37 {offsets = [2, 0], sizes = [254, 128], strides = [1, 1]} : vector<256x128xf32> to vector<254x128xf32>
    %cst_26 = arith.constant 0.000000e+00 : f32
    %39 = vector.broadcast %cst_26 : f32 to vector<2x128xf32>
    %40 = tpu.concatenate %38, %39 in 0 : vector<254x128xf32>, vector<2x128xf32> -> vector<256x128xf32>
    %41 = arith.addf %34, %40 : vector<256x128xf32>
    %c2_27 = arith.constant 2 : index
    %c0_28 = arith.constant 0 : index
    %c0_29 = arith.constant 0 : index
    %42 = vector.load %arg4[%c2_27, %c0_28, %c0_29] : memref<3x128x128xbf16, #tpu.memory_space<vmem>>, vector<1x128x128xbf16>
    %43 = vector.shape_cast %42 : vector<1x128x128xbf16> to vector<128x128xbf16>
    %cst_30 = arith.constant dense<0.000000e+00> : vector<256x128xf32>
    %44 = tpu.matmul %29, %43, %cst_30 {dimension_numbers = #tpu.dot_dimension_numbers<[1], [0], [0], [1], [0, 0, 1, 1], [], []>} : vector<256x128xbf16>, vector<128x128xbf16>, vector<256x128xf32> -> vector<256x128xf32>
    %45 = vector.extract_strided_slice %44 {offsets = [4, 0], sizes = [252, 128], strides = [1, 1]} : vector<256x128xf32> to vector<252x128xf32>
    %cst_31 = arith.constant 0.000000e+00 : f32
    %46 = vector.broadcast %cst_31 : f32 to vector<4x128xf32>
    %47 = tpu.concatenate %45, %46 in 0 : vector<252x128xf32>, vector<4x128xf32> -> vector<256x128xf32>
    %48 = arith.addf %41, %47 : vector<256x128xf32>
    %c0_32 = arith.constant 0 : index
    %c0_33 = arith.constant 0 : index
    %49 = vector.load %arg5[%c0_32, %c0_33] : memref<1x128xf32, #tpu.memory_space<vmem>>, vector<1x128xf32>
    %50 = vector.broadcast %49 : vector<1x128xf32> to vector<256x128xf32>
    %51 = arith.addf %48, %50 : vector<256x128xf32>
    %cst_34 = arith.constant 0.000000e+00 : f32
    %52 = vector.broadcast %cst_34 : f32 to vector<256x128xf32>
    %53 = arith.maximumf %51, %52 : vector<256x128xf32>
    %54 = vector.shape_cast %53 : vector<256x128xf32> to vector<16x16x128xf32>
    %55 = tpu.iota {dimensions = array<i32: 0>} : vector<16x128xi32>
    %c8_i32 = arith.constant 8 : i32
    %56 = vector.broadcast %c8_i32 : i32 to vector<16x128xi32>
    %57 = arith.cmpi slt, %55, %56 : vector<16x128xi32>
    %c2_i32 = arith.constant 2 : i32
    %c0_i32 = arith.constant 0 : i32
    %58 = arith.cmpi eq, %c2_i32, %c0_i32 : i32
    %c1_i32 = arith.constant 1 : i32
    %59 = arith.select %58, %c1_i32, %c2_i32 : i32
    %60 = vector.broadcast %59 : i32 to vector<16x128xi32>
    %61 = arith.remsi %55, %60 : vector<16x128xi32>
    %c0_i32_35 = arith.constant 0 : i32
    %62 = vector.broadcast %c0_i32_35 : i32 to vector<16x128xi32>
    %63 = arith.cmpi ne, %61, %62 : vector<16x128xi32>
    %c0_i32_36 = arith.constant 0 : i32
    %64 = vector.broadcast %c0_i32_36 : i32 to vector<16x128xi32>
    %65 = arith.cmpi slt, %61, %64 : vector<16x128xi32>
    %c0_i32_37 = arith.constant 0 : i32
    %66 = arith.cmpi slt, %59, %c0_i32_37 : i32
    %67 = vector.broadcast %66 : i1 to vector<16x128xi1>
    %68 = vector.broadcast %67 : vector<16x128xi1> to vector<16x128xi1>
    %69 = arith.xori %65, %68 : vector<16x128xi1>
    %70 = arith.andi %69, %63 : vector<16x128xi1>
    %71 = vector.broadcast %59 : i32 to vector<16x128xi32>
    %72 = arith.addi %61, %71 : vector<16x128xi32>
    %73 = arith.select %70, %72, %61 : vector<16x128xi1>, vector<16x128xi32>
    %c0_i32_38 = arith.constant 0 : i32
    %74 = vector.broadcast %c0_i32_38 : i32 to vector<16x128xi32>
    %75 = arith.cmpi eq, %73, %74 : vector<16x128xi32>
    %76 = arith.andi %57, %75 : vector<16x128xi1>
    %77 = vector.shape_cast %76 : vector<16x128xi1> to vector<1x16x128xi1>
    %cst_39 = arith.constant 0.000000e+00 : f32
    %78 = vector.shape_cast %77 : vector<1x16x128xi1> to vector<1x16x128xi1>
    %79 = vector.broadcast %78 : vector<1x16x128xi1> to vector<16x16x128xi1>
    %80 = vector.broadcast %cst_39 : f32 to vector<16x16x128xf32>
    %81 = arith.select %79, %54, %80 : vector<16x16x128xi1>, vector<16x16x128xf32>
    %cst_40 = arith.constant dense<0xFF800000> : vector<16x128xf32>
    %82 = vector.multi_reduction <maximumf>, %81, %cst_40 [1] : vector<16x16x128xf32> to vector<16x128xf32>
    %c0_41 = arith.constant 0 : index
    %c0_42 = arith.constant 0 : index
    %83 = vector.load %arg6[%c0_41, %c0_42] : memref<16x128xf32, #tpu.memory_space<vmem>>, vector<16x128xf32>
    tpu.vector_store %arg6[%c0_41, %c0_42], %82 {strides = array<i32>} : memref<16x128xf32, #tpu.memory_space<vmem>>, vector<16x128xf32>,
    return
  }
  func.func @transform_0(%arg0: i32) -> (i32, i32) {
    %c0_i32 = arith.constant 0 : i32
    %c0_i32_0 = arith.constant 0 : i32
    return %arg0, %c0_i32 : i32, i32
  }
  func.func @transform_1(%arg0: i32) -> (i32, i32, i32) {
    %c0_i32 = arith.constant 0 : i32
    %c0_i32_0 = arith.constant 0 : i32
    %c0_i32_1 = arith.constant 0 : i32
    %c0_i32_2 = arith.constant 0 : i32
    return %c0_i32, %c0_i32_0, %c0_i32_1 : i32, i32, i32
  }
  func.func @transform_2(%arg0: i32) -> (i32, i32) {
    %c0_i32 = arith.constant 0 : i32
    %c0_i32_0 = arith.constant 0 : i32
    %c0_i32_1 = arith.constant 0 : i32
    return %c0_i32, %c0_i32_0 : i32, i32
  }
  func.func @transform_3(%arg0: i32) -> (i32, i32, i32) {
    %c0_i32 = arith.constant 0 : i32
    %c0_i32_0 = arith.constant 0 : i32
    %c0_i32_1 = arith.constant 0 : i32
    %c0_i32_2 = arith.constant 0 : i32
    return %c0_i32, %c0_i32_0, %c0_i32_1 : i32, i32, i32
  }
  func.func @transform_4(%arg0: i32) -> (i32, i32) {
    %c0_i32 = arith.constant 0 : i32
    %c0_i32_0 = arith.constant 0 : i32
    %c0_i32_1 = arith.constant 0 : i32
    return %c0_i32, %c0_i32_0 : i32, i32
  }
  func.func @transform_5(%arg0: i32) -> (i32, i32) {
    %c0_i32 = arith.constant 0 : i32
    %c0_i32_0 = arith.constant 0 : i32
    return %arg0, %c0_i32 : i32, i32
  }
}

</mosaic_0001>

<llo_original>
// kernel: model_forward.3
$region0: #{model_forward.3}
  #allocation0 [shape = 'u32[]', space=smem, size = 0x4, offset = 0x4, fixed_abs, tag = 'smem constant byte address 0x4 - core index']
  #allocation1 [shape = 'u32[144,128]{1,0:T(1,128)}', space=vmem, size = 0x12000, scoped, tag = 'internal scratch']
  %s0 = inlined_call_operand.vmem [shape: f32[32,128], index: 0, kind: input, shape index: {}]
  %s1 = inlined_call_operand.vmem [shape: f32[4,2], index: 1, kind: input, shape index: {}]
  %s2 = inlined_call_operand.vmem [shape: bf16[128,128], index: 2, kind: input, shape index: {}]
  %s3 = inlined_call_operand.vmem [shape: bf16[128,128], index: 3, kind: input, shape index: {}]
  %s4 = inlined_call_operand.vmem [shape: bf16[3,128,128], index: 4, kind: input, shape index: {}]
  %s5 = inlined_call_operand.vmem [shape: f32[1,128], index: 5, kind: input, shape index: {}]
  %s6 = inlined_call_operand.vmem [shape: bf16[128,128], index: 6, kind: input, shape index: {}]
  %s7 = inlined_call_operand.vmem [shape: f32[1,128], index: 7, kind: input, shape index: {}]
  %s8 = inlined_call_operand.vmem [shape: f32[2,128], index: 8, kind: output, shape index: {}]
  %s9 = sld [smem:[#allocation0]]
  $region42: #{model_forward.3} parent=0
    _
  %s11 = ssub.s32 1, %s9
  %s12 = scalar_select 0, %s11, %s9
  // Predicated region
  $region2: #{model_forward.3} parent=0 // pred_check
    _
  $region3: #{model_forward.3} parent=0 // pred_check_branch
    %14 = sbr.rel (0) target = $region5
  $region4: #{model_forward.3} parent=0 // pred_region
    _
  $region5: #{model_forward.3} parent=0 // pred_fallthru
    _
  // Predicated region
  $region6: #{model_forward.3} parent=0 // pred_check
    _
  $region7: #{model_forward.3} parent=0 // pred_check_branch
    %16 = sbr.rel (0) target = $region9
  $region8: #{model_forward.3} parent=0 // pred_region
    _
  $region9: #{model_forward.3} parent=0 // pred_fallthru
    _
  // Predicated region
  $region10: #{model_forward.3} parent=0 // pred_check
    _
  $region11: #{model_forward.3} parent=0 // pred_check_branch
    %18 = sbr.rel (0) target = $region13
  $region12: #{model_forward.3} parent=0 // pred_region
    _
  $region13: #{model_forward.3} parent=0 // pred_fallthru
    _
  // Predicated region
  $region14: #{model_forward.3} parent=0 // pred_check
    _
  $region15: #{model_forward.3} parent=0 // pred_check_branch
    %20 = sbr.rel (0) target = $region17
  $region16: #{model_forward.3} parent=0 // pred_region
    _
  $region17: #{model_forward.3} parent=0 // pred_fallthru
    _
  // Predicated region
  $region18: #{model_forward.3} parent=0 // pred_check
    _
  $region19: #{model_forward.3} parent=0 // pred_check_branch
    %22 = sbr.rel (0) target = $region21
  $region20: #{model_forward.3} parent=0 // pred_region
    _
  $region21: #{model_forward.3} parent=0 // pred_fallthru
    _
  // Predicated region
  $region22: #{model_forward.3} parent=0 // pred_check
    _
  $region23: #{model_forward.3} parent=0 // pred_check_branch
    %24 = sbr.rel (0) target = $region25
  $region24: #{model_forward.3} parent=0 // pred_region
    _
  $region25: #{model_forward.3} parent=0 // pred_fallthru
    _
  // Predicated region
  $region26: #{model_forward.3} parent=0 // pred_check
    _
  $region27: #{model_forward.3} parent=0 // pred_check_branch
    %26 = sbr.rel (0) target = $region29
  $region28: #{model_forward.3} parent=0 // pred_region
    _
  $region29: #{model_forward.3} parent=0 // pred_fallthru
    _
  // Predicated region
  $region30: #{model_forward.3} parent=0 // pred_check
    _
  $region31: #{model_forward.3} parent=0 // pred_check_branch
    %28 = sbr.rel (0) target = $region33
  $region32: #{model_forward.3} parent=0 // pred_region
    _
  $region33: #{model_forward.3} parent=0 // pred_fallthru
    _
  %v30 = vld [vmem:[%s0] sm:$0xff]
  %v31 = vld [vmem:[%s0 + $0x8] sm:$0xff]
  %v32 = vld [vmem:[%s0 + $0x10] sm:$0xff]
  %v33 = vld [vmem:[%s1] sm:$0xf]
  %v34 = vpack.c.bf16 %v30, %v30
  %v35 = vld [vmem:[%s2] sm:$0xf]
  %v36 = vld [vmem:[%s2 + $0x4] sm:$0xf]
  %v37 = vld [vmem:[%s2 + $0x8] sm:$0xf]
  %v38 = vld [vmem:[%s2 + $0xc] sm:$0xf]
  %v39 = vld [vmem:[%s2 + $0x10] sm:$0xf]
  %v40 = vld [vmem:[%s2 + $0x14] sm:$0xf]
  %v41 = vld [vmem:[%s2 + $0x18] sm:$0xf]
  %v42 = vld [vmem:[%s2 + $0x1c] sm:$0xf]
  %v43 = vld [vmem:[%s2 + $0x20] sm:$0xf]
  %v44 = vld [vmem:[%s2 + $0x24] sm:$0xf]
  %v45 = vld [vmem:[%s2 + $0x28] sm:$0xf]
  %v46 = vld [vmem:[%s2 + $0x2c] sm:$0xf]
  %v47 = vld [vmem:[%s2 + $0x30] sm:$0xf]
  %v48 = vld [vmem:[%s2 + $0x34] sm:$0xf]
  %v49 = vld [vmem:[%s2 + $0x38] sm:$0xf]
  %v50 = vld [vmem:[%s2 + $0x3c] sm:$0xf]
  %v67 = vunpack.c.l.b16 %v35
  %v68 = vunpack.c.l.b16 %v36
  %v69 = vunpack.c.l.b16 %v37
  %v70 = vunpack.c.l.b16 %v38
  %v71 = vunpack.c.l.b16 %v39
  %v72 = vunpack.c.l.b16 %v40
  %v73 = vunpack.c.l.b16 %v41
  %v74 = vunpack.c.l.b16 %v42
  %v75 = vunpack.c.l.b16 %v43
  %v76 = vunpack.c.l.b16 %v44
  %v77 = vunpack.c.l.b16 %v45
  %v78 = vunpack.c.l.b16 %v46
  %v79 = vunpack.c.l.b16 %v47
  %v80 = vunpack.c.l.b16 %v48
  %v81 = vunpack.c.l.b16 %v49
  %v82 = vunpack.c.l.b16 %v50
  %v83 = vpack.c.b16 %v68, %v67
  %v84 = vpack.c.b16 %v70, %v69
  %v85 = vpack.c.b16 %v72, %v71
  %v86 = vpack.c.b16 %v74, %v73
  %v87 = vpack.c.b16 %v76, %v75
  %v88 = vpack.c.b16 %v78, %v77
  %v89 = vpack.c.b16 %v80, %v79
  %v90 = vpack.c.b16 %v82, %v81
  %99 = vmatprep.subr.bf16.mxu0 0
  %100 = vmatpush1.bf16.msra.mxu0 %v90
  %101 = vmatprep.subr.bf16.mxu0 0
  %102 = vmatpush1.bf16.msra.mxu0 %v89
  %103 = vmatprep.subr.bf16.mxu0 0
  %104 = vmatpush1.bf16.msra.mxu0 %v88
  %105 = vmatprep.subr.bf16.mxu0 0
  %106 = vmatpush1.bf16.msra.mxu0 %v87
  %107 = vmatprep.subr.bf16.mxu0 0
  %108 = vmatpush1.bf16.msra.mxu0 %v86
  %109 = vmatprep.subr.bf16.mxu0 0
  %110 = vmatpush1.bf16.msra.mxu0 %v85
  %111 = vmatprep.subr.bf16.mxu0 0
  %112 = vmatpush1.bf16.msra.mxu0 %v84
  %113 = vmatprep.subr.bf16.mxu0 0
  %114 = vmatpush1.bf16.msra.mxu0 %v83
  %115 = vmatprep.subr.bf16.mxu0 0
  %116 = vmatpush2.bf16.msra.mxu0 0
  %117 = vmatprep.subr.bf16.mxu0 0
  %118 = vmatpush2.bf16.msra.mxu0 0
  %119 = vmatprep.subr.bf16.mxu0 0
  %120 = vmatpush2.bf16.msra.mxu0 0
  %121 = vmatprep.subr.bf16.mxu0 0
  %122 = vmatpush2.bf16.msra.mxu0 0
  %123 = vmatprep.subr.bf16.mxu0 0
  %124 = vmatpush2.bf16.msra.mxu0 0
  %125 = vmatprep.subr.bf16.mxu0 0
  %126 = vmatpush2.bf16.msra.mxu0 0
  %127 = vmatprep.subr.bf16.mxu0 0
  %128 = vmatpush2.bf16.msra.mxu0 0
  %129 = vmatprep.subr.bf16.mxu0 0
  %130 = vmatpush2.bf16.msra.mxu0 0
  %131 = vmatprep.mubr.bf16.mxu0 0
  %132 = vmatmul.mubr.bf16.gmra.mxu0 %v34
  %v133 = vpop.f32.mrf.mxu0
  %v134 = vadd.f32 0.0, %v133
  %v135 = vpop.f32.mrf.mxu0
  %v136 = vpop.f32.mrf.mxu0
  %v137 = vpop.f32.mrf.mxu0
  %138 = vdwg.mxu0
  %v139 = vlaneseq
  %v140 = vshrl.u32 %v139, 7
  %v141 = vsub.s32 0, %v140
  %v142 = vrot.slane %v134, %v141
  %v143 = vmul.f32 %v30, %v142
  %vm144 = vcmask 1044481
  %v145 = vsel %vm144, %v143, 0.0
  %146 = vadd.xlane.f32.xlu0 %v145
  %v147 = vpop.xlane.xlu0 %146
  %v149 = vrot.slane %v33, 7
  %v151 = vadd.f32 %v147, %v149
  %vm152 = vcmask 4097
  %v153 = vsel %vm152, %v151, -inf
  %v154 = vrot.slane %v153, 4
  %v155 = vmax.f32 %v153, %v154
  %v156 = vrot.slane %v155, 2
  %v157 = vmax.f32 %v155, %v156
  %v158 = vrot.slane %v157, 1
  %v159 = vmax.f32 %v157, %v158
  %v160 = vsub.f32 %v151, %v159
  %v161 = vmul.f32 %v160, 1.442695
  %v162 = vpow.pop %v161
  %v164 = vrot.slane %v162, 1
  %vm166 = vcmask 3072
  %v167 = vsel %vm166, %v164, 0.0
  %v168 = vrot.slane %v167, 4
  %v169 = vadd.f32 %v167, %v168
  %v170 = vrot.slane %v169, 2
  %v171 = vadd.f32 %v169, %v170
  %v172 = vrot.slane %v171, 1
  %v173 = vadd.f32 %v171, %v172
  %v174 = vrcp.pop %v173
  %v175 = vmul.f32 %v162, %v174
  %177 = vset.pattern.permute.xlu0 0
  %178 = vperm.xlu0 %177, %v175
  %v179 = vpop.permute.xlu0 %178
  %v181 = vmul.f32 %v179, %v30
  %v183 = vrot.slane %v181, 1
  %vm185 = vcmask 1043456
  %v186 = vsel %vm185, %v183, 0.0
  %v187 = vrot.slane %v186, 4
  %v188 = vadd.f32 %v186, %v187
  %v189 = vrot.slane %v188, 2
  %v190 = vadd.f32 %v188, %v189
  %v191 = vrot.slane %v190, 1
  %v192 = vadd.f32 %v190, %v191
  %v193 = vld [vmem:[%s3] sm:$0xf]
  %v194 = vld [vmem:[%s3 + $0x4] sm:$0xf]
  %v195 = vld [vmem:[%s3 + $0x8] sm:$0xf]
  %v196 = vld [vmem:[%s3 + $0xc] sm:$0xf]
  %v197 = vld [vmem:[%s3 + $0x10] sm:$0xf]
  %v198 = vld [vmem:[%s3 + $0x14] sm:$0xf]
  %v199 = vld [vmem:[%s3 + $0x18] sm:$0xf]
  %v200 = vld [vmem:[%s3 + $0x1c] sm:$0xf]
  %v201 = vld [vmem:[%s3 + $0x20] sm:$0xf]
  %v202 = vld [vmem:[%s3 + $0x24] sm:$0xf]
  %v203 = vld [vmem:[%s3 + $0x28] sm:$0xf]
  %v204 = vld [vmem:[%s3 + $0x2c] sm:$0xf]
  %v205 = vld [vmem:[%s3 + $0x30] sm:$0xf]
  %v206 = vld [vmem:[%s3 + $0x34] sm:$0xf]
  %v207 = vld [vmem:[%s3 + $0x38] sm:$0xf]
  %v208 = vld [vmem:[%s3 + $0x3c] sm:$0xf]
  %v225 = vunpack.c.l.b16 %v193
  %v226 = vunpack.c.l.b16 %v194
  %v227 = vunpack.c.l.b16 %v195
  %v228 = vunpack.c.l.b16 %v196
  %v229 = vunpack.c.l.b16 %v197
  %v230 = vunpack.c.l.b16 %v198
  %v231 = vunpack.c.l.b16 %v199
  %v232 = vunpack.c.l.b16 %v200
  %v233 = vunpack.c.l.b16 %v201
  %v234 = vunpack.c.l.b16 %v202
  %v235 = vunpack.c.l.b16 %v203
  %v236 = vunpack.c.l.b16 %v204
  %v237 = vunpack.c.l.b16 %v205
  %v238 = vunpack.c.l.b16 %v206
  %v239 = vunpack.c.l.b16 %v207
  %v240 = vunpack.c.l.b16 %v208
  %v241 = vpack.c.b16 %v226, %v225
  %v242 = vpack.c.b16 %v228, %v227
  %v243 = vpack.c.b16 %v230, %v229
  %v244 = vpack.c.b16 %v232, %v231
  %v245 = vpack.c.b16 %v234, %v233
  %v246 = vpack.c.b16 %v236, %v235
  %v247 = vpack.c.b16 %v238, %v237
  %v248 = vpack.c.b16 %v240, %v239
  %257 = vmatprep.subr.bf16.mxu0 0
  %258 = vmatpush1.bf16.msra.mxu0 %v248
  %259 = vmatprep.subr.bf16.mxu0 0
  %260 = vmatpush1.bf16.msra.mxu0 %v247
  %261 = vmatprep.subr.bf16.mxu0 0
  %262 = vmatpush1.bf16.msra.mxu0 %v246
  %263 = vmatprep.subr.bf16.mxu0 0
  %264 = vmatpush1.bf16.msra.mxu0 %v245
  %265 = vmatprep.subr.bf16.mxu0 0
  %266 = vmatpush1.bf16.msra.mxu0 %v244
  %267 = vmatprep.subr.bf16.mxu0 0
  %268 = vmatpush1.bf16.msra.mxu0 %v243
  %269 = vmatprep.subr.bf16.mxu0 0
  %270 = vmatpush1.bf16.msra.mxu0 %v242
  %271 = vmatprep.subr.bf16.mxu0 0
  %272 = vmatpush1.bf16.msra.mxu0 %v241
  %273 = vmatprep.subr.bf16.mxu0 0
  %274 = vmatpush2.bf16.msra.mxu0 0
  %275 = vmatprep.subr.bf16.mxu0 0
  %276 = vmatpush2.bf16.msra.mxu0 0
  %277 = vmatprep.subr.bf16.mxu0 0
  %278 = vmatpush2.bf16.msra.mxu0 0
  %279 = vmatprep.subr.bf16.mxu0 0
  %280 = vmatpush2.bf16.msra.mxu0 0
  %281 = vmatprep.subr.bf16.mxu0 0
  %282 = vmatpush2.bf16.msra.mxu0 0
  %283 = vmatprep.subr.bf16.mxu0 0
  %284 = vmatpush2.bf16.msra.mxu0 0
  %285 = vmatprep.subr.bf16.mxu0 0
  %286 = vmatpush2.bf16.msra.mxu0 0
  %287 = vmatprep.subr.bf16.mxu0 0
  %288 = vmatpush2.bf16.msra.mxu0 0
  %289 = vmatprep.mubr.bf16.mxu0 0
  %290 = vmatmul.mubr.bf16.gmra.mxu0 %v34
  %v291 = vpop.f32.mrf.mxu0
  %v292 = vadd.f32 0.0, %v291
  %v293 = vpop.f32.mrf.mxu0
  %v294 = vpop.f32.mrf.mxu0
  %v295 = vpop.f32.mrf.mxu0
  %296 = vdwg.mxu0
  %v297 = vlaneseq
  %v298 = vshrl.u32 %v297, 7
  %v299 = vsub.s32 0, %v298
  %v300 = vrot.slane %v292, %v299
  %v301 = vmul.f32 %v30, %v300
  %v302 = vmul.f32 %v31, %v300
  %vm303 = vcmask 1047557
  %v304 = vsel %vm303, %v301, 0.0
  %305 = vadd.xlane.f32.xlu0 %v304
  %v306 = vpop.xlane.xlu0 %305
  %vm307 = vcmask 1041408
  %v308 = vsel %vm307, %v302, 0.0
  %309 = vadd.xlane.f32.xlu0 %v308
  %v310 = vpop.xlane.xlu0 %309
  %v311 = vsel %vm303, %v306, -inf
  %v312 = vsel %vm307, %v310, -inf
  %v313 = vmax.f32 %v311, %v312
  %v314 = vrot.slane %v313, 4
  %v315 = vmax.f32 %v313, %v314
  %v316 = vrot.slane %v315, 2
  %v317 = vmax.f32 %v315, %v316
  %v318 = vrot.slane %v317, 1
  %v319 = vmax.f32 %v317, %v318
  %v320 = vsub.f32 %v306, %v319
  %v321 = vsub.f32 %v310, %v319
  %v322 = vmul.f32 %v320, 1.442695
  %v323 = vpow.pop %v322
  %v324 = vmul.f32 %v321, 1.442695
  %v325 = vpow.pop %v324
  %vm328 = vcmask 1042432
  %v329 = vrot.slane %v323, 5
  %v330 = vrot.slane %v325, 5
  %v331 = vsel %vm328, %v329, %v330
  %vm333 = vcmask 1044480
  %v334 = vsel %vm333, %v331, 0.0
  %v335 = vrot.slane %v334, 4
  %v336 = vadd.f32 %v334, %v335
  %v337 = vrot.slane %v336, 2
  %v338 = vadd.f32 %v336, %v337
  %v339 = vrot.slane %v338, 1
  %v340 = vadd.f32 %v338, %v339
  %v341 = vrcp.pop %v340
  %v342 = vmul.f32 %v323, %v341
  %v343 = vmul.f32 %v325, %v341
  %v344 = vmul.f32 %v342, %v30
  %v345 = vmul.f32 %v343, %v31
  %v348 = vrot.slane %v344, 5
  %v349 = vrot.slane %v345, 5
  %v350 = vsel %vm328, %v348, %v349
  %v352 = vsel %vm333, %v350, 0.0
  %v353 = vrot.slane %v352, 4
  %v354 = vadd.f32 %v352, %v353
  %v355 = vrot.slane %v354, 2
  %v356 = vadd.f32 %v354, %v355
  %v357 = vrot.slane %v356, 1
  %v358 = vadd.f32 %v356, %v357
  %v359 = vpack.c.bf16 %v192, %v192
  %v360 = vld [vmem:[%s4] sm:$0xf]
  %v361 = vld [vmem:[%s4 + $0x4] sm:$0xf]
  %v362 = vld [vmem:[%s4 + $0x8] sm:$0xf]
  %v363 = vld [vmem:[%s4 + $0xc] sm:$0xf]
  %v364 = vld [vmem:[%s4 + $0x10] sm:$0xf]
  %v365 = vld [vmem:[%s4 + $0x14] sm:$0xf]
  %v366 = vld [vmem:[%s4 + $0x18] sm:$0xf]
  %v367 = vld [vmem:[%s4 + $0x1c] sm:$0xf]
  %v368 = vld [vmem:[%s4 + $0x20] sm:$0xf]
  %v369 = vld [vmem:[%s4 + $0x24] sm:$0xf]
  %v370 = vld [vmem:[%s4 + $0x28] sm:$0xf]
  %v371 = vld [vmem:[%s4 + $0x2c] sm:$0xf]
  %v372 = vld [vmem:[%s4 + $0x30] sm:$0xf]
  %v373 = vld [vmem:[%s4 + $0x34] sm:$0xf]
  %v374 = vld [vmem:[%s4 + $0x38] sm:$0xf]
  %v375 = vld [vmem:[%s4 + $0x3c] sm:$0xf]
  %s376 = scalar_lea.vmem %s4, 64
  %v377 = vld [vmem:[%s376] sm:$0xf]
  %v378 = vld [vmem:[%s376 + $0x4] sm:$0xf]
  %v379 = vld [vmem:[%s376 + $0x8] sm:$0xf]
  %v380 = vld [vmem:[%s376 + $0xc] sm:$0xf]
  %v381 = vld [vmem:[%s376 + $0x10] sm:$0xf]
  %v382 = vld [vmem:[%s376 + $0x14] sm:$0xf]
  %v383 = vld [vmem:[%s376 + $0x18] sm:$0xf]
  %v384 = vld [vmem:[%s376 + $0x1c] sm:$0xf]
  %v385 = vld [vmem:[%s376 + $0x20] sm:$0xf]
  %v386 = vld [vmem:[%s376 + $0x24] sm:$0xf]
  %v387 = vld [vmem:[%s376 + $0x28] sm:$0xf]
  %v388 = vld [vmem:[%s376 + $0x2c] sm:$0xf]
  %v389 = vld [vmem:[%s376 + $0x30] sm:$0xf]
  %v390 = vld [vmem:[%s376 + $0x34] sm:$0xf]
  %v391 = vld [vmem:[%s376 + $0x38] sm:$0xf]
  %v392 = vld [vmem:[%s376 + $0x3c] sm:$0xf]
  %v409 = vunpack.c.l.b16 %v377
  %v410 = vunpack.c.l.b16 %v378
  %v411 = vunpack.c.l.b16 %v379
  %v412 = vunpack.c.l.b16 %v380
  %v413 = vunpack.c.l.b16 %v381
  %v414 = vunpack.c.l.b16 %v382
  %v415 = vunpack.c.l.b16 %v383
  %v416 = vunpack.c.l.b16 %v384
  %v417 = vunpack.c.l.b16 %v385
  %v418 = vunpack.c.l.b16 %v386
  %v419 = vunpack.c.l.b16 %v387
  %v420 = vunpack.c.l.b16 %v388
  %v421 = vunpack.c.l.b16 %v389
  %v422 = vunpack.c.l.b16 %v390
  %v423 = vunpack.c.l.b16 %v391
  %v424 = vunpack.c.l.b16 %v392
  %v425 = vpack.c.b16 %v410, %v409
  %v426 = vpack.c.b16 %v412, %v411
  %v427 = vpack.c.b16 %v414, %v413
  %v428 = vpack.c.b16 %v416, %v415
  %v429 = vpack.c.b16 %v418, %v417
  %v430 = vpack.c.b16 %v420, %v419
  %v431 = vpack.c.b16 %v422, %v421
  %v432 = vpack.c.b16 %v424, %v423
  %441 = vmatprep.subr.bf16.mxu0 0
  %442 = vmatpush1.bf16.msra.mxu0 %v432
  %443 = vmatprep.subr.bf16.mxu0 0
  %444 = vmatpush1.bf16.msra.mxu0 %v431
  %445 = vmatprep.subr.bf16.mxu0 0
  %446 = vmatpush1.bf16.msra.mxu0 %v430
  %447 = vmatprep.subr.bf16.mxu0 0
  %448 = vmatpush1.bf16.msra.mxu0 %v429
  %449 = vmatprep.subr.bf16.mxu0 0
  %450 = vmatpush1.bf16.msra.mxu0 %v428
  %451 = vmatprep.subr.bf16.mxu0 0
  %452 = vmatpush1.bf16.msra.mxu0 %v427
  %453 = vmatprep.subr.bf16.mxu0 0
  %454 = vmatpush1.bf16.msra.mxu0 %v426
  %455 = vmatprep.subr.bf16.mxu0 0
  %456 = vmatpush1.bf16.msra.mxu0 %v425
  %457 = vmatprep.subr.bf16.mxu0 0
  %458 = vmatpush2.bf16.msra.mxu0 0
  %459 = vmatprep.subr.bf16.mxu0 0
  %460 = vmatpush2.bf16.msra.mxu0 0
  %461 = vmatprep.subr.bf16.mxu0 0
  %462 = vmatpush2.bf16.msra.mxu0 0
  %463 = vmatprep.subr.bf16.mxu0 0
  %464 = vmatpush2.bf16.msra.mxu0 0
  %465 = vmatprep.subr.bf16.mxu0 0
  %466 = vmatpush2.bf16.msra.mxu0 0
  %467 = vmatprep.subr.bf16.mxu0 0
  %468 = vmatpush2.bf16.msra.mxu0 0
  %469 = vmatprep.subr.bf16.mxu0 0
  %470 = vmatpush2.bf16.msra.mxu0 0
  %471 = vmatprep.subr.bf16.mxu0 0
  %472 = vmatpush2.bf16.msra.mxu0 0
  %473 = vmatprep.mubr.bf16.mxu0 0
  %474 = vmatmul.mubr.bf16.gmra.mxu0 %v34
  %v475 = vpop.f32.mrf.mxu0
  %v476 = vadd.f32 0.0, %v475
  %v477 = vpop.f32.mrf.mxu0
  %v478 = vpop.f32.mrf.mxu0
  %v479 = vpop.f32.mrf.mxu0
  %480 = vdwg.mxu0
  %v497 = vunpack.c.l.b16 %v360
  %v498 = vunpack.c.l.b16 %v361
  %v499 = vunpack.c.l.b16 %v362
  %v500 = vunpack.c.l.b16 %v363
  %v501 = vunpack.c.l.b16 %v364
  %v502 = vunpack.c.l.b16 %v365
  %v503 = vunpack.c.l.b16 %v366
  %v504 = vunpack.c.l.b16 %v367
  %v505 = vunpack.c.l.b16 %v368
  %v506 = vunpack.c.l.b16 %v369
  %v507 = vunpack.c.l.b16 %v370
  %v508 = vunpack.c.l.b16 %v371
  %v509 = vunpack.c.l.b16 %v372
  %v510 = vunpack.c.l.b16 %v373
  %v511 = vunpack.c.l.b16 %v374
  %v512 = vunpack.c.l.b16 %v375
  %v513 = vpack.c.b16 %v498, %v497
  %v514 = vpack.c.b16 %v500, %v499
  %v515 = vpack.c.b16 %v502, %v501
  %v516 = vpack.c.b16 %v504, %v503
  %v517 = vpack.c.b16 %v506, %v505
  %v518 = vpack.c.b16 %v508, %v507
  %v519 = vpack.c.b16 %v510, %v509
  %v520 = vpack.c.b16 %v512, %v511
  %529 = vmatprep.subr.bf16.mxu0 0
  %530 = vmatpush1.bf16.msra.mxu0 %v520
  %531 = vmatprep.subr.bf16.mxu0 0
  %532 = vmatpush1.bf16.msra.mxu0 %v519
  %533 = vmatprep.subr.bf16.mxu0 0
  %534 = vmatpush1.bf16.msra.mxu0 %v518
  %535 = vmatprep.subr.bf16.mxu0 0
  %536 = vmatpush1.bf16.msra.mxu0 %v517
  %537 = vmatprep.subr.bf16.mxu0 0
  %538 = vmatpush1.bf16.msra.mxu0 %v516
  %539 = vmatprep.subr.bf16.mxu0 0
  %540 = vmatpush1.bf16.msra.mxu0 %v515
  %541 = vmatprep.subr.bf16.mxu0 0
  %542 = vmatpush1.bf16.msra.mxu0 %v514
  %543 = vmatprep.subr.bf16.mxu0 0
  %544 = vmatpush1.bf16.msra.mxu0 %v513
  %545 = vmatprep.subr.bf16.mxu0 0
  %546 = vmatpush2.bf16.msra.mxu0 0
  %547 = vmatprep.subr.bf16.mxu0 0
  %548 = vmatpush2.bf16.msra.mxu0 0
  %549 = vmatprep.subr.bf16.mxu0 0
  %550 = vmatpush2.bf16.msra.mxu0 0
  %551 = vmatprep.subr.bf16.mxu0 0
  %552 = vmatpush2.bf16.msra.mxu0 0
  %553 = vmatprep.subr.bf16.mxu0 0
  %554 = vmatpush2.bf16.msra.mxu0 0
  %555 = vmatprep.subr.bf16.mxu0 0
  %556 = vmatpush2.bf16.msra.mxu0 0
  %557 = vmatprep.subr.bf16.mxu0 0
  %558 = vmatpush2.bf16.msra.mxu0 0
  %559 = vmatprep.subr.bf16.mxu0 0
  %560 = vmatpush2.bf16.msra.mxu0 0
  %561 = vmatprep.mubr.bf16.mxu0 0
  %562 = vmatmul.mubr.bf16.gmra.mxu0 %v359
  %v563 = vpop.f32.mrf.mxu0
  %v564 = vadd.f32 %v476, %v563
  %v565 = vpop.f32.mrf.mxu0
  %v566 = vpop.f32.mrf.mxu0
  %v567 = vpop.f32.mrf.mxu0
  %568 = vdwg.mxu0
  %v569 = vpack.c.bf16 %v358, %v358
  %s570 = scalar_lea.vmem %s4, 128
  %v571 = vld [vmem:[%s570] sm:$0xf]
  %v572 = vld [vmem:[%s570 + $0x4] sm:$0xf]
  %v573 = vld [vmem:[%s570 + $0x8] sm:$0xf]
  %v574 = vld [vmem:[%s570 + $0xc] sm:$0xf]
  %v575 = vld [vmem:[%s570 + $0x10] sm:$0xf]
  %v576 = vld [vmem:[%s570 + $0x14] sm:$0xf]
  %v577 = vld [vmem:[%s570 + $0x18] sm:$0xf]
  %v578 = vld [vmem:[%s570 + $0x1c] sm:$0xf]
  %v579 = vld [vmem:[%s570 + $0x20] sm:$0xf]
  %v580 = vld [vmem:[%s570 + $0x24] sm:$0xf]
  %v581 = vld [vmem:[%s570 + $0x28] sm:$0xf]
  %v582 = vld [vmem:[%s570 + $0x2c] sm:$0xf]
  %v583 = vld [vmem:[%s570 + $0x30] sm:$0xf]
  %v584 = vld [vmem:[%s570 + $0x34] sm:$0xf]
  %v585 = vld [vmem:[%s570 + $0x38] sm:$0xf]
  %v586 = vld [vmem:[%s570 + $0x3c] sm:$0xf]
  %v603 = vunpack.c.l.b16 %v571
  %v604 = vunpack.c.l.b16 %v572
  %v605 = vunpack.c.l.b16 %v573
  %v606 = vunpack.c.l.b16 %v574
  %v607 = vunpack.c.l.b16 %v575
  %v608 = vunpack.c.l.b16 %v576
  %v609 = vunpack.c.l.b16 %v577
  %v610 = vunpack.c.l.b16 %v578
  %v611 = vunpack.c.l.b16 %v579
  %v612 = vunpack.c.l.b16 %v580
  %v613 = vunpack.c.l.b16 %v581
  %v614 = vunpack.c.l.b16 %v582
  %v615 = vunpack.c.l.b16 %v583
  %v616 = vunpack.c.l.b16 %v584
  %v617 = vunpack.c.l.b16 %v585
  %v618 = vunpack.c.l.b16 %v586
  %v619 = vpack.c.b16 %v604, %v603
  %v620 = vpack.c.b16 %v606, %v605
  %v621 = vpack.c.b16 %v608, %v607
  %v622 = vpack.c.b16 %v610, %v609
  %v623 = vpack.c.b16 %v612, %v611
  %v624 = vpack.c.b16 %v614, %v613
  %v625 = vpack.c.b16 %v616, %v615
  %v626 = vpack.c.b16 %v618, %v617
  %635 = vmatprep.subr.bf16.mxu0 0
  %636 = vmatpush1.bf16.msra.mxu0 %v626
  %637 = vmatprep.subr.bf16.mxu0 0
  %638 = vmatpush1.bf16.msra.mxu0 %v625
  %639 = vmatprep.subr.bf16.mxu0 0
  %640 = vmatpush1.bf16.msra.mxu0 %v624
  %641 = vmatprep.subr.bf16.mxu0 0
  %642 = vmatpush1.bf16.msra.mxu0 %v623
  %643 = vmatprep.subr.bf16.mxu0 0
  %644 = vmatpush1.bf16.msra.mxu0 %v622
  %645 = vmatprep.subr.bf16.mxu0 0
  %646 = vmatpush1.bf16.msra.mxu0 %v621
  %647 = vmatprep.subr.bf16.mxu0 0
  %648 = vmatpush1.bf16.msra.mxu0 %v620
  %649 = vmatprep.subr.bf16.mxu0 0
  %650 = vmatpush1.bf16.msra.mxu0 %v619
  %651 = vmatprep.subr.bf16.mxu0 0
  %652 = vmatpush2.bf16.msra.mxu0 0
  %653 = vmatprep.subr.bf16.mxu0 0
  %654 = vmatpush2.bf16.msra.mxu0 0
  %655 = vmatprep.subr.bf16.mxu0 0
  %656 = vmatpush2.bf16.msra.mxu0 0
  %657 = vmatprep.subr.bf16.mxu0 0
  %658 = vmatpush2.bf16.msra.mxu0 0
  %659 = vmatprep.subr.bf16.mxu0 0
  %660 = vmatpush2.bf16.msra.mxu0 0
  %661 = vmatprep.subr.bf16.mxu0 0
  %662 = vmatpush2.bf16.msra.mxu0 0
  %663 = vmatprep.subr.bf16.mxu0 0
  %664 = vmatpush2.bf16.msra.mxu0 0
  %665 = vmatprep.subr.bf16.mxu0 0
  %666 = vmatpush2.bf16.msra.mxu0 0
  %667 = vmatprep.mubr.bf16.mxu0 0
  %668 = vmatmul.mubr.bf16.gmra.mxu0 %v569
  %v669 = vpop.f32.mrf.mxu0
  %v670 = vadd.f32 0.0, %v669
  %v671 = vpop.f32.mrf.mxu0
  %v672 = vpop.f32.mrf.mxu0
  %v673 = vpop.f32.mrf.mxu0
  %674 = vdwg.mxu0
  %v675 = vadd.f32 %v564, %v670
  %v676 = vld [vmem:[%s5] sm:$0x1]
  %v677 = vadd.f32 %v675, %v676
  %v678 = vmax.f32 %v677, 0.0
  %v679 = vpack.c.bf16 %v678, %v678
  %v680 = vld [vmem:[%s6] sm:$0xf]
  %v681 = vld [vmem:[%s6 + $0x4] sm:$0xf]
  %v682 = vld [vmem:[%s6 + $0x8] sm:$0xf]
  %v683 = vld [vmem:[%s6 + $0xc] sm:$0xf]
  %v684 = vld [vmem:[%s6 + $0x10] sm:$0xf]
  %v685 = vld [vmem:[%s6 + $0x14] sm:$0xf]
  %v686 = vld [vmem:[%s6 + $0x18] sm:$0xf]
  %v687 = vld [vmem:[%s6 + $0x1c] sm:$0xf]
  %v688 = vld [vmem:[%s6 + $0x20] sm:$0xf]
  %v689 = vld [vmem:[%s6 + $0x24] sm:$0xf]
  %v690 = vld [vmem:[%s6 + $0x28] sm:$0xf]
  %v691 = vld [vmem:[%s6 + $0x2c] sm:$0xf]
  %v692 = vld [vmem:[%s6 + $0x30] sm:$0xf]
  %v693 = vld [vmem:[%s6 + $0x34] sm:$0xf]
  %v694 = vld [vmem:[%s6 + $0x38] sm:$0xf]
  %v695 = vld [vmem:[%s6 + $0x3c] sm:$0xf]
  %v696 = vld [vmem:[%s7] sm:$0x1]
  %v713 = vunpack.c.l.b16 %v680
  %v714 = vunpack.c.l.b16 %v681
  %v715 = vunpack.c.l.b16 %v682
  %v716 = vunpack.c.l.b16 %v683
  %v717 = vunpack.c.l.b16 %v684
  %v718 = vunpack.c.l.b16 %v685
  %v719 = vunpack.c.l.b16 %v686
  %v720 = vunpack.c.l.b16 %v687
  %v721 = vunpack.c.l.b16 %v688
  %v722 = vunpack.c.l.b16 %v689
  %v723 = vunpack.c.l.b16 %v690
  %v724 = vunpack.c.l.b16 %v691
  %v725 = vunpack.c.l.b16 %v692
  %v726 = vunpack.c.l.b16 %v693
  %v727 = vunpack.c.l.b16 %v694
  %v728 = vunpack.c.l.b16 %v695
  %v729 = vpack.c.b16 %v714, %v713
  %v730 = vpack.c.b16 %v716, %v715
  %v731 = vpack.c.b16 %v718, %v717
  %v732 = vpack.c.b16 %v720, %v719
  %v733 = vpack.c.b16 %v722, %v721
  %v734 = vpack.c.b16 %v724, %v723
  %v735 = vpack.c.b16 %v726, %v725
  %v736 = vpack.c.b16 %v728, %v727
  %745 = vmatprep.subr.bf16.mxu0 0
  %746 = vmatpush1.bf16.msra.mxu0 %v736
  %747 = vmatprep.subr.bf16.mxu0 0
  %748 = vmatpush1.bf16.msra.mxu0 %v735
  %749 = vmatprep.subr.bf16.mxu0 0
  %750 = vmatpush1.bf16.msra.mxu0 %v734
  %751 = vmatprep.subr.bf16.mxu0 0
  %752 = vmatpush1.bf16.msra.mxu0 %v733
  %753 = vmatprep.subr.bf16.mxu0 0
  %754 = vmatpush1.bf16.msra.mxu0 %v732
  %755 = vmatprep.subr.bf16.mxu0 0
  %756 = vmatpush1.bf16.msra.mxu0 %v731
  %757 = vmatprep.subr.bf16.mxu0 0
  %758 = vmatpush1.bf16.msra.mxu0 %v730
  %759 = vmatprep.subr.bf16.mxu0 0
  %760 = vmatpush1.bf16.msra.mxu0 %v729
  %761 = vmatprep.subr.bf16.mxu0 0
  %762 = vmatpush2.bf16.msra.mxu0 0
  %763 = vmatprep.subr.bf16.mxu0 0
  %764 = vmatpush2.bf16.msra.mxu0 0
  %765 = vmatprep.subr.bf16.mxu0 0
  %766 = vmatpush2.bf16.msra.mxu0 0
  %767 = vmatprep.subr.bf16.mxu0 0
  %768 = vmatpush2.bf16.msra.mxu0 0
  %769 = vmatprep.subr.bf16.mxu0 0
  %770 = vmatpush2.bf16.msra.mxu0 0
  %771 = vmatprep.subr.bf16.mxu0 0
  %772 = vmatpush2.bf16.msra.mxu0 0
  %773 = vmatprep.subr.bf16.mxu0 0
  %774 = vmatpush2.bf16.msra.mxu0 0
  %775 = vmatprep.subr.bf16.mxu0 0
  %776 = vmatpush2.bf16.msra.mxu0 0
  %777 = vmatprep.mubr.bf16.mxu0 0
  %778 = vmatmul.mubr.bf16.gmra.mxu0 %v679
  %v779 = vpop.f32.mrf.mxu0
  %v780 = vadd.f32 %v696, %v779
  %v781 = vpop.f32.mrf.mxu0
  %v782 = vpop.f32.mrf.mxu0
  %v783 = vpop.f32.mrf.mxu0
  %784 = vdwg.mxu0
  %v785 = vxor.u32 %v780, 2147483648
  %v786 = vmul.f32 %v785, 1.442695
  %v787 = vpow.pop %v786
  %v788 = vadd.f32 %v787, 1.0
  %v789 = vrcp.pop %v788
  %v790 = vmul.f32 1.0, %v789
  %v791 = vpack.c.bf16 %v31, %v31
  %v793 = vrot.slane %v791, 1
  %795 = vmatprep.subr.bf16.mxu0 0
  %796 = vmatpush1.bf16.msra.mxu0 %v90
  %797 = vmatprep.subr.bf16.mxu0 0
  %798 = vmatpush1.bf16.msra.mxu0 %v89
  %799 = vmatprep.subr.bf16.mxu0 0
  %800 = vmatpush1.bf16.msra.mxu0 %v88
  %801 = vmatprep.subr.bf16.mxu0 0
  %802 = vmatpush1.bf16.msra.mxu0 %v87
  %803 = vmatprep.subr.bf16.mxu0 0
  %804 = vmatpush1.bf16.msra.mxu0 %v86
  %805 = vmatprep.subr.bf16.mxu0 0
  %806 = vmatpush1.bf16.msra.mxu0 %v85
  %807 = vmatprep.subr.bf16.mxu0 0
  %808 = vmatpush1.bf16.msra.mxu0 %v84
  %809 = vmatprep.subr.bf16.mxu0 0
  %810 = vmatpush1.bf16.msra.mxu0 %v83
  %811 = vmatprep.subr.bf16.mxu0 0
  %812 = vmatpush2.bf16.msra.mxu0 0
  %813 = vmatprep.subr.bf16.mxu0 0
  %814 = vmatpush2.bf16.msra.mxu0 0
  %815 = vmatprep.subr.bf16.mxu0 0
  %816 = vmatpush2.bf16.msra.mxu0 0
  %817 = vmatprep.subr.bf16.mxu0 0
  %818 = vmatpush2.bf16.msra.mxu0 0
  %819 = vmatprep.subr.bf16.mxu0 0
  %820 = vmatpush2.bf16.msra.mxu0 0
  %821 = vmatprep.subr.bf16.mxu0 0
  %822 = vmatpush2.bf16.msra.mxu0 0
  %823 = vmatprep.subr.bf16.mxu0 0
  %824 = vmatpush2.bf16.msra.mxu0 0
  %825 = vmatprep.subr.bf16.mxu0 0
  %826 = vmatpush2.bf16.msra.mxu0 0
  %827 = vmatprep.mubr.bf16.mxu0 0
  %828 = vmatmul.mubr.bf16.gmra.mxu0 %v793
  %v829 = vpop.f32.mrf.mxu0
  %v830 = vadd.f32 0.0, %v829
  %v831 = vpop.f32.mrf.mxu0
  %v832 = vpop.f32.mrf.mxu0
  %v833 = vpop.f32.mrf.mxu0
  %834 = vdwg.mxu0
  %v835 = vlaneseq
  %v836 = vshrl.u32 %v835, 7
  %v837 = vsub.s32 0, %v836
  %v838 = vrot.slane %v830, %v837
  %v839 = vmul.f32 %v31, %v838
  %vm840 = vcmask 1046531
  %v841 = vsel %vm840, %v839, 0.0
  %842 = vadd.xlane.f32.xlu0 %v841
  %v843 = vpop.xlane.xlu0 %842
  %v844 = vrot.slane %v33, 5
  %845 = vrot.lane.b32.xlu0 %v844, 127
  %v846 = vpop.permute.xlu0 %845
  %v848 = vadd.f32 %v843, %v846
  %vm849 = vcmask 6147
  %v850 = vsel %vm849, %v848, -inf
  %v851 = vrot.slane %v850, 4
  %v852 = vmax.f32 %v850, %v851
  %v853 = vrot.slane %v852, 2
  %v854 = vmax.f32 %v852, %v853
  %v855 = vrot.slane %v854, 1
  %v856 = vmax.f32 %v854, %v855
  %v857 = vsub.f32 %v848, %v856
  %v858 = vmul.f32 %v857, 1.442695
  %v859 = vpow.pop %v858
  %v861 = vrot.slane %v859, 3
  %v863 = vsel %vm166, %v861, 0.0
  %v864 = vrot.slane %v863, 4
  %v865 = vadd.f32 %v863, %v864
  %v866 = vrot.slane %v865, 2
  %v867 = vadd.f32 %v865, %v866
  %v868 = vrot.slane %v867, 1
  %v869 = vadd.f32 %v867, %v868
  %v870 = vrcp.pop %v869
  %v871 = vmul.f32 %v859, %v870
  %873 = vset.pattern.permute.xlu0 0
  %874 = vperm.xlu0 %873, %v871
  %v875 = vpop.permute.xlu0 %874
  %v877 = vmul.f32 %v875, %v31
  %v879 = vrot.slane %v877, 3
  %v881 = vsel %vm185, %v879, 0.0
  %v882 = vrot.slane %v881, 4
  %v883 = vadd.f32 %v881, %v882
  %v884 = vrot.slane %v883, 2
  %v885 = vadd.f32 %v883, %v884
  %v886 = vrot.slane %v885, 1
  %v887 = vadd.f32 %v885, %v886
  %888 = vmatprep.subr.bf16.mxu0 0
  %889 = vmatpush1.bf16.msra.mxu0 %v248
  %890 = vmatprep.subr.bf16.mxu0 0
  %891 = vmatpush1.bf16.msra.mxu0 %v247
  %892 = vmatprep.subr.bf16.mxu0 0
  %893 = vmatpush1.bf16.msra.mxu0 %v246
  %894 = vmatprep.subr.bf16.mxu0 0
  %895 = vmatpush1.bf16.msra.mxu0 %v245
  %896 = vmatprep.subr.bf16.mxu0 0
  %897 = vmatpush1.bf16.msra.mxu0 %v244
  %898 = vmatprep.subr.bf16.mxu0 0
  %899 = vmatpush1.bf16.msra.mxu0 %v243
  %900 = vmatprep.subr.bf16.mxu0 0
  %901 = vmatpush1.bf16.msra.mxu0 %v242
  %902 = vmatprep.subr.bf16.mxu0 0
  %903 = vmatpush1.bf16.msra.mxu0 %v241
  %904 = vmatprep.subr.bf16.mxu0 0
  %905 = vmatpush2.bf16.msra.mxu0 0
  %906 = vmatprep.subr.bf16.mxu0 0
  %907 = vmatpush2.bf16.msra.mxu0 0
  %908 = vmatprep.subr.bf16.mxu0 0
  %909 = vmatpush2.bf16.msra.mxu0 0
  %910 = vmatprep.subr.bf16.mxu0 0
  %911 = vmatpush2.bf16.msra.mxu0 0
  %912 = vmatprep.subr.bf16.mxu0 0
  %913 = vmatpush2.bf16.msra.mxu0 0
  %914 = vmatprep.subr.bf16.mxu0 0
  %915 = vmatpush2.bf16.msra.mxu0 0
  %916 = vmatprep.subr.bf16.mxu0 0
  %917 = vmatpush2.bf16.msra.mxu0 0
  %918 = vmatprep.subr.bf16.mxu0 0
  %919 = vmatpush2.bf16.msra.mxu0 0
  %920 = vmatprep.mubr.bf16.mxu0 0
  %921 = vmatmul.mubr.bf16.gmra.mxu0 %v793
  %v922 = vpop.f32.mrf.mxu0
  %v923 = vadd.f32 0.0, %v922
  %v924 = vpop.f32.mrf.mxu0
  %v925 = vpop.f32.mrf.mxu0
  %v926 = vpop.f32.mrf.mxu0
  %927 = vdwg.mxu0
  %v928 = vlaneseq
  %v929 = vshrl.u32 %v928, 7
  %v930 = vsub.s32 0, %v929
  %v931 = vrot.slane %v923, %v930
  %v932 = vmul.f32 %v31, %v931
  %v933 = vmul.f32 %v32, %v931
  %vm934 = vcmask 1047559
  %v935 = vsel %vm934, %v932, 0.0
  %936 = vadd.xlane.f32.xlu0 %v935
  %v937 = vpop.xlane.xlu0 %936
  %v938 = vsel %vm185, %v933, 0.0
  %939 = vadd.xlane.f32.xlu0 %v938
  %v940 = vpop.xlane.xlu0 %939
  %v941 = vsel %vm934, %v937, -inf
  %v942 = vsel %vm185, %v940, -inf
  %v943 = vmax.f32 %v941, %v942
  %v944 = vrot.slane %v943, 4
  %v945 = vmax.f32 %v943, %v944
  %v946 = vrot.slane %v945, 2
  %v947 = vmax.f32 %v945, %v946
  %v948 = vrot.slane %v947, 1
  %v949 = vmax.f32 %v947, %v948
  %v950 = vsub.f32 %v937, %v949
  %v951 = vsub.f32 %v940, %v949
  %v952 = vmul.f32 %v950, 1.442695
  %v953 = vpow.pop %v952
  %v954 = vmul.f32 %v951, 1.442695
  %v955 = vpow.pop %v954
  %vm958 = vcmask 1040384
  %v959 = vrot.slane %v953, 7
  %v960 = vrot.slane %v955, 7
  %v961 = vsel %vm958, %v959, %v960
  %v963 = vsel %vm333, %v961, 0.0
  %v964 = vrot.slane %v963, 4
  %v965 = vadd.f32 %v963, %v964
  %v966 = vrot.slane %v965, 2
  %v967 = vadd.f32 %v965, %v966
  %v968 = vrot.slane %v967, 1
  %v969 = vadd.f32 %v967, %v968
  %v970 = vrcp.pop %v969
  %v971 = vmul.f32 %v953, %v970
  %v972 = vmul.f32 %v955, %v970
  %v973 = vmul.f32 %v971, %v31
  %v974 = vmul.f32 %v972, %v32
  %v977 = vrot.slane %v973, 7
  %v978 = vrot.slane %v974, 7
  %v979 = vsel %vm958, %v977, %v978
  %v981 = vsel %vm333, %v979, 0.0
  %v982 = vrot.slane %v981, 4
  %v983 = vadd.f32 %v981, %v982
  %v984 = vrot.slane %v983, 2
  %v985 = vadd.f32 %v983, %v984
  %v986 = vrot.slane %v985, 1
  %v987 = vadd.f32 %v985, %v986
  %v988 = vpack.c.bf16 %v887, %v887
  %989 = vmatprep.subr.bf16.mxu0 0
  %990 = vmatpush1.bf16.msra.mxu0 %v432
  %991 = vmatprep.subr.bf16.mxu0 0
  %992 = vmatpush1.bf16.msra.mxu0 %v431
  %993 = vmatprep.subr.bf16.mxu0 0
  %994 = vmatpush1.bf16.msra.mxu0 %v430
  %995 = vmatprep.subr.bf16.mxu0 0
  %996 = vmatpush1.bf16.msra.mxu0 %v429
  %997 = vmatprep.subr.bf16.mxu0 0
  %998 = vmatpush1.bf16.msra.mxu0 %v428
  %999 = vmatprep.subr.bf16.mxu0 0
  %1000 = vmatpush1.bf16.msra.mxu0 %v427
  %1001 = vmatprep.subr.bf16.mxu0 0
  %1002 = vmatpush1.bf16.msra.mxu0 %v426
  %1003 = vmatprep.subr.bf16.mxu0 0
  %1004 = vmatpush1.bf16.msra.mxu0 %v425
  %1005 = vmatprep.subr.bf16.mxu0 0
  %1006 = vmatpush2.bf16.msra.mxu0 0
  %1007 = vmatprep.subr.bf16.mxu0 0
  %1008 = vmatpush2.bf16.msra.mxu0 0
  %1009 = vmatprep.subr.bf16.mxu0 0
  %1010 = vmatpush2.bf16.msra.mxu0 0
  %1011 = vmatprep.subr.bf16.mxu0 0
  %1012 = vmatpush2.bf16.msra.mxu0 0
  %1013 = vmatprep.subr.bf16.mxu0 0
  %1014 = vmatpush2.bf16.msra.mxu0 0
  %1015 = vmatprep.subr.bf16.mxu0 0
  %1016 = vmatpush2.bf16.msra.mxu0 0
  %1017 = vmatprep.subr.bf16.mxu0 0
  %1018 = vmatpush2.bf16.msra.mxu0 0
  %1019 = vmatprep.subr.bf16.mxu0 0
  %1020 = vmatpush2.bf16.msra.mxu0 0
  %1021 = vmatprep.mubr.bf16.mxu0 0
  %1022 = vmatmul.mubr.bf16.gmra.mxu0 %v793
  %v1023 = vpop.f32.mrf.mxu0
  %v1024 = vadd.f32 0.0, %v1023
  %v1025 = vpop.f32.mrf.mxu0
  %v1026 = vpop.f32.mrf.mxu0
  %v1027 = vpop.f32.mrf.mxu0
  %1028 = vdwg.mxu0
  %1029 = vmatprep.subr.bf16.mxu0 0
  %1030 = vmatpush1.bf16.msra.mxu0 %v520
  %1031 = vmatprep.subr.bf16.mxu0 0
  %1032 = vmatpush1.bf16.msra.mxu0 %v519
  %1033 = vmatprep.subr.bf16.mxu0 0
  %1034 = vmatpush1.bf16.msra.mxu0 %v518
  %1035 = vmatprep.subr.bf16.mxu0 0
  %1036 = vmatpush1.bf16.msra.mxu0 %v517
  %1037 = vmatprep.subr.bf16.mxu0 0
  %1038 = vmatpush1.bf16.msra.mxu0 %v516
  %1039 = vmatprep.subr.bf16.mxu0 0
  %1040 = vmatpush1.bf16.msra.mxu0 %v515
  %1041 = vmatprep.subr.bf16.mxu0 0
  %1042 = vmatpush1.bf16.msra.mxu0 %v514
  %1043 = vmatprep.subr.bf16.mxu0 0
  %1044 = vmatpush1.bf16.msra.mxu0 %v513
  %1045 = vmatprep.subr.bf16.mxu0 0
  %1046 = vmatpush2.bf16.msra.mxu0 0
  %1047 = vmatprep.subr.bf16.mxu0 0
  %1048 = vmatpush2.bf16.msra.mxu0 0
  %1049 = vmatprep.subr.bf16.mxu0 0
  %1050 = vmatpush2.bf16.msra.mxu0 0
  %1051 = vmatprep.subr.bf16.mxu0 0
  %1052 = vmatpush2.bf16.msra.mxu0 0
  %1053 = vmatprep.subr.bf16.mxu0 0
  %1054 = vmatpush2.bf16.msra.mxu0 0
  %1055 = vmatprep.subr.bf16.mxu0 0
  %1056 = vmatpush2.bf16.msra.mxu0 0
  %1057 = vmatprep.subr.bf16.mxu0 0
  %1058 = vmatpush2.bf16.msra.mxu0 0
  %1059 = vmatprep.subr.bf16.mxu0 0
  %1060 = vmatpush2.bf16.msra.mxu0 0
  %1061 = vmatprep.mubr.bf16.mxu0 0
  %1062 = vmatmul.mubr.bf16.gmra.mxu0 %v988
  %v1063 = vpop.f32.mrf.mxu0
  %v1064 = vadd.f32 %v1024, %v1063
  %v1065 = vpop.f32.mrf.mxu0
  %v1066 = vpop.f32.mrf.mxu0
  %v1067 = vpop.f32.mrf.mxu0
  %1068 = vdwg.mxu0
  %v1069 = vpack.c.bf16 %v987, %v987
  %1070 = vmatprep.subr.bf16.mxu0 0
  %1071 = vmatpush1.bf16.msra.mxu0 %v626
  %1072 = vmatprep.subr.bf16.mxu0 0
  %1073 = vmatpush1.bf16.msra.mxu0 %v625
  %1074 = vmatprep.subr.bf16.mxu0 0
  %1075 = vmatpush1.bf16.msra.mxu0 %v624
  %1076 = vmatprep.subr.bf16.mxu0 0
  %1077 = vmatpush1.bf16.msra.mxu0 %v623
  %1078 = vmatprep.subr.bf16.mxu0 0
  %1079 = vmatpush1.bf16.msra.mxu0 %v622
  %1080 = vmatprep.subr.bf16.mxu0 0
  %1081 = vmatpush1.bf16.msra.mxu0 %v621
  %1082 = vmatprep.subr.bf16.mxu0 0
  %1083 = vmatpush1.bf16.msra.mxu0 %v620
  %1084 = vmatprep.subr.bf16.mxu0 0
  %1085 = vmatpush1.bf16.msra.mxu0 %v619
  %1086 = vmatprep.subr.bf16.mxu0 0
  %1087 = vmatpush2.bf16.msra.mxu0 0
  %1088 = vmatprep.subr.bf16.mxu0 0
  %1089 = vmatpush2.bf16.msra.mxu0 0
  %1090 = vmatprep.subr.bf16.mxu0 0
  %1091 = vmatpush2.bf16.msra.mxu0 0
  %1092 = vmatprep.subr.bf16.mxu0 0
  %1093 = vmatpush2.bf16.msra.mxu0 0
  %1094 = vmatprep.subr.bf16.mxu0 0
  %1095 = vmatpush2.bf16.msra.mxu0 0
  %1096 = vmatprep.subr.bf16.mxu0 0
  %1097 = vmatpush2.bf16.msra.mxu0 0
  %1098 = vmatprep.subr.bf16.mxu0 0
  %1099 = vmatpush2.bf16.msra.mxu0 0
  %1100 = vmatprep.subr.bf16.mxu0 0
  %1101 = vmatpush2.bf16.msra.mxu0 0
  %1102 = vmatprep.mubr.bf16.mxu0 0
  %1103 = vmatmul.mubr.bf16.gmra.mxu0 %v1069
  %v1104 = vpop.f32.mrf.mxu0
  %v1105 = vadd.f32 0.0, %v1104
  %v1106 = vpop.f32.mrf.mxu0
  %v1107 = vpop.f32.mrf.mxu0
  %v1108 = vpop.f32.mrf.mxu0
  %1109 = vdwg.mxu0
  %v1110 = vadd.f32 %v1064, %v1105
  %v1111 = vadd.f32 %v1110, %v676
  %v1112 = vmax.f32 %v1111, 0.0
  %v1113 = vpack.c.bf16 %v1112, %v1112
  %1114 = vmatprep.subr.bf16.mxu0 0
  %1115 = vmatpush1.bf16.msra.mxu0 %v736
  %1116 = vmatprep.subr.bf16.mxu0 0
  %1117 = vmatpush1.bf16.msra.mxu0 %v735
  %1118 = vmatprep.subr.bf16.mxu0 0
  %1119 = vmatpush1.bf16.msra.mxu0 %v734
  %1120 = vmatprep.subr.bf16.mxu0 0
  %1121 = vmatpush1.bf16.msra.mxu0 %v733
  %1122 = vmatprep.subr.bf16.mxu0 0
  %1123 = vmatpush1.bf16.msra.mxu0 %v732
  %1124 = vmatprep.subr.bf16.mxu0 0
  %1125 = vmatpush1.bf16.msra.mxu0 %v731
  %1126 = vmatprep.subr.bf16.mxu0 0
  %1127 = vmatpush1.bf16.msra.mxu0 %v730
  %1128 = vmatprep.subr.bf16.mxu0 0
  %1129 = vmatpush1.bf16.msra.mxu0 %v729
  %1130 = vmatprep.subr.bf16.mxu0 0
  %1131 = vmatpush2.bf16.msra.mxu0 0
  %1132 = vmatprep.subr.bf16.mxu0 0
  %1133 = vmatpush2.bf16.msra.mxu0 0
  %1134 = vmatprep.subr.bf16.mxu0 0
  %1135 = vmatpush2.bf16.msra.mxu0 0
  %1136 = vmatprep.subr.bf16.mxu0 0
  %1137 = vmatpush2.bf16.msra.mxu0 0
  %1138 = vmatprep.subr.bf16.mxu0 0
  %1139 = vmatpush2.bf16.msra.mxu0 0
  %1140 = vmatprep.subr.bf16.mxu0 0
  %1141 = vmatpush2.bf16.msra.mxu0 0
  %1142 = vmatprep.subr.bf16.mxu0 0
  %1143 = vmatpush2.bf16.msra.mxu0 0
  %1144 = vmatprep.subr.bf16.mxu0 0
  %1145 = vmatpush2.bf16.msra.mxu0 0
  %1146 = vmatprep.mubr.bf16.mxu0 0
  %1147 = vmatmul.mubr.bf16.gmra.mxu0 %v1113
  %v1148 = vpop.f32.mrf.mxu0
  %v1149 = vadd.f32 %v696, %v1148
  %v1150 = vpop.f32.mrf.mxu0
  %v1151 = vpop.f32.mrf.mxu0
  %v1152 = vpop.f32.mrf.mxu0
  %1153 = vdwg.mxu0
  %v1154 = vxor.u32 %v1149, 2147483648
  %v1155 = vmul.f32 %v1154, 1.442695
  %v1156 = vpow.pop %v1155
  %v1157 = vadd.f32 %v1156, 1.0
  %v1158 = vrcp.pop %v1157
  %v1159 = vmul.f32 1.0, %v1158
  %v1161 = vrot.slane %v1159, 7
  %v1163 = vsel %vm958, %v790, %v1161
  %1164 = vst [vmem:[%s8] sm:$0x3] %v1163
  // Predicated region
  $region34: #{model_forward.3} parent=0 // pred_check
    _
  $region35: #{model_forward.3} parent=0 // pred_check_branch
    %1166 = sbr.rel (0) target = $region37
  $region36: #{model_forward.3} parent=0 // pred_region
    _
  $region37: #{model_forward.3} parent=0 // pred_fallthru
    _
  // Predicated region
  $region38: #{model_forward.3} parent=0 // pred_check
    _
  $region39: #{model_forward.3} parent=0 // pred_check_branch
    %1168 = sbr.rel (0) target = $region41
  $region40: #{model_forward.3} parent=0 // pred_region
    _
  $region41: #{model_forward.3} parent=0 // pred_fallthru
    _

// kernel: model_forward.2
$region0: #{model_forward.2}
  #allocation0 [shape = 'u32[]', space=smem, size = 0x4, offset = 0x4, fixed_abs, tag = 'smem constant byte address 0x4 - core index']
  #allocation1 [shape = 'u32[144,128]{1,0:T(1,128)}', space=vmem, size = 0x12000, scoped, tag = 'internal scratch']
  %s0 = inlined_call_operand.vmem [shape: bf16[512,128], index: 0, kind: input, shape index: {}]
  %s1 = inlined_call_operand.vmem [shape: bf16[3,128,128], index: 1, kind: input, shape index: {}]
  %s2 = inlined_call_operand.vmem [shape: f32[1,128], index: 2, kind: input, shape index: {}]
  %s3 = inlined_call_operand.vmem [shape: bf16[3,128,128], index: 3, kind: input, shape index: {}]
  %s4 = inlined_call_operand.vmem [shape: f32[1,128], index: 4, kind: input, shape index: {}]
  %s5 = inlined_call_operand.vmem [shape: f32[32,128], index: 5, kind: output, shape index: {}]
  %s6 = sld [smem:[#allocation0]]
  $region53: #{model_forward.2} parent=0
    _
  %s8 = ssub.s32 1, %s6
  %s9 = scalar_select 0, %s8, %s6
  loop: start=0, step=1, limit=4
  $region2: #{model_forward.2} parent=0 // loop_pre_header
    _
  $region3: #{model_forward.2} parent=0 // loop_header
    %s11 = sphi 0, %s15
    %p12 = scmp.ge.s32.totalorder %s11, 4
    %s21 = sphi 0, %s23
    %s24 = sphi 0, %s21
    %s25 = sphi 0, %s24
    %s41 = sphi 0, %s25
    %s45 = sphi 0, %s45
    %s47 = sphi 0, %s45
    %s48 = sphi 0, %s47
    %s62 = sphi 0, %s48
    %s66 = sphi 0, %s66
    %s68 = sphi 0, %s66
    %s69 = sphi 0, %s68
    %s83 = sphi 0, %s69
    %s87 = sphi 0, %s87
    %s89 = sphi 0, %s87
    %s90 = sphi 0, %s89
    %s104 = sphi 0, %s90
    %s108 = sphi 0, %s108
    %s110 = sphi 0, %s108
    %s111 = sphi 0, %s110
    %s125 = sphi 0, %s111
    %s131 = sphi 0, %s133
    %s134 = sphi 0, %s131
    %s135 = sphi 0, %s134
    %s151 = sphi 0, %s135
  $region4: #{model_forward.2} parent=0 // loop_header_branch
    %14 = sbr.rel (%p12) target = $region8
  $region5: #{model_forward.2} parent=0 // loop_body
    %s16 = ssub.s32 %s11, 1
    %s17 = ssub.s32 %s11, 2
    %s18 = sadd.s32 %s11, 1
    %s19 = ssub.s32 %s11, %s18
    %p20 = scmp.eq.s32.totalorder %s19, 0
    %s22 = sadd.s32 %s21, 1
    %s23 = scalar_select %p20, %s21, %s22
    %p26 = pneg %p20
    %p27 = scmp.eq.s32.totalorder %s11, 1
    %p28 = por %p26, %p27
    %p29 = scmp.ne.s32.totalorder %s21, %s24
    %p30 = scmp.eq.s32.totalorder %s11, 0
    %p31 = por %p29, %p30
    %p32 = scmp.ne.s32.totalorder %s21, %s24
    %p33 = scmp.eq.s32.totalorder %s16, 1
    %p34 = por %p32, %p33
    %p35 = scmp.ne.s32.totalorder %s24, %s25
    %p36 = scmp.eq.s32.totalorder %s16, 0
    %p37 = por %p35, %p36
    %p38 = scmp.ne.s32.totalorder %s24, %s25
    %p39 = scmp.eq.s32.totalorder %s17, 1
    %p40 = por %p38, %p39
    %p42 = scmp.ne.s32.totalorder %s25, %s41
    %p43 = scmp.eq.s32.totalorder %s17, 0
    %p44 = por %p42, %p43
    %s46 = sadd.s32 %s45, 1
    %p49 = scmp.eq.s32.totalorder %s11, 1
    %p50 = scmp.ne.s32.totalorder %s45, %s47
    %p51 = scmp.eq.s32.totalorder %s11, 0
    %p52 = por %p50, %p51
    %p53 = scmp.ne.s32.totalorder %s45, %s47
    %p54 = scmp.eq.s32.totalorder %s16, 1
    %p55 = por %p53, %p54
    %p56 = scmp.ne.s32.totalorder %s47, %s48
    %p57 = scmp.eq.s32.totalorder %s16, 0
    %p58 = por %p56, %p57
    %p59 = scmp.ne.s32.totalorder %s47, %s48
    %p60 = scmp.eq.s32.totalorder %s17, 1
    %p61 = por %p59, %p60
    %p63 = scmp.ne.s32.totalorder %s48, %s62
    %p64 = scmp.eq.s32.totalorder %s17, 0
    %p65 = por %p63, %p64
    %s67 = sadd.s32 %s66, 1
    %p70 = scmp.eq.s32.totalorder %s11, 1
    %p71 = scmp.ne.s32.totalorder %s66, %s68
    %p72 = scmp.eq.s32.totalorder %s11, 0
    %p73 = por %p71, %p72
    %p74 = scmp.ne.s32.totalorder %s66, %s68
    %p75 = scmp.eq.s32.totalorder %s16, 1
    %p76 = por %p74, %p75
    %p77 = scmp.ne.s32.totalorder %s68, %s69
    %p78 = scmp.eq.s32.totalorder %s16, 0
    %p79 = por %p77, %p78
    %p80 = scmp.ne.s32.totalorder %s68, %s69
    %p81 = scmp.eq.s32.totalorder %s17, 1
    %p82 = por %p80, %p81
    %p84 = scmp.ne.s32.totalorder %s69, %s83
    %p85 = scmp.eq.s32.totalorder %s17, 0
    %p86 = por %p84, %p85
    %s88 = sadd.s32 %s87, 1
    %p91 = scmp.eq.s32.totalorder %s11, 1
    %p92 = scmp.ne.s32.totalorder %s87, %s89
    %p93 = scmp.eq.s32.totalorder %s11, 0
    %p94 = por %p92, %p93
    %p95 = scmp.ne.s32.totalorder %s87, %s89
    %p96 = scmp.eq.s32.totalorder %s16, 1
    %p97 = por %p95, %p96
    %p98 = scmp.ne.s32.totalorder %s89, %s90
    %p99 = scmp.eq.s32.totalorder %s16, 0
    %p100 = por %p98, %p99
    %p101 = scmp.ne.s32.totalorder %s89, %s90
    %p102 = scmp.eq.s32.totalorder %s17, 1
    %p103 = por %p101, %p102
    %p105 = scmp.ne.s32.totalorder %s90, %s104
    %p106 = scmp.eq.s32.totalorder %s17, 0
    %p107 = por %p105, %p106
    %s109 = sadd.s32 %s108, 1
    %p112 = scmp.eq.s32.totalorder %s11, 1
    %p113 = scmp.ne.s32.totalorder %s108, %s110
    %p114 = scmp.eq.s32.totalorder %s11, 0
    %p115 = por %p113, %p114
    %p116 = scmp.ne.s32.totalorder %s108, %s110
    %p117 = scmp.eq.s32.totalorder %s16, 1
    %p118 = por %p116, %p117
    %p119 = scmp.ne.s32.totalorder %s110, %s111
    %p120 = scmp.eq.s32.totalorder %s16, 0
    %p121 = por %p119, %p120
    %p122 = scmp.ne.s32.totalorder %s110, %s111
    %p123 = scmp.eq.s32.totalorder %s17, 1
    %p124 = por %p122, %p123
    %p126 = scmp.ne.s32.totalorder %s111, %s125
    %p127 = scmp.eq.s32.totalorder %s17, 0
    %p128 = por %p126, %p127
    %s129 = ssub.s32 %s11, %s18
    %p130 = scmp.eq.s32.totalorder %s129, 0
    %s132 = sadd.s32 %s131, 1
    %s133 = scalar_select %p130, %s131, %s132
    %p136 = pneg %p130
    %p137 = scmp.eq.s32.totalorder %s11, 1
    %p138 = por %p136, %p137
    %p139 = scmp.ne.s32.totalorder %s131, %s134
    %p140 = scmp.eq.s32.totalorder %s11, 0
    %p141 = por %p139, %p140
    %p142 = scmp.ne.s32.totalorder %s131, %s134
    %p143 = scmp.eq.s32.totalorder %s16, 1
    %p144 = por %p142, %p143
    %p145 = scmp.ne.s32.totalorder %s134, %s135
    %p146 = scmp.eq.s32.totalorder %s16, 0
    %p147 = por %p145, %p146
    %p148 = scmp.ne.s32.totalorder %s134, %s135
    %p149 = scmp.eq.s32.totalorder %s17, 1
    %p150 = por %p148, %p149
    %p152 = scmp.ne.s32.totalorder %s135, %s151
    %p153 = scmp.eq.s32.totalorder %s17, 0
    %p154 = por %p152, %p153
    %p155 = scmp.le.s32.totalorder 1, %s11
    %p156 = scmp.lt.s32.totalorder %s11, 3
    %p157 = pnand %p155, %p156
    %p158 = pneg %p157
    // Predicated region
    $region9: #{model_forward.2} parent=5 // pred_check
      _
    $region10: #{model_forward.2} parent=5 // pred_check_branch
      %160 = sbr.rel (%p157) target = $region12
    $region11: #{model_forward.2} parent=5 // pred_region
      %s161 = ssub.s32 %s11, 1
      // Predicated region
      $region13: #{model_forward.2} parent=11 // pred_check
        %p162 = pneg %p58
      $region14: #{model_forward.2} parent=11 // pred_check_branch
        %164 = sbr.rel (%p162) target = $region16
      $region15: #{model_forward.2} parent=11 // pred_region
        _
      $region16: #{model_forward.2} parent=11 // pred_fallthru
        _
      // Predicated region
      $region17: #{model_forward.2} parent=11 // pred_check
        %p165 = pneg %p79
      $region18: #{model_forward.2} parent=11 // pred_check_branch
        %167 = sbr.rel (%p165) target = $region20
      $region19: #{model_forward.2} parent=11 // pred_region
        _
      $region20: #{model_forward.2} parent=11 // pred_fallthru
        _
      // Predicated region
      $region21: #{model_forward.2} parent=11 // pred_check
        %p168 = pneg %p100
      $region22: #{model_forward.2} parent=11 // pred_check_branch
        %170 = sbr.rel (%p168) target = $region24
      $region23: #{model_forward.2} parent=11 // pred_region
        _
      $region24: #{model_forward.2} parent=11 // pred_fallthru
        _
      // Predicated region
      $region25: #{model_forward.2} parent=11 // pred_check
        %p171 = pneg %p121
      $region26: #{model_forward.2} parent=11 // pred_check_branch
        %173 = sbr.rel (%p171) target = $region28
      $region27: #{model_forward.2} parent=11 // pred_region
        _
      $region28: #{model_forward.2} parent=11 // pred_fallthru
        _
    $region12: #{model_forward.2} parent=5 // pred_fallthru
      _
    %p174 = scmp.lt.s32.totalorder %s11, 2
    // Predicated region
    $region29: #{model_forward.2} parent=5 // pred_check
      %p175 = pneg %p174
    $region30: #{model_forward.2} parent=5 // pred_check_branch
      %177 = sbr.rel (%p175) target = $region32
    $region31: #{model_forward.2} parent=5 // pred_region
      // Predicated region
      $region33: #{model_forward.2} parent=31 // pred_check
        %p178 = pneg %p31
      $region34: #{model_forward.2} parent=31 // pred_check_branch
        %180 = sbr.rel (%p178) target = $region36
      $region35: #{model_forward.2} parent=31 // pred_region
        %s181 = smul.u32 32, %s11
        %p182 = scmp.lt.s32.totalorder %s181, 63
        %s183 = scalar_select %p182, %s181, 63
        %s184 = smul.addr %s183, 4
        %s185 = scalar_lea.vmem %s0, %s184
        %s186 = smul.u32 32, %s11
      $region36: #{model_forward.2} parent=31 // pred_fallthru
        _
    $region32: #{model_forward.2} parent=5 // pred_fallthru
      _
    %p187 = scmp.le.s32.totalorder 1, %s11
    %p188 = scmp.lt.s32.totalorder %s11, 3
    %p189 = pnand %p187, %p188
    %p190 = pneg %p189
    // Predicated region
    $region37: #{model_forward.2} parent=5 // pred_check
      _
    $region38: #{model_forward.2} parent=5 // pred_check_branch
      %192 = sbr.rel (%p189) target = $region40
    $region39: #{model_forward.2} parent=5 // pred_region
      %s193 = ssub.s32 %s11, 1
      %s194 = smul.u32 32, %s16
      %p195 = scmp.lt.s32.totalorder %s194, 63
      %s196 = scalar_select %p195, %s194, 63
      %s197 = smul.addr %s196, 4
      %s198 = scalar_lea.vmem %s0, %s197
      %p199 = pneg %p37
      %p200 = pneg %p34
      %p201 = pneg %p58
      %p202 = pneg %p55
      %p203 = pneg %p79
      %p204 = pneg %p76
      %p205 = pneg %p100
      %p206 = pneg %p97
      %p207 = pneg %p121
      %p208 = pneg %p118
      %p209 = pneg %p147
      %p210 = pneg %p144
      %s211 = smul.u32 2, %s16
      %p212 = scmp.lt.s32.totalorder %s211, 3
      %s213 = scalar_select %p212, %s211, 3
      %s214 = smul.addr %s213, 8
      %s215 = scalar_lea.vmem %s5, %s214
      %s216 = smul.u32 32, %s16
      %p217 = scmp.lt.s32.totalorder %s216, 63
      %s218 = scalar_select %p217, %s216, 63
      %s219 = smul.addr %s218, 4
      %s220 = scalar_lea.vmem %s0, %s219
      %s221 = smul.u32 32, %s16
      %s222 = smul.u32 2, %s16
      %p223 = scmp.lt.s32.totalorder %s222, 3
      %s224 = scalar_select %p223, %s222, 3
      %s225 = smul.addr %s224, 8
      %s226 = scalar_lea.vmem %s5, %s225
      %s227 = smul.u32 2, %s16
      %v229 = vld [vmem:[%s220] sm:$0xf]
      %v230 = vld [vmem:[%s220 + $0x4] sm:$0xf]
      %v231 = vld [vmem:[%s220 + $0x8] sm:$0xf]
      %v232 = vld [vmem:[%s220 + $0xc] sm:$0xf]
      %v233 = vld [vmem:[%s220 + $0x10] sm:$0xf]
      %v234 = vld [vmem:[%s220 + $0x14] sm:$0xf]
      %v235 = vld [vmem:[%s220 + $0x18] sm:$0xf]
      %v236 = vld [vmem:[%s220 + $0x1c] sm:$0xf]
      %v237 = vld [vmem:[%s220 + $0x20] sm:$0xf]
      %v238 = vld [vmem:[%s220 + $0x24] sm:$0xf]
      %v239 = vld [vmem:[%s220 + $0x28] sm:$0xf]
      %v240 = vld [vmem:[%s220 + $0x2c] sm:$0xf]
      %v241 = vld [vmem:[%s220 + $0x30] sm:$0xf]
      %v242 = vld [vmem:[%s220 + $0x34] sm:$0xf]
      %v243 = vld [vmem:[%s220 + $0x38] sm:$0xf]
      %v244 = vld [vmem:[%s220 + $0x3c] sm:$0xf]
      %v245 = vld [vmem:[%s220 + $0x40] sm:$0xf]
      %v246 = vld [vmem:[%s220 + $0x44] sm:$0xf]
      %v247 = vld [vmem:[%s220 + $0x48] sm:$0xf]
      %v248 = vld [vmem:[%s220 + $0x4c] sm:$0xf]
      %v249 = vld [vmem:[%s220 + $0x50] sm:$0xf]
      %v250 = vld [vmem:[%s220 + $0x54] sm:$0xf]
      %v251 = vld [vmem:[%s220 + $0x58] sm:$0xf]
      %v252 = vld [vmem:[%s220 + $0x5c] sm:$0xf]
      %v253 = vld [vmem:[%s220 + $0x60] sm:$0xf]
      %v254 = vld [vmem:[%s220 + $0x64] sm:$0xf]
      %v255 = vld [vmem:[%s220 + $0x68] sm:$0xf]
      %v256 = vld [vmem:[%s220 + $0x6c] sm:$0xf]
      %v257 = vld [vmem:[%s220 + $0x70] sm:$0xf]
      %v258 = vld [vmem:[%s220 + $0x74] sm:$0xf]
      %v259 = vld [vmem:[%s220 + $0x78] sm:$0xf]
      %v260 = vld [vmem:[%s220 + $0x7c] sm:$0xf]
      %v261 = vld [vmem:[%s1] sm:$0xf]
      %v262 = vld [vmem:[%s1 + $0x4] sm:$0xf]
      %v263 = vld [vmem:[%s1 + $0x8] sm:$0xf]
      %v264 = vld [vmem:[%s1 + $0xc] sm:$0xf]
      %v265 = vld [vmem:[%s1 + $0x10] sm:$0xf]
      %v266 = vld [vmem:[%s1 + $0x14] sm:$0xf]
      %v267 = vld [vmem:[%s1 + $0x18] sm:$0xf]
      %v268 = vld [vmem:[%s1 + $0x1c] sm:$0xf]
      %v269 = vld [vmem:[%s1 + $0x20] sm:$0xf]
      %v270 = vld [vmem:[%s1 + $0x24] sm:$0xf]
      %v271 = vld [vmem:[%s1 + $0x28] sm:$0xf]
      %v272 = vld [vmem:[%s1 + $0x2c] sm:$0xf]
      %v273 = vld [vmem:[%s1 + $0x30] sm:$0xf]
      %v274 = vld [vmem:[%s1 + $0x34] sm:$0xf]
      %v275 = vld [vmem:[%s1 + $0x38] sm:$0xf]
      %v276 = vld [vmem:[%s1 + $0x3c] sm:$0xf]
      %s277 = scalar_lea.vmem %s1, 64
      %v278 = vld [vmem:[%s277] sm:$0xf]
      %v279 = vld [vmem:[%s277 + $0x4] sm:$0xf]
      %v280 = vld [vmem:[%s277 + $0x8] sm:$0xf]
      %v281 = vld [vmem:[%s277 + $0xc] sm:$0xf]
      %v282 = vld [vmem:[%s277 + $0x10] sm:$0xf]
      %v283 = vld [vmem:[%s277 + $0x14] sm:$0xf]
      %v284 = vld [vmem:[%s277 + $0x18] sm:$0xf]
      %v285 = vld [vmem:[%s277 + $0x1c] sm:$0xf]
      %v286 = vld [vmem:[%s277 + $0x20] sm:$0xf]
      %v287 = vld [vmem:[%s277 + $0x24] sm:$0xf]
      %v288 = vld [vmem:[%s277 + $0x28] sm:$0xf]
      %v289 = vld [vmem:[%s277 + $0x2c] sm:$0xf]
      %v290 = vld [vmem:[%s277 + $0x30] sm:$0xf]
      %v291 = vld [vmem:[%s277 + $0x34] sm:$0xf]
      %v292 = vld [vmem:[%s277 + $0x38] sm:$0xf]
      %v293 = vld [vmem:[%s277 + $0x3c] sm:$0xf]
      %v326 = vunpack.c.l.b16 %v229
      %v327 = vunpack.c.l.b16 %v230
      %v328 = vunpack.c.l.b16 %v231
      %v329 = vunpack.c.l.b16 %v232
      %v330 = vunpack.c.l.b16 %v233
      %v331 = vunpack.c.l.b16 %v234
      %v332 = vunpack.c.l.b16 %v235
      %v333 = vunpack.c.l.b16 %v236
      %v334 = vunpack.c.l.b16 %v237
      %v335 = vunpack.c.l.b16 %v238
      %v336 = vunpack.c.l.b16 %v239
      %v337 = vunpack.c.l.b16 %v240
      %v338 = vunpack.c.l.b16 %v241
      %v339 = vunpack.c.l.b16 %v242
      %v340 = vunpack.c.l.b16 %v243
      %v341 = vunpack.c.l.b16 %v244
      %v342 = vunpack.c.l.b16 %v245
      %v343 = vunpack.c.l.b16 %v246
      %v344 = vunpack.c.l.b16 %v247
      %v345 = vunpack.c.l.b16 %v248
      %v346 = vunpack.c.l.b16 %v249
      %v347 = vunpack.c.l.b16 %v250
      %v348 = vunpack.c.l.b16 %v251
      %v349 = vunpack.c.l.b16 %v252
      %v350 = vunpack.c.l.b16 %v253
      %v351 = vunpack.c.l.b16 %v254
      %v352 = vunpack.c.l.b16 %v255
      %v353 = vunpack.c.l.b16 %v256
      %v354 = vunpack.c.l.b16 %v257
      %v355 = vunpack.c.l.b16 %v258
      %v356 = vunpack.c.l.b16 %v259
      %v357 = vunpack.c.l.b16 %v260
      %v358 = vpack.c.b16 %v327, %v326
      %v359 = vpack.c.b16 %v329, %v328
      %v360 = vpack.c.b16 %v331, %v330
      %v361 = vpack.c.b16 %v333, %v332
      %v362 = vpack.c.b16 %v335, %v334
      %v363 = vpack.c.b16 %v337, %v336
      %v364 = vpack.c.b16 %v339, %v338
      %v365 = vpack.c.b16 %v341, %v340
      %v366 = vpack.c.b16 %v343, %v342
      %v367 = vpack.c.b16 %v345, %v344
      %v368 = vpack.c.b16 %v347, %v346
      %v369 = vpack.c.b16 %v349, %v348
      %v370 = vpack.c.b16 %v351, %v350
      %v371 = vpack.c.b16 %v353, %v352
      %v372 = vpack.c.b16 %v355, %v354
      %v373 = vpack.c.b16 %v357, %v356
      %v406 = vunpack.c.l.b16 %v278
      %v407 = vunpack.c.l.b16 %v279
      %v408 = vunpack.c.l.b16 %v280
      %v409 = vunpack.c.l.b16 %v281
      %v410 = vunpack.c.l.b16 %v282
      %v411 = vunpack.c.l.b16 %v283
      %v412 = vunpack.c.l.b16 %v284
      %v413 = vunpack.c.l.b16 %v285
      %v414 = vunpack.c.l.b16 %v286
      %v415 = vunpack.c.l.b16 %v287
      %v416 = vunpack.c.l.b16 %v288
      %v417 = vunpack.c.l.b16 %v289
      %v418 = vunpack.c.l.b16 %v290
      %v419 = vunpack.c.l.b16 %v291
      %v420 = vunpack.c.l.b16 %v292
      %v421 = vunpack.c.l.b16 %v293
      %v422 = vpack.c.b16 %v407, %v406
      %v423 = vpack.c.b16 %v409, %v408
      %v424 = vpack.c.b16 %v411, %v410
      %v425 = vpack.c.b16 %v413, %v412
      %v426 = vpack.c.b16 %v415, %v414
      %v427 = vpack.c.b16 %v417, %v416
      %v428 = vpack.c.b16 %v419, %v418
      %v429 = vpack.c.b16 %v421, %v420
      %438 = vmatprep.subr.bf16.mxu0 0
      %439 = vmatpush1.bf16.msra.mxu0 %v429
      %440 = vmatprep.subr.bf16.mxu0 0
      %441 = vmatpush1.bf16.msra.mxu0 %v428
      %442 = vmatprep.subr.bf16.mxu0 0
      %443 = vmatpush1.bf16.msra.mxu0 %v427
      %444 = vmatprep.subr.bf16.mxu0 0
      %445 = vmatpush1.bf16.msra.mxu0 %v426
      %446 = vmatprep.subr.bf16.mxu0 0
      %447 = vmatpush1.bf16.msra.mxu0 %v425
      %448 = vmatprep.subr.bf16.mxu0 0
      %449 = vmatpush1.bf16.msra.mxu0 %v424
      %450 = vmatprep.subr.bf16.mxu0 0
      %451 = vmatpush1.bf16.msra.mxu0 %v423
      %452 = vmatprep.subr.bf16.mxu0 0
      %453 = vmatpush1.bf16.msra.mxu0 %v422
      %454 = vmatprep.subr.bf16.mxu0 0
      %455 = vmatpush2.bf16.msra.mxu0 0
      %456 = vmatprep.subr.bf16.mxu0 0
      %457 = vmatpush2.bf16.msra.mxu0 0
      %458 = vmatprep.subr.bf16.mxu0 0
      %459 = vmatpush2.bf16.msra.mxu0 0
      %460 = vmatprep.subr.bf16.mxu0 0
      %461 = vmatpush2.bf16.msra.mxu0 0
      %462 = vmatprep.subr.bf16.mxu0 0
      %463 = vmatpush2.bf16.msra.mxu0 0
      %464 = vmatprep.subr.bf16.mxu0 0
      %465 = vmatpush2.bf16.msra.mxu0 0
      %466 = vmatprep.subr.bf16.mxu0 0
      %467 = vmatpush2.bf16.msra.mxu0 0
      %468 = vmatprep.subr.bf16.mxu0 0
      %469 = vmatpush2.bf16.msra.mxu0 0
      %470 = vmatprep.mubr.bf16.mxu0 0
      %471 = vmatmul.mubr.bf16.gmra.mxu0 %v358
      %v472 = vpop.f32.mrf.mxu0
      %v473 = vadd.f32 0.0, %v472
      %v474 = vpop.f32.mrf.mxu0
      %v475 = vpop.f32.mrf.mxu0
      %v476 = vadd.f32 0.0, %v475
      %v477 = vpop.f32.mrf.mxu0
      %478 = vmatprep.mubr.bf16.mxu0 0
      %479 = vmatmul.mubr.bf16.gmra.mxu0 %v359
      %v480 = vpop.f32.mrf.mxu0
      %v481 = vadd.f32 0.0, %v480
      %v482 = vpop.f32.mrf.mxu0
      %v483 = vpop.f32.mrf.mxu0
      %v484 = vadd.f32 0.0, %v483
      %v485 = vpop.f32.mrf.mxu0
      %486 = vmatprep.mubr.bf16.mxu0 0
      %487 = vmatmul.mubr.bf16.gmra.mxu0 %v360
      %v488 = vpop.f32.mrf.mxu0
      %v489 = vadd.f32 0.0, %v488
      %v490 = vpop.f32.mrf.mxu0
      %v491 = vpop.f32.mrf.mxu0
      %v492 = vadd.f32 0.0, %v491
      %v493 = vpop.f32.mrf.mxu0
      %494 = vmatprep.mubr.bf16.mxu0 0
      %495 = vmatmul.mubr.bf16.gmra.mxu0 %v361
      %v496 = vpop.f32.mrf.mxu0
      %v497 = vadd.f32 0.0, %v496
      %v498 = vpop.f32.mrf.mxu0
      %v499 = vpop.f32.mrf.mxu0
      %v500 = vadd.f32 0.0, %v499
      %v501 = vpop.f32.mrf.mxu0
      %502 = vmatprep.mubr.bf16.mxu0 0
      %503 = vmatmul.mubr.bf16.gmra.mxu0 %v362
      %v504 = vpop.f32.mrf.mxu0
      %v505 = vadd.f32 0.0, %v504
      %v506 = vpop.f32.mrf.mxu0
      %v507 = vpop.f32.mrf.mxu0
      %v508 = vadd.f32 0.0, %v507
      %v509 = vpop.f32.mrf.mxu0
      %510 = vmatprep.mubr.bf16.mxu0 0
      %511 = vmatmul.mubr.bf16.gmra.mxu0 %v363
      %v512 = vpop.f32.mrf.mxu0
      %v513 = vadd.f32 0.0, %v512
      %v514 = vpop.f32.mrf.mxu0
      %v515 = vpop.f32.mrf.mxu0
      %v516 = vadd.f32 0.0, %v515
      %v517 = vpop.f32.mrf.mxu0
      %518 = vmatprep.mubr.bf16.mxu0 0
      %519 = vmatmul.mubr.bf16.gmra.mxu0 %v364
      %v520 = vpop.f32.mrf.mxu0
      %v521 = vadd.f32 0.0, %v520
      %v522 = vpop.f32.mrf.mxu0
      %v523 = vpop.f32.mrf.mxu0
      %v524 = vadd.f32 0.0, %v523
      %v525 = vpop.f32.mrf.mxu0
      %526 = vmatprep.mubr.bf16.mxu0 0
      %527 = vmatmul.mubr.bf16.gmra.mxu0 %v365
      %v528 = vpop.f32.mrf.mxu0
      %v529 = vadd.f32 0.0, %v528
      %v530 = vpop.f32.mrf.mxu0
      %v531 = vpop.f32.mrf.mxu0
      %v532 = vadd.f32 0.0, %v531
      %v533 = vpop.f32.mrf.mxu0
      %534 = vmatprep.mubr.bf16.mxu0 0
      %535 = vmatmul.mubr.bf16.gmra.mxu0 %v366
      %v536 = vpop.f32.mrf.mxu0
      %v537 = vadd.f32 0.0, %v536
      %v538 = vpop.f32.mrf.mxu0
      %v539 = vpop.f32.mrf.mxu0
      %v540 = vadd.f32 0.0, %v539
      %v541 = vpop.f32.mrf.mxu0
      %542 = vmatprep.mubr.bf16.mxu0 0
      %543 = vmatmul.mubr.bf16.gmra.mxu0 %v367
      %v544 = vpop.f32.mrf.mxu0
      %v545 = vadd.f32 0.0, %v544
      %v546 = vpop.f32.mrf.mxu0
      %v547 = vpop.f32.mrf.mxu0
      %v548 = vadd.f32 0.0, %v547
      %v549 = vpop.f32.mrf.mxu0
      %550 = vmatprep.mubr.bf16.mxu0 0
      %551 = vmatmul.mubr.bf16.gmra.mxu0 %v368
      %v552 = vpop.f32.mrf.mxu0
      %v553 = vadd.f32 0.0, %v552
      %v554 = vpop.f32.mrf.mxu0
      %v555 = vpop.f32.mrf.mxu0
      %v556 = vadd.f32 0.0, %v555
      %v557 = vpop.f32.mrf.mxu0
      %558 = vmatprep.mubr.bf16.mxu0 0
      %559 = vmatmul.mubr.bf16.gmra.mxu0 %v369
      %v560 = vpop.f32.mrf.mxu0
      %v561 = vadd.f32 0.0, %v560
      %v562 = vpop.f32.mrf.mxu0
      %v563 = vpop.f32.mrf.mxu0
      %v564 = vadd.f32 0.0, %v563
      %v565 = vpop.f32.mrf.mxu0
      %566 = vmatprep.mubr.bf16.mxu0 0
      %567 = vmatmul.mubr.bf16.gmra.mxu0 %v370
      %v568 = vpop.f32.mrf.mxu0
      %v569 = vadd.f32 0.0, %v568
      %v570 = vpop.f32.mrf.mxu0
      %v571 = vpop.f32.mrf.mxu0
      %v572 = vadd.f32 0.0, %v571
      %v573 = vpop.f32.mrf.mxu0
      %574 = vmatprep.mubr.bf16.mxu0 0
      %575 = vmatmul.mubr.bf16.gmra.mxu0 %v371
      %v576 = vpop.f32.mrf.mxu0
      %v577 = vadd.f32 0.0, %v576
      %v578 = vpop.f32.mrf.mxu0
      %v579 = vpop.f32.mrf.mxu0
      %v580 = vadd.f32 0.0, %v579
      %v581 = vpop.f32.mrf.mxu0
      %582 = vmatprep.mubr.bf16.mxu0 0
      %583 = vmatmul.mubr.bf16.gmra.mxu0 %v372
      %v584 = vpop.f32.mrf.mxu0
      %v585 = vadd.f32 0.0, %v584
      %v586 = vpop.f32.mrf.mxu0
      %v587 = vpop.f32.mrf.mxu0
      %v588 = vadd.f32 0.0, %v587
      %v589 = vpop.f32.mrf.mxu0
      %590 = vmatprep.mubr.bf16.mxu0 0
      %591 = vmatmul.mubr.bf16.gmra.mxu0 %v373
      %v592 = vpop.f32.mrf.mxu0
      %v593 = vadd.f32 0.0, %v592
      %v594 = vpop.f32.mrf.mxu0
      %v595 = vpop.f32.mrf.mxu0
      %v596 = vadd.f32 0.0, %v595
      %v597 = vpop.f32.mrf.mxu0
      %598 = vdwg.mxu0
      %vm631 = vcmask 1046528
      %v632 = vrot.slane %v473, 1
      %v633 = vrot.slane %v476, 1
      %v634 = vsel %vm631, %v632, %v633
      %v635 = vrot.slane %v481, 1
      %v636 = vsel %vm631, %v633, %v635
      %v637 = vrot.slane %v484, 1
      %v638 = vsel %vm631, %v635, %v637
      %v639 = vrot.slane %v489, 1
      %v640 = vsel %vm631, %v637, %v639
      %v641 = vrot.slane %v492, 1
      %v642 = vsel %vm631, %v639, %v641
      %v643 = vrot.slane %v497, 1
      %v644 = vsel %vm631, %v641, %v643
      %v645 = vrot.slane %v500, 1
      %v646 = vsel %vm631, %v643, %v645
      %v647 = vrot.slane %v505, 1
      %v648 = vsel %vm631, %v645, %v647
      %v649 = vrot.slane %v508, 1
      %v650 = vsel %vm631, %v647, %v649
      %v651 = vrot.slane %v513, 1
      %v652 = vsel %vm631, %v649, %v651
      %v653 = vrot.slane %v516, 1
      %v654 = vsel %vm631, %v651, %v653
      %v655 = vrot.slane %v521, 1
      %v656 = vsel %vm631, %v653, %v655
      %v657 = vrot.slane %v524, 1
      %v658 = vsel %vm631, %v655, %v657
      %v659 = vrot.slane %v529, 1
      %v660 = vsel %vm631, %v657, %v659
      %v661 = vrot.slane %v532, 1
      %v662 = vsel %vm631, %v659, %v661
      %v663 = vrot.slane %v537, 1
      %v664 = vsel %vm631, %v661, %v663
      %v665 = vrot.slane %v540, 1
      %v666 = vsel %vm631, %v663, %v665
      %v667 = vrot.slane %v545, 1
      %v668 = vsel %vm631, %v665, %v667
      %v669 = vrot.slane %v548, 1
      %v670 = vsel %vm631, %v667, %v669
      %v671 = vrot.slane %v553, 1
      %v672 = vsel %vm631, %v669, %v671
      %v673 = vrot.slane %v556, 1
      %v674 = vsel %vm631, %v671, %v673
      %v675 = vrot.slane %v561, 1
      %v676 = vsel %vm631, %v673, %v675
      %v677 = vrot.slane %v564, 1
      %v678 = vsel %vm631, %v675, %v677
      %v679 = vrot.slane %v569, 1
      %v680 = vsel %vm631, %v677, %v679
      %v681 = vrot.slane %v572, 1
      %v682 = vsel %vm631, %v679, %v681
      %v683 = vrot.slane %v577, 1
      %v684 = vsel %vm631, %v681, %v683
      %v685 = vrot.slane %v580, 1
      %v686 = vsel %vm631, %v683, %v685
      %v687 = vrot.slane %v585, 1
      %v688 = vsel %vm631, %v685, %v687
      %v689 = vrot.slane %v588, 1
      %v690 = vsel %vm631, %v687, %v689
      %v691 = vrot.slane %v593, 1
      %v692 = vsel %vm631, %v689, %v691
      %v693 = vrot.slane %v596, 1
      %v694 = vsel %vm631, %v691, %v693
      %v727 = vsel %vm631, %v693, 0.0
      %v744 = vunpack.c.l.b16 %v261
      %v745 = vunpack.c.l.b16 %v262
      %v746 = vunpack.c.l.b16 %v263
      %v747 = vunpack.c.l.b16 %v264
      %v748 = vunpack.c.l.b16 %v265
      %v749 = vunpack.c.l.b16 %v266
      %v750 = vunpack.c.l.b16 %v267
      %v751 = vunpack.c.l.b16 %v268
      %v752 = vunpack.c.l.b16 %v269
      %v753 = vunpack.c.l.b16 %v270
      %v754 = vunpack.c.l.b16 %v271
      %v755 = vunpack.c.l.b16 %v272
      %v756 = vunpack.c.l.b16 %v273
      %v757 = vunpack.c.l.b16 %v274
      %v758 = vunpack.c.l.b16 %v275
      %v759 = vunpack.c.l.b16 %v276
      %v760 = vpack.c.b16 %v745, %v744
      %v761 = vpack.c.b16 %v747, %v746
      %v762 = vpack.c.b16 %v749, %v748
      %v763 = vpack.c.b16 %v751, %v750
      %v764 = vpack.c.b16 %v753, %v752
      %v765 = vpack.c.b16 %v755, %v754
      %v766 = vpack.c.b16 %v757, %v756
      %v767 = vpack.c.b16 %v759, %v758
      %776 = vmatprep.subr.bf16.mxu0 0
      %777 = vmatpush1.bf16.msra.mxu0 %v767
      %778 = vmatprep.subr.bf16.mxu0 0
      %779 = vmatpush1.bf16.msra.mxu0 %v766
      %780 = vmatprep.subr.bf16.mxu0 0
      %781 = vmatpush1.bf16.msra.mxu0 %v765
      %782 = vmatprep.subr.bf16.mxu0 0
      %783 = vmatpush1.bf16.msra.mxu0 %v764
      %784 = vmatprep.subr.bf16.mxu0 0
      %785 = vmatpush1.bf16.msra.mxu0 %v763
      %786 = vmatprep.subr.bf16.mxu0 0
      %787 = vmatpush1.bf16.msra.mxu0 %v762
      %788 = vmatprep.subr.bf16.mxu0 0
      %789 = vmatpush1.bf16.msra.mxu0 %v761
      %790 = vmatprep.subr.bf16.mxu0 0
      %791 = vmatpush1.bf16.msra.mxu0 %v760
      %792 = vmatprep.subr.bf16.mxu0 0
      %793 = vmatpush2.bf16.msra.mxu0 0
      %794 = vmatprep.subr.bf16.mxu0 0
      %795 = vmatpush2.bf16.msra.mxu0 0
      %796 = vmatprep.subr.bf16.mxu0 0
      %797 = vmatpush2.bf16.msra.mxu0 0
      %798 = vmatprep.subr.bf16.mxu0 0
      %799 = vmatpush2.bf16.msra.mxu0 0
      %800 = vmatprep.subr.bf16.mxu0 0
      %801 = vmatpush2.bf16.msra.mxu0 0
      %802 = vmatprep.subr.bf16.mxu0 0
      %803 = vmatpush2.bf16.msra.mxu0 0
      %804 = vmatprep.subr.bf16.mxu0 0
      %805 = vmatpush2.bf16.msra.mxu0 0
      %806 = vmatprep.subr.bf16.mxu0 0
      %807 = vmatpush2.bf16.msra.mxu0 0
      %808 = vmatprep.mubr.bf16.mxu0 0
      %809 = vmatmul.mubr.bf16.gmra.mxu0 %v358
      %v810 = vpop.f32.mrf.mxu0
      %v811 = vadd.f32 %v634, %v810
      %v812 = vpop.f32.mrf.mxu0
      %v813 = vpop.f32.mrf.mxu0
      %v814 = vadd.f32 %v636, %v813
      %v815 = vpop.f32.mrf.mxu0
      %816 = vmatprep.mubr.bf16.mxu0 0
      %817 = vmatmul.mubr.bf16.gmra.mxu0 %v359
      %v818 = vpop.f32.mrf.mxu0
      %v819 = vadd.f32 %v638, %v818
      %v820 = vpop.f32.mrf.mxu0
      %v821 = vpop.f32.mrf.mxu0
      %v822 = vadd.f32 %v640, %v821
      %v823 = vpop.f32.mrf.mxu0
      %824 = vmatprep.mubr.bf16.mxu0 0
      %825 = vmatmul.mubr.bf16.gmra.mxu0 %v360
      %v826 = vpop.f32.mrf.mxu0
      %v827 = vadd.f32 %v642, %v826
      %v828 = vpop.f32.mrf.mxu0
      %v829 = vpop.f32.mrf.mxu0
      %v830 = vadd.f32 %v644, %v829
      %v831 = vpop.f32.mrf.mxu0
      %832 = vmatprep.mubr.bf16.mxu0 0
      %833 = vmatmul.mubr.bf16.gmra.mxu0 %v361
      %v834 = vpop.f32.mrf.mxu0
      %v835 = vadd.f32 %v646, %v834
      %v836 = vpop.f32.mrf.mxu0
      %v837 = vpop.f32.mrf.mxu0
      %v838 = vadd.f32 %v648, %v837
      %v839 = vpop.f32.mrf.mxu0
      %840 = vmatprep.mubr.bf16.mxu0 0
      %841 = vmatmul.mubr.bf16.gmra.mxu0 %v362
      %v842 = vpop.f32.mrf.mxu0
      %v843 = vadd.f32 %v650, %v842
      %v844 = vpop.f32.mrf.mxu0
      %v845 = vpop.f32.mrf.mxu0
      %v846 = vadd.f32 %v652, %v845
      %v847 = vpop.f32.mrf.mxu0
      %848 = vmatprep.mubr.bf16.mxu0 0
      %849 = vmatmul.mubr.bf16.gmra.mxu0 %v363
      %v850 = vpop.f32.mrf.mxu0
      %v851 = vadd.f32 %v654, %v850
      %v852 = vpop.f32.mrf.mxu0
      %v853 = vpop.f32.mrf.mxu0
      %v854 = vadd.f32 %v656, %v853
      %v855 = vpop.f32.mrf.mxu0
      %856 = vmatprep.mubr.bf16.mxu0 0
      %857 = vmatmul.mubr.bf16.gmra.mxu0 %v364
      %v858 = vpop.f32.mrf.mxu0
      %v859 = vadd.f32 %v658, %v858
      %v860 = vpop.f32.mrf.mxu0
      %v861 = vpop.f32.mrf.mxu0
      %v862 = vadd.f32 %v660, %v861
      %v863 = vpop.f32.mrf.mxu0
      %864 = vmatprep.mubr.bf16.mxu0 0
      %865 = vmatmul.mubr.bf16.gmra.mxu0 %v365
      %v866 = vpop.f32.mrf.mxu0
      %v867 = vadd.f32 %v662, %v866
      %v868 = vpop.f32.mrf.mxu0
      %v869 = vpop.f32.mrf.mxu0
      %v870 = vadd.f32 %v664, %v869
      %v871 = vpop.f32.mrf.mxu0
      %872 = vmatprep.mubr.bf16.mxu0 0
      %873 = vmatmul.mubr.bf16.gmra.mxu0 %v366
      %v874 = vpop.f32.mrf.mxu0
      %v875 = vadd.f32 %v666, %v874
      %v876 = vpop.f32.mrf.mxu0
      %v877 = vpop.f32.mrf.mxu0
      %v878 = vadd.f32 %v668, %v877
      %v879 = vpop.f32.mrf.mxu0
      %880 = vmatprep.mubr.bf16.mxu0 0
      %881 = vmatmul.mubr.bf16.gmra.mxu0 %v367
      %v882 = vpop.f32.mrf.mxu0
      %v883 = vadd.f32 %v670, %v882
      %v884 = vpop.f32.mrf.mxu0
      %v885 = vpop.f32.mrf.mxu0
      %v886 = vadd.f32 %v672, %v885
      %v887 = vpop.f32.mrf.mxu0
      %888 = vmatprep.mubr.bf16.mxu0 0
      %889 = vmatmul.mubr.bf16.gmra.mxu0 %v368
      %v890 = vpop.f32.mrf.mxu0
      %v891 = vadd.f32 %v674, %v890
      %v892 = vpop.f32.mrf.mxu0
      %v893 = vpop.f32.mrf.mxu0
      %v894 = vadd.f32 %v676, %v893
      %v895 = vpop.f32.mrf.mxu0
      %896 = vmatprep.mubr.bf16.mxu0 0
      %897 = vmatmul.mubr.bf16.gmra.mxu0 %v369
      %v898 = vpop.f32.mrf.mxu0
      %v899 = vadd.f32 %v678, %v898
      %v900 = vpop.f32.mrf.mxu0
      %v901 = vpop.f32.mrf.mxu0
      %v902 = vadd.f32 %v680, %v901
      %v903 = vpop.f32.mrf.mxu0
      %904 = vmatprep.mubr.bf16.mxu0 0
      %905 = vmatmul.mubr.bf16.gmra.mxu0 %v370
      %v906 = vpop.f32.mrf.mxu0
      %v907 = vadd.f32 %v682, %v906
      %v908 = vpop.f32.mrf.mxu0
      %v909 = vpop.f32.mrf.mxu0
      %v910 = vadd.f32 %v684, %v909
      %v911 = vpop.f32.mrf.mxu0
      %912 = vmatprep.mubr.bf16.mxu0 0
      %913 = vmatmul.mubr.bf16.gmra.mxu0 %v371
      %v914 = vpop.f32.mrf.mxu0
      %v915 = vadd.f32 %v686, %v914
      %v916 = vpop.f32.mrf.mxu0
      %v917 = vpop.f32.mrf.mxu0
      %v918 = vadd.f32 %v688, %v917
      %v919 = vpop.f32.mrf.mxu0
      %920 = vmatprep.mubr.bf16.mxu0 0
      %921 = vmatmul.mubr.bf16.gmra.mxu0 %v372
      %v922 = vpop.f32.mrf.mxu0
      %v923 = vadd.f32 %v690, %v922
      %v924 = vpop.f32.mrf.mxu0
      %v925 = vpop.f32.mrf.mxu0
      %v926 = vadd.f32 %v692, %v925
      %v927 = vpop.f32.mrf.mxu0
      %928 = vmatprep.mubr.bf16.mxu0 0
      %929 = vmatmul.mubr.bf16.gmra.mxu0 %v373
      %v930 = vpop.f32.mrf.mxu0
      %v931 = vadd.f32 %v694, %v930
      %v932 = vpop.f32.mrf.mxu0
      %v933 = vpop.f32.mrf.mxu0
      %v934 = vadd.f32 %v727, %v933
      %v935 = vpop.f32.mrf.mxu0
      %936 = vdwg.mxu0
      %s937 = scalar_lea.vmem %s1, 128
      %v938 = vld [vmem:[%s937] sm:$0xf]
      %v939 = vld [vmem:[%s937 + $0x4] sm:$0xf]
      %v940 = vld [vmem:[%s937 + $0x8] sm:$0xf]
      %v941 = vld [vmem:[%s937 + $0xc] sm:$0xf]
      %v942 = vld [vmem:[%s937 + $0x10] sm:$0xf]
      %v943 = vld [vmem:[%s937 + $0x14] sm:$0xf]
      %v944 = vld [vmem:[%s937 + $0x18] sm:$0xf]
      %v945 = vld [vmem:[%s937 + $0x1c] sm:$0xf]
      %v946 = vld [vmem:[%s937 + $0x20] sm:$0xf]
      %v947 = vld [vmem:[%s937 + $0x24] sm:$0xf]
      %v948 = vld [vmem:[%s937 + $0x28] sm:$0xf]
      %v949 = vld [vmem:[%s937 + $0x2c] sm:$0xf]
      %v950 = vld [vmem:[%s937 + $0x30] sm:$0xf]
      %v951 = vld [vmem:[%s937 + $0x34] sm:$0xf]
      %v952 = vld [vmem:[%s937 + $0x38] sm:$0xf]
      %v953 = vld [vmem:[%s937 + $0x3c] sm:$0xf]
      %v970 = vunpack.c.l.b16 %v938
      %v971 = vunpack.c.l.b16 %v939
      %v972 = vunpack.c.l.b16 %v940
      %v973 = vunpack.c.l.b16 %v941
      %v974 = vunpack.c.l.b16 %v942
      %v975 = vunpack.c.l.b16 %v943
      %v976 = vunpack.c.l.b16 %v944
      %v977 = vunpack.c.l.b16 %v945
      %v978 = vunpack.c.l.b16 %v946
      %v979 = vunpack.c.l.b16 %v947
      %v980 = vunpack.c.l.b16 %v948
      %v981 = vunpack.c.l.b16 %v949
      %v982 = vunpack.c.l.b16 %v950
      %v983 = vunpack.c.l.b16 %v951
      %v984 = vunpack.c.l.b16 %v952
      %v985 = vunpack.c.l.b16 %v953
      %v986 = vpack.c.b16 %v971, %v970
      %v987 = vpack.c.b16 %v973, %v972
      %v988 = vpack.c.b16 %v975, %v974
      %v989 = vpack.c.b16 %v977, %v976
      %v990 = vpack.c.b16 %v979, %v978
      %v991 = vpack.c.b16 %v981, %v980
      %v992 = vpack.c.b16 %v983, %v982
      %v993 = vpack.c.b16 %v985, %v984
      %1002 = vmatprep.subr.bf16.mxu0 0
      %1003 = vmatpush1.bf16.msra.mxu0 %v993
      %1004 = vmatprep.subr.bf16.mxu0 0
      %1005 = vmatpush1.bf16.msra.mxu0 %v992
      %1006 = vmatprep.subr.bf16.mxu0 0
      %1007 = vmatpush1.bf16.msra.mxu0 %v991
      %1008 = vmatprep.subr.bf16.mxu0 0
      %1009 = vmatpush1.bf16.msra.mxu0 %v990
      %1010 = vmatprep.subr.bf16.mxu0 0
      %1011 = vmatpush1.bf16.msra.mxu0 %v989
      %1012 = vmatprep.subr.bf16.mxu0 0
      %1013 = vmatpush1.bf16.msra.mxu0 %v988
      %1014 = vmatprep.subr.bf16.mxu0 0
      %1015 = vmatpush1.bf16.msra.mxu0 %v987
      %1016 = vmatprep.subr.bf16.mxu0 0
      %1017 = vmatpush1.bf16.msra.mxu0 %v986
      %1018 = vmatprep.subr.bf16.mxu0 0
      %1019 = vmatpush2.bf16.msra.mxu0 0
      %1020 = vmatprep.subr.bf16.mxu0 0
      %1021 = vmatpush2.bf16.msra.mxu0 0
      %1022 = vmatprep.subr.bf16.mxu0 0
      %1023 = vmatpush2.bf16.msra.mxu0 0
      %1024 = vmatprep.subr.bf16.mxu0 0
      %1025 = vmatpush2.bf16.msra.mxu0 0
      %1026 = vmatprep.subr.bf16.mxu0 0
      %1027 = vmatpush2.bf16.msra.mxu0 0
      %1028 = vmatprep.subr.bf16.mxu0 0
      %1029 = vmatpush2.bf16.msra.mxu0 0
      %1030 = vmatprep.subr.bf16.mxu0 0
      %1031 = vmatpush2.bf16.msra.mxu0 0
      %1032 = vmatprep.subr.bf16.mxu0 0
      %1033 = vmatpush2.bf16.msra.mxu0 0
      %1034 = vmatprep.mubr.bf16.mxu0 0
      %1035 = vmatmul.mubr.bf16.gmra.mxu0 %v358
      %v1036 = vpop.f32.mrf.mxu0
      %v1037 = vadd.f32 0.0, %v1036
      %v1038 = vpop.f32.mrf.mxu0
      %v1039 = vpop.f32.mrf.mxu0
      %v1040 = vadd.f32 0.0, %v1039
      %v1041 = vpop.f32.mrf.mxu0
      %1042 = vmatprep.mubr.bf16.mxu0 0
      %1043 = vmatmul.mubr.bf16.gmra.mxu0 %v359
      %v1044 = vpop.f32.mrf.mxu0
      %v1045 = vadd.f32 0.0, %v1044
      %v1046 = vpop.f32.mrf.mxu0
      %v1047 = vpop.f32.mrf.mxu0
      %v1048 = vadd.f32 0.0, %v1047
      %v1049 = vpop.f32.mrf.mxu0
      %1050 = vmatprep.mubr.bf16.mxu0 0
      %1051 = vmatmul.mubr.bf16.gmra.mxu0 %v360
      %v1052 = vpop.f32.mrf.mxu0
      %v1053 = vadd.f32 0.0, %v1052
      %v1054 = vpop.f32.mrf.mxu0
      %v1055 = vpop.f32.mrf.mxu0
      %v1056 = vadd.f32 0.0, %v1055
      %v1057 = vpop.f32.mrf.mxu0
      %1058 = vmatprep.mubr.bf16.mxu0 0
      %1059 = vmatmul.mubr.bf16.gmra.mxu0 %v361
      %v1060 = vpop.f32.mrf.mxu0
      %v1061 = vadd.f32 0.0, %v1060
      %v1062 = vpop.f32.mrf.mxu0
      %v1063 = vpop.f32.mrf.mxu0
      %v1064 = vadd.f32 0.0, %v1063
      %v1065 = vpop.f32.mrf.mxu0
      %1066 = vmatprep.mubr.bf16.mxu0 0
      %1067 = vmatmul.mubr.bf16.gmra.mxu0 %v362
      %v1068 = vpop.f32.mrf.mxu0
      %v1069 = vadd.f32 0.0, %v1068
      %v1070 = vpop.f32.mrf.mxu0
      %v1071 = vpop.f32.mrf.mxu0
      %v1072 = vadd.f32 0.0, %v1071
      %v1073 = vpop.f32.mrf.mxu0
      %1074 = vmatprep.mubr.bf16.mxu0 0
      %1075 = vmatmul.mubr.bf16.gmra.mxu0 %v363
      %v1076 = vpop.f32.mrf.mxu0
      %v1077 = vadd.f32 0.0, %v1076
      %v1078 = vpop.f32.mrf.mxu0
      %v1079 = vpop.f32.mrf.mxu0
      %v1080 = vadd.f32 0.0, %v1079
      %v1081 = vpop.f32.mrf.mxu0
      %1082 = vmatprep.mubr.bf16.mxu0 0
      %1083 = vmatmul.mubr.bf16.gmra.mxu0 %v364
      %v1084 = vpop.f32.mrf.mxu0
      %v1085 = vadd.f32 0.0, %v1084
      %v1086 = vpop.f32.mrf.mxu0
      %v1087 = vpop.f32.mrf.mxu0
      %v1088 = vadd.f32 0.0, %v1087
      %v1089 = vpop.f32.mrf.mxu0
      %1090 = vmatprep.mubr.bf16.mxu0 0
      %1091 = vmatmul.mubr.bf16.gmra.mxu0 %v365
      %v1092 = vpop.f32.mrf.mxu0
      %v1093 = vadd.f32 0.0, %v1092
      %v1094 = vpop.f32.mrf.mxu0
      %v1095 = vpop.f32.mrf.mxu0
      %v1096 = vadd.f32 0.0, %v1095
      %v1097 = vpop.f32.mrf.mxu0
      %1098 = vmatprep.mubr.bf16.mxu0 0
      %1099 = vmatmul.mubr.bf16.gmra.mxu0 %v366
      %v1100 = vpop.f32.mrf.mxu0
      %v1101 = vadd.f32 0.0, %v1100
      %v1102 = vpop.f32.mrf.mxu0
      %v1103 = vpop.f32.mrf.mxu0
      %v1104 = vadd.f32 0.0, %v1103
      %v1105 = vpop.f32.mrf.mxu0
      %1106 = vmatprep.mubr.bf16.mxu0 0
      %1107 = vmatmul.mubr.bf16.gmra.mxu0 %v367
      %v1108 = vpop.f32.mrf.mxu0
      %v1109 = vadd.f32 0.0, %v1108
      %v1110 = vpop.f32.mrf.mxu0
      %v1111 = vpop.f32.mrf.mxu0
      %v1112 = vadd.f32 0.0, %v1111
      %v1113 = vpop.f32.mrf.mxu0
      %1114 = vmatprep.mubr.bf16.mxu0 0
      %1115 = vmatmul.mubr.bf16.gmra.mxu0 %v368
      %v1116 = vpop.f32.mrf.mxu0
      %v1117 = vadd.f32 0.0, %v1116
      %v1118 = vpop.f32.mrf.mxu0
      %v1119 = vpop.f32.mrf.mxu0
      %v1120 = vadd.f32 0.0, %v1119
      %v1121 = vpop.f32.mrf.mxu0
      %1122 = vmatprep.mubr.bf16.mxu0 0
      %1123 = vmatmul.mubr.bf16.gmra.mxu0 %v369
      %v1124 = vpop.f32.mrf.mxu0
      %v1125 = vadd.f32 0.0, %v1124
      %v1126 = vpop.f32.mrf.mxu0
      %v1127 = vpop.f32.mrf.mxu0
      %v1128 = vadd.f32 0.0, %v1127
      %v1129 = vpop.f32.mrf.mxu0
      %1130 = vmatprep.mubr.bf16.mxu0 0
      %1131 = vmatmul.mubr.bf16.gmra.mxu0 %v370
      %v1132 = vpop.f32.mrf.mxu0
      %v1133 = vadd.f32 0.0, %v1132
      %v1134 = vpop.f32.mrf.mxu0
      %v1135 = vpop.f32.mrf.mxu0
      %v1136 = vadd.f32 0.0, %v1135
      %v1137 = vpop.f32.mrf.mxu0
      %1138 = vmatprep.mubr.bf16.mxu0 0
      %1139 = vmatmul.mubr.bf16.gmra.mxu0 %v371
      %v1140 = vpop.f32.mrf.mxu0
      %v1141 = vadd.f32 0.0, %v1140
      %v1142 = vpop.f32.mrf.mxu0
      %v1143 = vpop.f32.mrf.mxu0
      %v1144 = vadd.f32 0.0, %v1143
      %v1145 = vpop.f32.mrf.mxu0
      %1146 = vmatprep.mubr.bf16.mxu0 0
      %1147 = vmatmul.mubr.bf16.gmra.mxu0 %v372
      %v1148 = vpop.f32.mrf.mxu0
      %v1149 = vadd.f32 0.0, %v1148
      %v1150 = vpop.f32.mrf.mxu0
      %v1151 = vpop.f32.mrf.mxu0
      %v1152 = vadd.f32 0.0, %v1151
      %v1153 = vpop.f32.mrf.mxu0
      %1154 = vmatprep.mubr.bf16.mxu0 0
      %1155 = vmatmul.mubr.bf16.gmra.mxu0 %v373
      %v1156 = vpop.f32.mrf.mxu0
      %v1157 = vadd.f32 0.0, %v1156
      %v1158 = vpop.f32.mrf.mxu0
      %v1159 = vpop.f32.mrf.mxu0
      %v1160 = vadd.f32 0.0, %v1159
      %v1161 = vpop.f32.mrf.mxu0
      %1162 = vdwg.mxu0
      %vm1195 = vcmask 1045504
      %v1196 = vrot.slane %v1037, 2
      %v1197 = vrot.slane %v1040, 2
      %v1198 = vsel %vm1195, %v1196, %v1197
      %v1199 = vrot.slane %v1045, 2
      %v1200 = vsel %vm1195, %v1197, %v1199
      %v1201 = vrot.slane %v1048, 2
      %v1202 = vsel %vm1195, %v1199, %v1201
      %v1203 = vrot.slane %v1053, 2
      %v1204 = vsel %vm1195, %v1201, %v1203
      %v1205 = vrot.slane %v1056, 2
      %v1206 = vsel %vm1195, %v1203, %v1205
      %v1207 = vrot.slane %v1061, 2
      %v1208 = vsel %vm1195, %v1205, %v1207
      %v1209 = vrot.slane %v1064, 2
      %v1210 = vsel %vm1195, %v1207, %v1209
      %v1211 = vrot.slane %v1069, 2
      %v1212 = vsel %vm1195, %v1209, %v1211
      %v1213 = vrot.slane %v1072, 2
      %v1214 = vsel %vm1195, %v1211, %v1213
      %v1215 = vrot.slane %v1077, 2
      %v1216 = vsel %vm1195, %v1213, %v1215
      %v1217 = vrot.slane %v1080, 2
      %v1218 = vsel %vm1195, %v1215, %v1217
      %v1219 = vrot.slane %v1085, 2
      %v1220 = vsel %vm1195, %v1217, %v1219
      %v1221 = vrot.slane %v1088, 2
      %v1222 = vsel %vm1195, %v1219, %v1221
      %v1223 = vrot.slane %v1093, 2
      %v1224 = vsel %vm1195, %v1221, %v1223
      %v1225 = vrot.slane %v1096, 2
      %v1226 = vsel %vm1195, %v1223, %v1225
      %v1227 = vrot.slane %v1101, 2
      %v1228 = vsel %vm1195, %v1225, %v1227
      %v1229 = vrot.slane %v1104, 2
      %v1230 = vsel %vm1195, %v1227, %v1229
      %v1231 = vrot.slane %v1109, 2
      %v1232 = vsel %vm1195, %v1229, %v1231
      %v1233 = vrot.slane %v1112, 2
      %v1234 = vsel %vm1195, %v1231, %v1233
      %v1235 = vrot.slane %v1117, 2
      %v1236 = vsel %vm1195, %v1233, %v1235
      %v1237 = vrot.slane %v1120, 2
      %v1238 = vsel %vm1195, %v1235, %v1237
      %v1239 = vrot.slane %v1125, 2
      %v1240 = vsel %vm1195, %v1237, %v1239
      %v1241 = vrot.slane %v1128, 2
      %v1242 = vsel %vm1195, %v1239, %v1241
      %v1243 = vrot.slane %v1133, 2
      %v1244 = vsel %vm1195, %v1241, %v1243
      %v1245 = vrot.slane %v1136, 2
      %v1246 = vsel %vm1195, %v1243, %v1245
      %v1247 = vrot.slane %v1141, 2
      %v1248 = vsel %vm1195, %v1245, %v1247
      %v1249 = vrot.slane %v1144, 2
      %v1250 = vsel %vm1195, %v1247, %v1249
      %v1251 = vrot.slane %v1149, 2
      %v1252 = vsel %vm1195, %v1249, %v1251
      %v1253 = vrot.slane %v1152, 2
      %v1254 = vsel %vm1195, %v1251, %v1253
      %v1255 = vrot.slane %v1157, 2
      %v1256 = vsel %vm1195, %v1253, %v1255
      %v1257 = vrot.slane %v1160, 2
      %v1258 = vsel %vm1195, %v1255, %v1257
      %v1291 = vsel %vm1195, %v1257, 0.0
      %v1292 = vadd.f32 %v811, %v1198
      %v1293 = vadd.f32 %v814, %v1200
      %v1294 = vadd.f32 %v819, %v1202
      %v1295 = vadd.f32 %v822, %v1204
      %v1296 = vadd.f32 %v827, %v1206
      %v1297 = vadd.f32 %v830, %v1208
      %v1298 = vadd.f32 %v835, %v1210
      %v1299 = vadd.f32 %v838, %v1212
      %v1300 = vadd.f32 %v843, %v1214
      %v1301 = vadd.f32 %v846, %v1216
      %v1302 = vadd.f32 %v851, %v1218
      %v1303 = vadd.f32 %v854, %v1220
      %v1304 = vadd.f32 %v859, %v1222
      %v1305 = vadd.f32 %v862, %v1224
      %v1306 = vadd.f32 %v867, %v1226
      %v1307 = vadd.f32 %v870, %v1228
      %v1308 = vadd.f32 %v875, %v1230
      %v1309 = vadd.f32 %v878, %v1232
      %v1310 = vadd.f32 %v883, %v1234
      %v1311 = vadd.f32 %v886, %v1236
      %v1312 = vadd.f32 %v891, %v1238
      %v1313 = vadd.f32 %v894, %v1240
      %v1314 = vadd.f32 %v899, %v1242
      %v1315 = vadd.f32 %v902, %v1244
      %v1316 = vadd.f32 %v907, %v1246
      %v1317 = vadd.f32 %v910, %v1248
      %v1318 = vadd.f32 %v915, %v1250
      %v1319 = vadd.f32 %v918, %v1252
      %v1320 = vadd.f32 %v923, %v1254
      %v1321 = vadd.f32 %v926, %v1256
      %v1322 = vadd.f32 %v931, %v1258
      %v1323 = vadd.f32 %v934, %v1291
      %v1324 = vld [vmem:[%s2] sm:$0x1]
      %v1326 = vlaneseq
      %v1327 = vshrl.u32 %v1326, 7
      %v1328 = vsub.s32 0, %v1327
      %v1329 = vrot.slane %v1324, %v1328
      %v1331 = vadd.f32 %v1292, %v1329
      %v1332 = vadd.f32 %v1293, %v1329
      %v1333 = vadd.f32 %v1294, %v1329
      %v1334 = vadd.f32 %v1295, %v1329
      %v1335 = vadd.f32 %v1296, %v1329
      %v1336 = vadd.f32 %v1297, %v1329
      %v1337 = vadd.f32 %v1298, %v1329
      %v1338 = vadd.f32 %v1299, %v1329
      %v1339 = vadd.f32 %v1300, %v1329
      %v1340 = vadd.f32 %v1301, %v1329
      %v1341 = vadd.f32 %v1302, %v1329
      %v1342 = vadd.f32 %v1303, %v1329
      %v1343 = vadd.f32 %v1304, %v1329
      %v1344 = vadd.f32 %v1305, %v1329
      %v1345 = vadd.f32 %v1306, %v1329
      %v1346 = vadd.f32 %v1307, %v1329
      %v1347 = vadd.f32 %v1308, %v1329
      %v1348 = vadd.f32 %v1309, %v1329
      %v1349 = vadd.f32 %v1310, %v1329
      %v1350 = vadd.f32 %v1311, %v1329
      %v1351 = vadd.f32 %v1312, %v1329
      %v1352 = vadd.f32 %v1313, %v1329
      %v1353 = vadd.f32 %v1314, %v1329
      %v1354 = vadd.f32 %v1315, %v1329
      %v1355 = vadd.f32 %v1316, %v1329
      %v1356 = vadd.f32 %v1317, %v1329
      %v1357 = vadd.f32 %v1318, %v1329
      %v1358 = vadd.f32 %v1319, %v1329
      %v1359 = vadd.f32 %v1320, %v1329
      %v1360 = vadd.f32 %v1321, %v1329
      %v1361 = vadd.f32 %v1322, %v1329
      %v1362 = vadd.f32 %v1323, %v1329
      %v1363 = vmax.f32 %v1331, 0.0
      %v1364 = vmax.f32 %v1332, 0.0
      %v1365 = vmax.f32 %v1333, 0.0
      %v1366 = vmax.f32 %v1334, 0.0
      %v1367 = vmax.f32 %v1335, 0.0
      %v1368 = vmax.f32 %v1336, 0.0
      %v1369 = vmax.f32 %v1337, 0.0
      %v1370 = vmax.f32 %v1338, 0.0
      %v1371 = vmax.f32 %v1339, 0.0
      %v1372 = vmax.f32 %v1340, 0.0
      %v1373 = vmax.f32 %v1341, 0.0
      %v1374 = vmax.f32 %v1342, 0.0
      %v1375 = vmax.f32 %v1343, 0.0
      %v1376 = vmax.f32 %v1344, 0.0
      %v1377 = vmax.f32 %v1345, 0.0
      %v1378 = vmax.f32 %v1346, 0.0
      %v1379 = vmax.f32 %v1347, 0.0
      %v1380 = vmax.f32 %v1348, 0.0
      %v1381 = vmax.f32 %v1349, 0.0
      %v1382 = vmax.f32 %v1350, 0.0
      %v1383 = vmax.f32 %v1351, 0.0
      %v1384 = vmax.f32 %v1352, 0.0
      %v1385 = vmax.f32 %v1353, 0.0
      %v1386 = vmax.f32 %v1354, 0.0
      %v1387 = vmax.f32 %v1355, 0.0
      %v1388 = vmax.f32 %v1356, 0.0
      %v1389 = vmax.f32 %v1357, 0.0
      %v1390 = vmax.f32 %v1358, 0.0
      %v1391 = vmax.f32 %v1359, 0.0
      %v1392 = vmax.f32 %v1360, 0.0
      %v1393 = vmax.f32 %v1361, 0.0
      %v1394 = vmax.f32 %v1362, 0.0
      %v1427 = vrot.slane %v1363, 1
      %v1428 = vrot.slane %v1364, 1
      %v1429 = vsel %vm631, %v1427, %v1428
      %v1430 = vrot.slane %v1365, 1
      %v1431 = vsel %vm631, %v1428, %v1430
      %v1432 = vrot.slane %v1366, 1
      %v1433 = vsel %vm631, %v1430, %v1432
      %v1434 = vrot.slane %v1367, 1
      %v1435 = vsel %vm631, %v1432, %v1434
      %v1436 = vrot.slane %v1368, 1
      %v1437 = vsel %vm631, %v1434, %v1436
      %v1438 = vrot.slane %v1369, 1
      %v1439 = vsel %vm631, %v1436, %v1438
      %v1440 = vrot.slane %v1370, 1
      %v1441 = vsel %vm631, %v1438, %v1440
      %v1442 = vrot.slane %v1371, 1
      %v1443 = vsel %vm631, %v1440, %v1442
      %v1444 = vrot.slane %v1372, 1
      %v1445 = vsel %vm631, %v1442, %v1444
      %v1446 = vrot.slane %v1373, 1
      %v1447 = vsel %vm631, %v1444, %v1446
      %v1448 = vrot.slane %v1374, 1
      %v1449 = vsel %vm631, %v1446, %v1448
      %v1450 = vrot.slane %v1375, 1
      %v1451 = vsel %vm631, %v1448, %v1450
      %v1452 = vrot.slane %v1376, 1
      %v1453 = vsel %vm631, %v1450, %v1452
      %v1454 = vrot.slane %v1377, 1
      %v1455 = vsel %vm631, %v1452, %v1454
      %v1456 = vrot.slane %v1378, 1
      %v1457 = vsel %vm631, %v1454, %v1456
      %v1458 = vrot.slane %v1379, 1
      %v1459 = vsel %vm631, %v1456, %v1458
      %v1460 = vrot.slane %v1380, 1
      %v1461 = vsel %vm631, %v1458, %v1460
      %v1462 = vrot.slane %v1381, 1
      %v1463 = vsel %vm631, %v1460, %v1462
      %v1464 = vrot.slane %v1382, 1
      %v1465 = vsel %vm631, %v1462, %v1464
      %v1466 = vrot.slane %v1383, 1
      %v1467 = vsel %vm631, %v1464, %v1466
      %v1468 = vrot.slane %v1384, 1
      %v1469 = vsel %vm631, %v1466, %v1468
      %v1470 = vrot.slane %v1385, 1
      %v1471 = vsel %vm631, %v1468, %v1470
      %v1472 = vrot.slane %v1386, 1
      %v1473 = vsel %vm631, %v1470, %v1472
      %v1474 = vrot.slane %v1387, 1
      %v1475 = vsel %vm631, %v1472, %v1474
      %v1476 = vrot.slane %v1388, 1
      %v1477 = vsel %vm631, %v1474, %v1476
      %v1478 = vrot.slane %v1389, 1
      %v1479 = vsel %vm631, %v1476, %v1478
      %v1480 = vrot.slane %v1390, 1
      %v1481 = vsel %vm631, %v1478, %v1480
      %v1482 = vrot.slane %v1391, 1
      %v1483 = vsel %vm631, %v1480, %v1482
      %v1484 = vrot.slane %v1392, 1
      %v1485 = vsel %vm631, %v1482, %v1484
      %v1486 = vrot.slane %v1393, 1
      %v1487 = vsel %vm631, %v1484, %v1486
      %v1488 = vrot.slane %v1394, 1
      %v1489 = vsel %vm631, %v1486, %v1488
      %v1522 = vsel %vm631, %v1488, 0.0
      %v1523 = vmax.f32 %v1363, %v1429
      %v1524 = vmax.f32 %v1364, %v1431
      %v1525 = vmax.f32 %v1365, %v1433
      %v1526 = vmax.f32 %v1366, %v1435
      %v1527 = vmax.f32 %v1367, %v1437
      %v1528 = vmax.f32 %v1368, %v1439
      %v1529 = vmax.f32 %v1369, %v1441
      %v1530 = vmax.f32 %v1370, %v1443
      %v1531 = vmax.f32 %v1371, %v1445
      %v1532 = vmax.f32 %v1372, %v1447
      %v1533 = vmax.f32 %v1373, %v1449
      %v1534 = vmax.f32 %v1374, %v1451
      %v1535 = vmax.f32 %v1375, %v1453
      %v1536 = vmax.f32 %v1376, %v1455
      %v1537 = vmax.f32 %v1377, %v1457
      %v1538 = vmax.f32 %v1378, %v1459
      %v1539 = vmax.f32 %v1379, %v1461
      %v1540 = vmax.f32 %v1380, %v1463
      %v1541 = vmax.f32 %v1381, %v1465
      %v1542 = vmax.f32 %v1382, %v1467
      %v1543 = vmax.f32 %v1383, %v1469
      %v1544 = vmax.f32 %v1384, %v1471
      %v1545 = vmax.f32 %v1385, %v1473
      %v1546 = vmax.f32 %v1386, %v1475
      %v1547 = vmax.f32 %v1387, %v1477
      %v1548 = vmax.f32 %v1388, %v1479
      %v1549 = vmax.f32 %v1389, %v1481
      %v1550 = vmax.f32 %v1390, %v1483
      %v1551 = vmax.f32 %v1391, %v1485
      %v1552 = vmax.f32 %v1392, %v1487
      %v1553 = vmax.f32 %v1393, %v1489
      %v1554 = vmax.f32 %v1394, %v1522
      %v1555 = vpack.c.bf16 %v1524, %v1523
      %v1556 = vpack.c.bf16 %v1526, %v1525
      %v1557 = vpack.c.bf16 %v1528, %v1527
      %v1558 = vpack.c.bf16 %v1530, %v1529
      %v1559 = vpack.c.bf16 %v1532, %v1531
      %v1560 = vpack.c.bf16 %v1534, %v1533
      %v1561 = vpack.c.bf16 %v1536, %v1535
      %v1562 = vpack.c.bf16 %v1538, %v1537
      %v1563 = vpack.c.bf16 %v1540, %v1539
      %v1564 = vpack.c.bf16 %v1542, %v1541
      %v1565 = vpack.c.bf16 %v1544, %v1543
      %v1566 = vpack.c.bf16 %v1546, %v1545
      %v1567 = vpack.c.bf16 %v1548, %v1547
      %v1568 = vpack.c.bf16 %v1550, %v1549
      %v1569 = vpack.c.bf16 %v1552, %v1551
      %v1570 = vpack.c.bf16 %v1554, %v1553
      %v1571 = vld [vmem:[%s3] sm:$0xf]
      %v1572 = vld [vmem:[%s3 + $0x4] sm:$0xf]
      %v1573 = vld [vmem:[%s3 + $0x8] sm:$0xf]
      %v1574 = vld [vmem:[%s3 + $0xc] sm:$0xf]
      %v1575 = vld [vmem:[%s3 + $0x10] sm:$0xf]
      %v1576 = vld [vmem:[%s3 + $0x14] sm:$0xf]
      %v1577 = vld [vmem:[%s3 + $0x18] sm:$0xf]
      %v1578 = vld [vmem:[%s3 + $0x1c] sm:$0xf]
      %v1579 = vld [vmem:[%s3 + $0x20] sm:$0xf]
      %v1580 = vld [vmem:[%s3 + $0x24] sm:$0xf]
      %v1581 = vld [vmem:[%s3 + $0x28] sm:$0xf]
      %v1582 = vld [vmem:[%s3 + $0x2c] sm:$0xf]
      %v1583 = vld [vmem:[%s3 + $0x30] sm:$0xf]
      %v1584 = vld [vmem:[%s3 + $0x34] sm:$0xf]
      %v1585 = vld [vmem:[%s3 + $0x38] sm:$0xf]
      %v1586 = vld [vmem:[%s3 + $0x3c] sm:$0xf]
      %s1587 = scalar_lea.vmem %s3, 64
      %v1588 = vld [vmem:[%s1587] sm:$0xf]
      %v1589 = vld [vmem:[%s1587 + $0x4] sm:$0xf]
      %v1590 = vld [vmem:[%s1587 + $0x8] sm:$0xf]
      %v1591 = vld [vmem:[%s1587 + $0xc] sm:$0xf]
      %v1592 = vld [vmem:[%s1587 + $0x10] sm:$0xf]
      %v1593 = vld [vmem:[%s1587 + $0x14] sm:$0xf]
      %v1594 = vld [vmem:[%s1587 + $0x18] sm:$0xf]
      %v1595 = vld [vmem:[%s1587 + $0x1c] sm:$0xf]
      %v1596 = vld [vmem:[%s1587 + $0x20] sm:$0xf]
      %v1597 = vld [vmem:[%s1587 + $0x24] sm:$0xf]
      %v1598 = vld [vmem:[%s1587 + $0x28] sm:$0xf]
      %v1599 = vld [vmem:[%s1587 + $0x2c] sm:$0xf]
      %v1600 = vld [vmem:[%s1587 + $0x30] sm:$0xf]
      %v1601 = vld [vmem:[%s1587 + $0x34] sm:$0xf]
      %v1602 = vld [vmem:[%s1587 + $0x38] sm:$0xf]
      %v1603 = vld [vmem:[%s1587 + $0x3c] sm:$0xf]
      %v1620 = vunpack.c.l.b16 %v1588
      %v1621 = vunpack.c.l.b16 %v1589
      %v1622 = vunpack.c.l.b16 %v1590
      %v1623 = vunpack.c.l.b16 %v1591
      %v1624 = vunpack.c.l.b16 %v1592
      %v1625 = vunpack.c.l.b16 %v1593
      %v1626 = vunpack.c.l.b16 %v1594
      %v1627 = vunpack.c.l.b16 %v1595
      %v1628 = vunpack.c.l.b16 %v1596
      %v1629 = vunpack.c.l.b16 %v1597
      %v1630 = vunpack.c.l.b16 %v1598
      %v1631 = vunpack.c.l.b16 %v1599
      %v1632 = vunpack.c.l.b16 %v1600
      %v1633 = vunpack.c.l.b16 %v1601
      %v1634 = vunpack.c.l.b16 %v1602
      %v1635 = vunpack.c.l.b16 %v1603
      %v1636 = vpack.c.b16 %v1621, %v1620
      %v1637 = vpack.c.b16 %v1623, %v1622
      %v1638 = vpack.c.b16 %v1625, %v1624
      %v1639 = vpack.c.b16 %v1627, %v1626
      %v1640 = vpack.c.b16 %v1629, %v1628
      %v1641 = vpack.c.b16 %v1631, %v1630
      %v1642 = vpack.c.b16 %v1633, %v1632
      %v1643 = vpack.c.b16 %v1635, %v1634
      %1652 = vmatprep.subr.bf16.mxu0 0
      %1653 = vmatpush1.bf16.msra.mxu0 %v1643
      %1654 = vmatprep.subr.bf16.mxu0 0
      %1655 = vmatpush1.bf16.msra.mxu0 %v1642
      %1656 = vmatprep.subr.bf16.mxu0 0
      %1657 = vmatpush1.bf16.msra.mxu0 %v1641
      %1658 = vmatprep.subr.bf16.mxu0 0
      %1659 = vmatpush1.bf16.msra.mxu0 %v1640
      %1660 = vmatprep.subr.bf16.mxu0 0
      %1661 = vmatpush1.bf16.msra.mxu0 %v1639
      %1662 = vmatprep.subr.bf16.mxu0 0
      %1663 = vmatpush1.bf16.msra.mxu0 %v1638
      %1664 = vmatprep.subr.bf16.mxu0 0
      %1665 = vmatpush1.bf16.msra.mxu0 %v1637
      %1666 = vmatprep.subr.bf16.mxu0 0
      %1667 = vmatpush1.bf16.msra.mxu0 %v1636
      %1668 = vmatprep.subr.bf16.mxu0 0
      %1669 = vmatpush2.bf16.msra.mxu0 0
      %1670 = vmatprep.subr.bf16.mxu0 0
      %1671 = vmatpush2.bf16.msra.mxu0 0
      %1672 = vmatprep.subr.bf16.mxu0 0
      %1673 = vmatpush2.bf16.msra.mxu0 0
      %1674 = vmatprep.subr.bf16.mxu0 0
      %1675 = vmatpush2.bf16.msra.mxu0 0
      %1676 = vmatprep.subr.bf16.mxu0 0
      %1677 = vmatpush2.bf16.msra.mxu0 0
      %1678 = vmatprep.subr.bf16.mxu0 0
      %1679 = vmatpush2.bf16.msra.mxu0 0
      %1680 = vmatprep.subr.bf16.mxu0 0
      %1681 = vmatpush2.bf16.msra.mxu0 0
      %1682 = vmatprep.subr.bf16.mxu0 0
      %1683 = vmatpush2.bf16.msra.mxu0 0
      %1684 = vmatprep.mubr.bf16.mxu0 0
      %1685 = vmatmul.mubr.bf16.gmra.mxu0 %v1555
      %v1686 = vpop.f32.mrf.mxu0
      %v1687 = vadd.f32 0.0, %v1686
      %v1688 = vpop.f32.mrf.mxu0
      %v1689 = vpop.f32.mrf.mxu0
      %v1690 = vadd.f32 0.0, %v1689
      %v1691 = vpop.f32.mrf.mxu0
      %1692 = vmatprep.mubr.bf16.mxu0 0
      %1693 = vmatmul.mubr.bf16.gmra.mxu0 %v1556
      %v1694 = vpop.f32.mrf.mxu0
      %v1695 = vadd.f32 0.0, %v1694
      %v1696 = vpop.f32.mrf.mxu0
      %v1697 = vpop.f32.mrf.mxu0
      %v1698 = vadd.f32 0.0, %v1697
      %v1699 = vpop.f32.mrf.mxu0
      %1700 = vmatprep.mubr.bf16.mxu0 0
      %1701 = vmatmul.mubr.bf16.gmra.mxu0 %v1557
      %v1702 = vpop.f32.mrf.mxu0
      %v1703 = vadd.f32 0.0, %v1702
      %v1704 = vpop.f32.mrf.mxu0
      %v1705 = vpop.f32.mrf.mxu0
      %v1706 = vadd.f32 0.0, %v1705
      %v1707 = vpop.f32.mrf.mxu0
      %1708 = vmatprep.mubr.bf16.mxu0 0
      %1709 = vmatmul.mubr.bf16.gmra.mxu0 %v1558
      %v1710 = vpop.f32.mrf.mxu0
      %v1711 = vadd.f32 0.0, %v1710
      %v1712 = vpop.f32.mrf.mxu0
      %v1713 = vpop.f32.mrf.mxu0
      %v1714 = vadd.f32 0.0, %v1713
      %v1715 = vpop.f32.mrf.mxu0
      %1716 = vmatprep.mubr.bf16.mxu0 0
      %1717 = vmatmul.mubr.bf16.gmra.mxu0 %v1559
      %v1718 = vpop.f32.mrf.mxu0
      %v1719 = vadd.f32 0.0, %v1718
      %v1720 = vpop.f32.mrf.mxu0
      %v1721 = vpop.f32.mrf.mxu0
      %v1722 = vadd.f32 0.0, %v1721
      %v1723 = vpop.f32.mrf.mxu0
      %1724 = vmatprep.mubr.bf16.mxu0 0
      %1725 = vmatmul.mubr.bf16.gmra.mxu0 %v1560
      %v1726 = vpop.f32.mrf.mxu0
      %v1727 = vadd.f32 0.0, %v1726
      %v1728 = vpop.f32.mrf.mxu0
      %v1729 = vpop.f32.mrf.mxu0
      %v1730 = vadd.f32 0.0, %v1729
      %v1731 = vpop.f32.mrf.mxu0
      %1732 = vmatprep.mubr.bf16.mxu0 0
      %1733 = vmatmul.mubr.bf16.gmra.mxu0 %v1561
      %v1734 = vpop.f32.mrf.mxu0
      %v1735 = vadd.f32 0.0, %v1734
      %v1736 = vpop.f32.mrf.mxu0
      %v1737 = vpop.f32.mrf.mxu0
      %v1738 = vadd.f32 0.0, %v1737
      %v1739 = vpop.f32.mrf.mxu0
      %1740 = vmatprep.mubr.bf16.mxu0 0
      %1741 = vmatmul.mubr.bf16.gmra.mxu0 %v1562
      %v1742 = vpop.f32.mrf.mxu0
      %v1743 = vadd.f32 0.0, %v1742
      %v1744 = vpop.f32.mrf.mxu0
      %v1745 = vpop.f32.mrf.mxu0
      %v1746 = vadd.f32 0.0, %v1745
      %v1747 = vpop.f32.mrf.mxu0
      %1748 = vmatprep.mubr.bf16.mxu0 0
      %1749 = vmatmul.mubr.bf16.gmra.mxu0 %v1563
      %v1750 = vpop.f32.mrf.mxu0
      %v1751 = vadd.f32 0.0, %v1750
      %v1752 = vpop.f32.mrf.mxu0
      %v1753 = vpop.f32.mrf.mxu0
      %v1754 = vadd.f32 0.0, %v1753
      %v1755 = vpop.f32.mrf.mxu0
      %1756 = vmatprep.mubr.bf16.mxu0 0
      %1757 = vmatmul.mubr.bf16.gmra.mxu0 %v1564
      %v1758 = vpop.f32.mrf.mxu0
      %v1759 = vadd.f32 0.0, %v1758
      %v1760 = vpop.f32.mrf.mxu0
      %v1761 = vpop.f32.mrf.mxu0
      %v1762 = vadd.f32 0.0, %v1761
      %v1763 = vpop.f32.mrf.mxu0
      %1764 = vmatprep.mubr.bf16.mxu0 0
      %1765 = vmatmul.mubr.bf16.gmra.mxu0 %v1565
      %v1766 = vpop.f32.mrf.mxu0
      %v1767 = vadd.f32 0.0, %v1766
      %v1768 = vpop.f32.mrf.mxu0
      %v1769 = vpop.f32.mrf.mxu0
      %v1770 = vadd.f32 0.0, %v1769
      %v1771 = vpop.f32.mrf.mxu0
      %1772 = vmatprep.mubr.bf16.mxu0 0
      %1773 = vmatmul.mubr.bf16.gmra.mxu0 %v1566
      %v1774 = vpop.f32.mrf.mxu0
      %v1775 = vadd.f32 0.0, %v1774
      %v1776 = vpop.f32.mrf.mxu0
      %v1777 = vpop.f32.mrf.mxu0
      %v1778 = vadd.f32 0.0, %v1777
      %v1779 = vpop.f32.mrf.mxu0
      %1780 = vmatprep.mubr.bf16.mxu0 0
      %1781 = vmatmul.mubr.bf16.gmra.mxu0 %v1567
      %v1782 = vpop.f32.mrf.mxu0
      %v1783 = vadd.f32 0.0, %v1782
      %v1784 = vpop.f32.mrf.mxu0
      %v1785 = vpop.f32.mrf.mxu0
      %v1786 = vadd.f32 0.0, %v1785
      %v1787 = vpop.f32.mrf.mxu0
      %1788 = vmatprep.mubr.bf16.mxu0 0
      %1789 = vmatmul.mubr.bf16.gmra.mxu0 %v1568
      %v1790 = vpop.f32.mrf.mxu0
      %v1791 = vadd.f32 0.0, %v1790
      %v1792 = vpop.f32.mrf.mxu0
      %v1793 = vpop.f32.mrf.mxu0
      %v1794 = vadd.f32 0.0, %v1793
      %v1795 = vpop.f32.mrf.mxu0
      %1796 = vmatprep.mubr.bf16.mxu0 0
      %1797 = vmatmul.mubr.bf16.gmra.mxu0 %v1569
      %v1798 = vpop.f32.mrf.mxu0
      %v1799 = vadd.f32 0.0, %v1798
      %v1800 = vpop.f32.mrf.mxu0
      %v1801 = vpop.f32.mrf.mxu0
      %v1802 = vadd.f32 0.0, %v1801
      %v1803 = vpop.f32.mrf.mxu0
      %1804 = vmatprep.mubr.bf16.mxu0 0
      %1805 = vmatmul.mubr.bf16.gmra.mxu0 %v1570
      %v1806 = vpop.f32.mrf.mxu0
      %v1807 = vadd.f32 0.0, %v1806
      %v1808 = vpop.f32.mrf.mxu0
      %v1809 = vpop.f32.mrf.mxu0
      %v1810 = vadd.f32 0.0, %v1809
      %v1811 = vpop.f32.mrf.mxu0
      %1812 = vdwg.mxu0
      %v1845 = vrot.slane %v1687, 2
      %v1846 = vrot.slane %v1690, 2
      %v1847 = vsel %vm1195, %v1845, %v1846
      %v1848 = vrot.slane %v1695, 2
      %v1849 = vsel %vm1195, %v1846, %v1848
      %v1850 = vrot.slane %v1698, 2
      %v1851 = vsel %vm1195, %v1848, %v1850
      %v1852 = vrot.slane %v1703, 2
      %v1853 = vsel %vm1195, %v1850, %v1852
      %v1854 = vrot.slane %v1706, 2
      %v1855 = vsel %vm1195, %v1852, %v1854
      %v1856 = vrot.slane %v1711, 2
      %v1857 = vsel %vm1195, %v1854, %v1856
      %v1858 = vrot.slane %v1714, 2
      %v1859 = vsel %vm1195, %v1856, %v1858
      %v1860 = vrot.slane %v1719, 2
      %v1861 = vsel %vm1195, %v1858, %v1860
      %v1862 = vrot.slane %v1722, 2
      %v1863 = vsel %vm1195, %v1860, %v1862
      %v1864 = vrot.slane %v1727, 2
      %v1865 = vsel %vm1195, %v1862, %v1864
      %v1866 = vrot.slane %v1730, 2
      %v1867 = vsel %vm1195, %v1864, %v1866
      %v1868 = vrot.slane %v1735, 2
      %v1869 = vsel %vm1195, %v1866, %v1868
      %v1870 = vrot.slane %v1738, 2
      %v1871 = vsel %vm1195, %v1868, %v1870
      %v1872 = vrot.slane %v1743, 2
      %v1873 = vsel %vm1195, %v1870, %v1872
      %v1874 = vrot.slane %v1746, 2
      %v1875 = vsel %vm1195, %v1872, %v1874
      %v1876 = vrot.slane %v1751, 2
      %v1877 = vsel %vm1195, %v1874, %v1876
      %v1878 = vrot.slane %v1754, 2
      %v1879 = vsel %vm1195, %v1876, %v1878
      %v1880 = vrot.slane %v1759, 2
      %v1881 = vsel %vm1195, %v1878, %v1880
      %v1882 = vrot.slane %v1762, 2
      %v1883 = vsel %vm1195, %v1880, %v1882
      %v1884 = vrot.slane %v1767, 2
      %v1885 = vsel %vm1195, %v1882, %v1884
      %v1886 = vrot.slane %v1770, 2
      %v1887 = vsel %vm1195, %v1884, %v1886
      %v1888 = vrot.slane %v1775, 2
      %v1889 = vsel %vm1195, %v1886, %v1888
      %v1890 = vrot.slane %v1778, 2
      %v1891 = vsel %vm1195, %v1888, %v1890
      %v1892 = vrot.slane %v1783, 2
      %v1893 = vsel %vm1195, %v1890, %v1892
      %v1894 = vrot.slane %v1786, 2
      %v1895 = vsel %vm1195, %v1892, %v1894
      %v1896 = vrot.slane %v1791, 2
      %v1897 = vsel %vm1195, %v1894, %v1896
      %v1898 = vrot.slane %v1794, 2
      %v1899 = vsel %vm1195, %v1896, %v1898
      %v1900 = vrot.slane %v1799, 2
      %v1901 = vsel %vm1195, %v1898, %v1900
      %v1902 = vrot.slane %v1802, 2
      %v1903 = vsel %vm1195, %v1900, %v1902
      %v1904 = vrot.slane %v1807, 2
      %v1905 = vsel %vm1195, %v1902, %v1904
      %v1906 = vrot.slane %v1810, 2
      %v1907 = vsel %vm1195, %v1904, %v1906
      %v1940 = vsel %vm1195, %v1906, 0.0
      %v1957 = vunpack.c.l.b16 %v1571
      %v1958 = vunpack.c.l.b16 %v1572
      %v1959 = vunpack.c.l.b16 %v1573
      %v1960 = vunpack.c.l.b16 %v1574
      %v1961 = vunpack.c.l.b16 %v1575
      %v1962 = vunpack.c.l.b16 %v1576
      %v1963 = vunpack.c.l.b16 %v1577
      %v1964 = vunpack.c.l.b16 %v1578
      %v1965 = vunpack.c.l.b16 %v1579
      %v1966 = vunpack.c.l.b16 %v1580
      %v1967 = vunpack.c.l.b16 %v1581
      %v1968 = vunpack.c.l.b16 %v1582
      %v1969 = vunpack.c.l.b16 %v1583
      %v1970 = vunpack.c.l.b16 %v1584
      %v1971 = vunpack.c.l.b16 %v1585
      %v1972 = vunpack.c.l.b16 %v1586
      %v1973 = vpack.c.b16 %v1958, %v1957
      %v1974 = vpack.c.b16 %v1960, %v1959
      %v1975 = vpack.c.b16 %v1962, %v1961
      %v1976 = vpack.c.b16 %v1964, %v1963
      %v1977 = vpack.c.b16 %v1966, %v1965
      %v1978 = vpack.c.b16 %v1968, %v1967
      %v1979 = vpack.c.b16 %v1970, %v1969
      %v1980 = vpack.c.b16 %v1972, %v1971
      %1989 = vmatprep.subr.bf16.mxu0 0
      %1990 = vmatpush1.bf16.msra.mxu0 %v1980
      %1991 = vmatprep.subr.bf16.mxu0 0
      %1992 = vmatpush1.bf16.msra.mxu0 %v1979
      %1993 = vmatprep.subr.bf16.mxu0 0
      %1994 = vmatpush1.bf16.msra.mxu0 %v1978
      %1995 = vmatprep.subr.bf16.mxu0 0
      %1996 = vmatpush1.bf16.msra.mxu0 %v1977
      %1997 = vmatprep.subr.bf16.mxu0 0
      %1998 = vmatpush1.bf16.msra.mxu0 %v1976
      %1999 = vmatprep.subr.bf16.mxu0 0
      %2000 = vmatpush1.bf16.msra.mxu0 %v1975
      %2001 = vmatprep.subr.bf16.mxu0 0
      %2002 = vmatpush1.bf16.msra.mxu0 %v1974
      %2003 = vmatprep.subr.bf16.mxu0 0
      %2004 = vmatpush1.bf16.msra.mxu0 %v1973
      %2005 = vmatprep.subr.bf16.mxu0 0
      %2006 = vmatpush2.bf16.msra.mxu0 0
      %2007 = vmatprep.subr.bf16.mxu0 0
      %2008 = vmatpush2.bf16.msra.mxu0 0
      %2009 = vmatprep.subr.bf16.mxu0 0
      %2010 = vmatpush2.bf16.msra.mxu0 0
      %2011 = vmatprep.subr.bf16.mxu0 0
      %2012 = vmatpush2.bf16.msra.mxu0 0
      %2013 = vmatprep.subr.bf16.mxu0 0
      %2014 = vmatpush2.bf16.msra.mxu0 0
      %2015 = vmatprep.subr.bf16.mxu0 0
      %2016 = vmatpush2.bf16.msra.mxu0 0
      %2017 = vmatprep.subr.bf16.mxu0 0
      %2018 = vmatpush2.bf16.msra.mxu0 0
      %2019 = vmatprep.subr.bf16.mxu0 0
      %2020 = vmatpush2.bf16.msra.mxu0 0
      %2021 = vmatprep.mubr.bf16.mxu0 0
      %2022 = vmatmul.mubr.bf16.gmra.mxu0 %v1555
      %v2023 = vpop.f32.mrf.mxu0
      %v2024 = vadd.f32 %v1847, %v2023
      %v2025 = vpop.f32.mrf.mxu0
      %v2026 = vpop.f32.mrf.mxu0
      %v2027 = vadd.f32 %v1849, %v2026
      %v2028 = vpop.f32.mrf.mxu0
      %2029 = vmatprep.mubr.bf16.mxu0 0
      %2030 = vmatmul.mubr.bf16.gmra.mxu0 %v1556
      %v2031 = vpop.f32.mrf.mxu0
      %v2032 = vadd.f32 %v1851, %v2031
      %v2033 = vpop.f32.mrf.mxu0
      %v2034 = vpop.f32.mrf.mxu0
      %v2035 = vadd.f32 %v1853, %v2034
      %v2036 = vpop.f32.mrf.mxu0
      %2037 = vmatprep.mubr.bf16.mxu0 0
      %2038 = vmatmul.mubr.bf16.gmra.mxu0 %v1557
      %v2039 = vpop.f32.mrf.mxu0
      %v2040 = vadd.f32 %v1855, %v2039
      %v2041 = vpop.f32.mrf.mxu0
      %v2042 = vpop.f32.mrf.mxu0
      %v2043 = vadd.f32 %v1857, %v2042
      %v2044 = vpop.f32.mrf.mxu0
      %2045 = vmatprep.mubr.bf16.mxu0 0
      %2046 = vmatmul.mubr.bf16.gmra.mxu0 %v1558
      %v2047 = vpop.f32.mrf.mxu0
      %v2048 = vadd.f32 %v1859, %v2047
      %v2049 = vpop.f32.mrf.mxu0
      %v2050 = vpop.f32.mrf.mxu0
      %v2051 = vadd.f32 %v1861, %v2050
      %v2052 = vpop.f32.mrf.mxu0
      %2053 = vmatprep.mubr.bf16.mxu0 0
      %2054 = vmatmul.mubr.bf16.gmra.mxu0 %v1559
      %v2055 = vpop.f32.mrf.mxu0
      %v2056 = vadd.f32 %v1863, %v2055
      %v2057 = vpop.f32.mrf.mxu0
      %v2058 = vpop.f32.mrf.mxu0
      %v2059 = vadd.f32 %v1865, %v2058
      %v2060 = vpop.f32.mrf.mxu0
      %2061 = vmatprep.mubr.bf16.mxu0 0
      %2062 = vmatmul.mubr.bf16.gmra.mxu0 %v1560
      %v2063 = vpop.f32.mrf.mxu0
      %v2064 = vadd.f32 %v1867, %v2063
      %v2065 = vpop.f32.mrf.mxu0
      %v2066 = vpop.f32.mrf.mxu0
      %v2067 = vadd.f32 %v1869, %v2066
      %v2068 = vpop.f32.mrf.mxu0
      %2069 = vmatprep.mubr.bf16.mxu0 0
      %2070 = vmatmul.mubr.bf16.gmra.mxu0 %v1561
      %v2071 = vpop.f32.mrf.mxu0
      %v2072 = vadd.f32 %v1871, %v2071
      %v2073 = vpop.f32.mrf.mxu0
      %v2074 = vpop.f32.mrf.mxu0
      %v2075 = vadd.f32 %v1873, %v2074
      %v2076 = vpop.f32.mrf.mxu0
      %2077 = vmatprep.mubr.bf16.mxu0 0
      %2078 = vmatmul.mubr.bf16.gmra.mxu0 %v1562
      %v2079 = vpop.f32.mrf.mxu0
      %v2080 = vadd.f32 %v1875, %v2079
      %v2081 = vpop.f32.mrf.mxu0
      %v2082 = vpop.f32.mrf.mxu0
      %v2083 = vadd.f32 %v1877, %v2082
      %v2084 = vpop.f32.mrf.mxu0
      %2085 = vmatprep.mubr.bf16.mxu0 0
      %2086 = vmatmul.mubr.bf16.gmra.mxu0 %v1563
      %v2087 = vpop.f32.mrf.mxu0
      %v2088 = vadd.f32 %v1879, %v2087
      %v2089 = vpop.f32.mrf.mxu0
      %v2090 = vpop.f32.mrf.mxu0
      %v2091 = vadd.f32 %v1881, %v2090
      %v2092 = vpop.f32.mrf.mxu0
      %2093 = vmatprep.mubr.bf16.mxu0 0
      %2094 = vmatmul.mubr.bf16.gmra.mxu0 %v1564
      %v2095 = vpop.f32.mrf.mxu0
      %v2096 = vadd.f32 %v1883, %v2095
      %v2097 = vpop.f32.mrf.mxu0
      %v2098 = vpop.f32.mrf.mxu0
      %v2099 = vadd.f32 %v1885, %v2098
      %v2100 = vpop.f32.mrf.mxu0
      %2101 = vmatprep.mubr.bf16.mxu0 0
      %2102 = vmatmul.mubr.bf16.gmra.mxu0 %v1565
      %v2103 = vpop.f32.mrf.mxu0
      %v2104 = vadd.f32 %v1887, %v2103
      %v2105 = vpop.f32.mrf.mxu0
      %v2106 = vpop.f32.mrf.mxu0
      %v2107 = vadd.f32 %v1889, %v2106
      %v2108 = vpop.f32.mrf.mxu0
      %2109 = vmatprep.mubr.bf16.mxu0 0
      %2110 = vmatmul.mubr.bf16.gmra.mxu0 %v1566
      %v2111 = vpop.f32.mrf.mxu0
      %v2112 = vadd.f32 %v1891, %v2111
      %v2113 = vpop.f32.mrf.mxu0
      %v2114 = vpop.f32.mrf.mxu0
      %v2115 = vadd.f32 %v1893, %v2114
      %v2116 = vpop.f32.mrf.mxu0
      %2117 = vmatprep.mubr.bf16.mxu0 0
      %2118 = vmatmul.mubr.bf16.gmra.mxu0 %v1567
      %v2119 = vpop.f32.mrf.mxu0
      %v2120 = vadd.f32 %v1895, %v2119
      %v2121 = vpop.f32.mrf.mxu0
      %v2122 = vpop.f32.mrf.mxu0
      %v2123 = vadd.f32 %v1897, %v2122
      %v2124 = vpop.f32.mrf.mxu0
      %2125 = vmatprep.mubr.bf16.mxu0 0
      %2126 = vmatmul.mubr.bf16.gmra.mxu0 %v1568
      %v2127 = vpop.f32.mrf.mxu0
      %v2128 = vadd.f32 %v1899, %v2127
      %v2129 = vpop.f32.mrf.mxu0
      %v2130 = vpop.f32.mrf.mxu0
      %v2131 = vadd.f32 %v1901, %v2130
      %v2132 = vpop.f32.mrf.mxu0
      %2133 = vmatprep.mubr.bf16.mxu0 0
      %2134 = vmatmul.mubr.bf16.gmra.mxu0 %v1569
      %v2135 = vpop.f32.mrf.mxu0
      %v2136 = vadd.f32 %v1903, %v2135
      %v2137 = vpop.f32.mrf.mxu0
      %v2138 = vpop.f32.mrf.mxu0
      %v2139 = vadd.f32 %v1905, %v2138
      %v2140 = vpop.f32.mrf.mxu0
      %2141 = vmatprep.mubr.bf16.mxu0 0
      %2142 = vmatmul.mubr.bf16.gmra.mxu0 %v1570
      %v2143 = vpop.f32.mrf.mxu0
      %v2144 = vadd.f32 %v1907, %v2143
      %v2145 = vpop.f32.mrf.mxu0
      %v2146 = vpop.f32.mrf.mxu0
      %v2147 = vadd.f32 %v1940, %v2146
      %v2148 = vpop.f32.mrf.mxu0
      %2149 = vdwg.mxu0
      %s2150 = scalar_lea.vmem %s3, 128
      %v2151 = vld [vmem:[%s2150] sm:$0xf]
      %v2152 = vld [vmem:[%s2150 + $0x4] sm:$0xf]
      %v2153 = vld [vmem:[%s2150 + $0x8] sm:$0xf]
      %v2154 = vld [vmem:[%s2150 + $0xc] sm:$0xf]
      %v2155 = vld [vmem:[%s2150 + $0x10] sm:$0xf]
      %v2156 = vld [vmem:[%s2150 + $0x14] sm:$0xf]
      %v2157 = vld [vmem:[%s2150 + $0x18] sm:$0xf]
      %v2158 = vld [vmem:[%s2150 + $0x1c] sm:$0xf]
      %v2159 = vld [vmem:[%s2150 + $0x20] sm:$0xf]
      %v2160 = vld [vmem:[%s2150 + $0x24] sm:$0xf]
      %v2161 = vld [vmem:[%s2150 + $0x28] sm:$0xf]
      %v2162 = vld [vmem:[%s2150 + $0x2c] sm:$0xf]
      %v2163 = vld [vmem:[%s2150 + $0x30] sm:$0xf]
      %v2164 = vld [vmem:[%s2150 + $0x34] sm:$0xf]
      %v2165 = vld [vmem:[%s2150 + $0x38] sm:$0xf]
      %v2166 = vld [vmem:[%s2150 + $0x3c] sm:$0xf]
      %v2183 = vunpack.c.l.b16 %v2151
      %v2184 = vunpack.c.l.b16 %v2152
      %v2185 = vunpack.c.l.b16 %v2153
      %v2186 = vunpack.c.l.b16 %v2154
      %v2187 = vunpack.c.l.b16 %v2155
      %v2188 = vunpack.c.l.b16 %v2156
      %v2189 = vunpack.c.l.b16 %v2157
      %v2190 = vunpack.c.l.b16 %v2158
      %v2191 = vunpack.c.l.b16 %v2159
      %v2192 = vunpack.c.l.b16 %v2160
      %v2193 = vunpack.c.l.b16 %v2161
      %v2194 = vunpack.c.l.b16 %v2162
      %v2195 = vunpack.c.l.b16 %v2163
      %v2196 = vunpack.c.l.b16 %v2164
      %v2197 = vunpack.c.l.b16 %v2165
      %v2198 = vunpack.c.l.b16 %v2166
      %v2199 = vpack.c.b16 %v2184, %v2183
      %v2200 = vpack.c.b16 %v2186, %v2185
      %v2201 = vpack.c.b16 %v2188, %v2187
      %v2202 = vpack.c.b16 %v2190, %v2189
      %v2203 = vpack.c.b16 %v2192, %v2191
      %v2204 = vpack.c.b16 %v2194, %v2193
      %v2205 = vpack.c.b16 %v2196, %v2195
      %v2206 = vpack.c.b16 %v2198, %v2197
      %2215 = vmatprep.subr.bf16.mxu0 0
      %2216 = vmatpush1.bf16.msra.mxu0 %v2206
      %2217 = vmatprep.subr.bf16.mxu0 0
      %2218 = vmatpush1.bf16.msra.mxu0 %v2205
      %2219 = vmatprep.subr.bf16.mxu0 0
      %2220 = vmatpush1.bf16.msra.mxu0 %v2204
      %2221 = vmatprep.subr.bf16.mxu0 0
      %2222 = vmatpush1.bf16.msra.mxu0 %v2203
      %2223 = vmatprep.subr.bf16.mxu0 0
      %2224 = vmatpush1.bf16.msra.mxu0 %v2202
      %2225 = vmatprep.subr.bf16.mxu0 0
      %2226 = vmatpush1.bf16.msra.mxu0 %v2201
      %2227 = vmatprep.subr.bf16.mxu0 0
      %2228 = vmatpush1.bf16.msra.mxu0 %v2200
      %2229 = vmatprep.subr.bf16.mxu0 0
      %2230 = vmatpush1.bf16.msra.mxu0 %v2199
      %2231 = vmatprep.subr.bf16.mxu0 0
      %2232 = vmatpush2.bf16.msra.mxu0 0
      %2233 = vmatprep.subr.bf16.mxu0 0
      %2234 = vmatpush2.bf16.msra.mxu0 0
      %2235 = vmatprep.subr.bf16.mxu0 0
      %2236 = vmatpush2.bf16.msra.mxu0 0
      %2237 = vmatprep.subr.bf16.mxu0 0
      %2238 = vmatpush2.bf16.msra.mxu0 0
      %2239 = vmatprep.subr.bf16.mxu0 0
      %2240 = vmatpush2.bf16.msra.mxu0 0
      %2241 = vmatprep.subr.bf16.mxu0 0
      %2242 = vmatpush2.bf16.msra.mxu0 0
      %2243 = vmatprep.subr.bf16.mxu0 0
      %2244 = vmatpush2.bf16.msra.mxu0 0
      %2245 = vmatprep.subr.bf16.mxu0 0
      %2246 = vmatpush2.bf16.msra.mxu0 0
      %2247 = vmatprep.mubr.bf16.mxu0 0
      %2248 = vmatmul.mubr.bf16.gmra.mxu0 %v1555
      %v2249 = vpop.f32.mrf.mxu0
      %v2250 = vadd.f32 0.0, %v2249
      %v2251 = vpop.f32.mrf.mxu0
      %v2252 = vpop.f32.mrf.mxu0
      %v2253 = vadd.f32 0.0, %v2252
      %v2254 = vpop.f32.mrf.mxu0
      %2255 = vmatprep.mubr.bf16.mxu0 0
      %2256 = vmatmul.mubr.bf16.gmra.mxu0 %v1556
      %v2257 = vpop.f32.mrf.mxu0
      %v2258 = vadd.f32 0.0, %v2257
      %v2259 = vpop.f32.mrf.mxu0
      %v2260 = vpop.f32.mrf.mxu0
      %v2261 = vadd.f32 0.0, %v2260
      %v2262 = vpop.f32.mrf.mxu0
      %2263 = vmatprep.mubr.bf16.mxu0 0
      %2264 = vmatmul.mubr.bf16.gmra.mxu0 %v1557
      %v2265 = vpop.f32.mrf.mxu0
      %v2266 = vadd.f32 0.0, %v2265
      %v2267 = vpop.f32.mrf.mxu0
      %v2268 = vpop.f32.mrf.mxu0
      %v2269 = vadd.f32 0.0, %v2268
      %v2270 = vpop.f32.mrf.mxu0
      %2271 = vmatprep.mubr.bf16.mxu0 0
      %2272 = vmatmul.mubr.bf16.gmra.mxu0 %v1558
      %v2273 = vpop.f32.mrf.mxu0
      %v2274 = vadd.f32 0.0, %v2273
      %v2275 = vpop.f32.mrf.mxu0
      %v2276 = vpop.f32.mrf.mxu0
      %v2277 = vadd.f32 0.0, %v2276
      %v2278 = vpop.f32.mrf.mxu0
      %2279 = vmatprep.mubr.bf16.mxu0 0
      %2280 = vmatmul.mubr.bf16.gmra.mxu0 %v1559
      %v2281 = vpop.f32.mrf.mxu0
      %v2282 = vadd.f32 0.0, %v2281
      %v2283 = vpop.f32.mrf.mxu0
      %v2284 = vpop.f32.mrf.mxu0
      %v2285 = vadd.f32 0.0, %v2284
      %v2286 = vpop.f32.mrf.mxu0
      %2287 = vmatprep.mubr.bf16.mxu0 0
      %2288 = vmatmul.mubr.bf16.gmra.mxu0 %v1560
      %v2289 = vpop.f32.mrf.mxu0
      %v2290 = vadd.f32 0.0, %v2289
      %v2291 = vpop.f32.mrf.mxu0
      %v2292 = vpop.f32.mrf.mxu0
      %v2293 = vadd.f32 0.0, %v2292
      %v2294 = vpop.f32.mrf.mxu0
      %2295 = vmatprep.mubr.bf16.mxu0 0
      %2296 = vmatmul.mubr.bf16.gmra.mxu0 %v1561
      %v2297 = vpop.f32.mrf.mxu0
      %v2298 = vadd.f32 0.0, %v2297
      %v2299 = vpop.f32.mrf.mxu0
      %v2300 = vpop.f32.mrf.mxu0
      %v2301 = vadd.f32 0.0, %v2300
      %v2302 = vpop.f32.mrf.mxu0
      %2303 = vmatprep.mubr.bf16.mxu0 0
      %2304 = vmatmul.mubr.bf16.gmra.mxu0 %v1562
      %v2305 = vpop.f32.mrf.mxu0
      %v2306 = vadd.f32 0.0, %v2305
      %v2307 = vpop.f32.mrf.mxu0
      %v2308 = vpop.f32.mrf.mxu0
      %v2309 = vadd.f32 0.0, %v2308
      %v2310 = vpop.f32.mrf.mxu0
      %2311 = vmatprep.mubr.bf16.mxu0 0
      %2312 = vmatmul.mubr.bf16.gmra.mxu0 %v1563
      %v2313 = vpop.f32.mrf.mxu0
      %v2314 = vadd.f32 0.0, %v2313
      %v2315 = vpop.f32.mrf.mxu0
      %v2316 = vpop.f32.mrf.mxu0
      %v2317 = vadd.f32 0.0, %v2316
      %v2318 = vpop.f32.mrf.mxu0
      %2319 = vmatprep.mubr.bf16.mxu0 0
      %2320 = vmatmul.mubr.bf16.gmra.mxu0 %v1564
      %v2321 = vpop.f32.mrf.mxu0
      %v2322 = vadd.f32 0.0, %v2321
      %v2323 = vpop.f32.mrf.mxu0
      %v2324 = vpop.f32.mrf.mxu0
      %v2325 = vadd.f32 0.0, %v2324
      %v2326 = vpop.f32.mrf.mxu0
      %2327 = vmatprep.mubr.bf16.mxu0 0
      %2328 = vmatmul.mubr.bf16.gmra.mxu0 %v1565
      %v2329 = vpop.f32.mrf.mxu0
      %v2330 = vadd.f32 0.0, %v2329
      %v2331 = vpop.f32.mrf.mxu0
      %v2332 = vpop.f32.mrf.mxu0
      %v2333 = vadd.f32 0.0, %v2332
      %v2334 = vpop.f32.mrf.mxu0
      %2335 = vmatprep.mubr.bf16.mxu0 0
      %2336 = vmatmul.mubr.bf16.gmra.mxu0 %v1566
      %v2337 = vpop.f32.mrf.mxu0
      %v2338 = vadd.f32 0.0, %v2337
      %v2339 = vpop.f32.mrf.mxu0
      %v2340 = vpop.f32.mrf.mxu0
      %v2341 = vadd.f32 0.0, %v2340
      %v2342 = vpop.f32.mrf.mxu0
      %2343 = vmatprep.mubr.bf16.mxu0 0
      %2344 = vmatmul.mubr.bf16.gmra.mxu0 %v1567
      %v2345 = vpop.f32.mrf.mxu0
      %v2346 = vadd.f32 0.0, %v2345
      %v2347 = vpop.f32.mrf.mxu0
      %v2348 = vpop.f32.mrf.mxu0
      %v2349 = vadd.f32 0.0, %v2348
      %v2350 = vpop.f32.mrf.mxu0
      %2351 = vmatprep.mubr.bf16.mxu0 0
      %2352 = vmatmul.mubr.bf16.gmra.mxu0 %v1568
      %v2353 = vpop.f32.mrf.mxu0
      %v2354 = vadd.f32 0.0, %v2353
      %v2355 = vpop.f32.mrf.mxu0
      %v2356 = vpop.f32.mrf.mxu0
      %v2357 = vadd.f32 0.0, %v2356
      %v2358 = vpop.f32.mrf.mxu0
      %2359 = vmatprep.mubr.bf16.mxu0 0
      %2360 = vmatmul.mubr.bf16.gmra.mxu0 %v1569
      %v2361 = vpop.f32.mrf.mxu0
      %v2362 = vadd.f32 0.0, %v2361
      %v2363 = vpop.f32.mrf.mxu0
      %v2364 = vpop.f32.mrf.mxu0
      %v2365 = vadd.f32 0.0, %v2364
      %v2366 = vpop.f32.mrf.mxu0
      %2367 = vmatprep.mubr.bf16.mxu0 0
      %2368 = vmatmul.mubr.bf16.gmra.mxu0 %v1570
      %v2369 = vpop.f32.mrf.mxu0
      %v2370 = vadd.f32 0.0, %v2369
      %v2371 = vpop.f32.mrf.mxu0
      %v2372 = vpop.f32.mrf.mxu0
      %v2373 = vadd.f32 0.0, %v2372
      %v2374 = vpop.f32.mrf.mxu0
      %2375 = vdwg.mxu0
      %vm2408 = vcmask 1043456
      %v2409 = vrot.slane %v2250, 4
      %v2410 = vrot.slane %v2253, 4
      %v2411 = vsel %vm2408, %v2409, %v2410
      %v2412 = vrot.slane %v2258, 4
      %v2413 = vsel %vm2408, %v2410, %v2412
      %v2414 = vrot.slane %v2261, 4
      %v2415 = vsel %vm2408, %v2412, %v2414
      %v2416 = vrot.slane %v2266, 4
      %v2417 = vsel %vm2408, %v2414, %v2416
      %v2418 = vrot.slane %v2269, 4
      %v2419 = vsel %vm2408, %v2416, %v2418
      %v2420 = vrot.slane %v2274, 4
      %v2421 = vsel %vm2408, %v2418, %v2420
      %v2422 = vrot.slane %v2277, 4
      %v2423 = vsel %vm2408, %v2420, %v2422
      %v2424 = vrot.slane %v2282, 4
      %v2425 = vsel %vm2408, %v2422, %v2424
      %v2426 = vrot.slane %v2285, 4
      %v2427 = vsel %vm2408, %v2424, %v2426
      %v2428 = vrot.slane %v2290, 4
      %v2429 = vsel %vm2408, %v2426, %v2428
      %v2430 = vrot.slane %v2293, 4
      %v2431 = vsel %vm2408, %v2428, %v2430
      %v2432 = vrot.slane %v2298, 4
      %v2433 = vsel %vm2408, %v2430, %v2432
      %v2434 = vrot.slane %v2301, 4
      %v2435 = vsel %vm2408, %v2432, %v2434
      %v2436 = vrot.slane %v2306, 4
      %v2437 = vsel %vm2408, %v2434, %v2436
      %v2438 = vrot.slane %v2309, 4
      %v2439 = vsel %vm2408, %v2436, %v2438
      %v2440 = vrot.slane %v2314, 4
      %v2441 = vsel %vm2408, %v2438, %v2440
      %v2442 = vrot.slane %v2317, 4
      %v2443 = vsel %vm2408, %v2440, %v2442
      %v2444 = vrot.slane %v2322, 4
      %v2445 = vsel %vm2408, %v2442, %v2444
      %v2446 = vrot.slane %v2325, 4
      %v2447 = vsel %vm2408, %v2444, %v2446
      %v2448 = vrot.slane %v2330, 4
      %v2449 = vsel %vm2408, %v2446, %v2448
      %v2450 = vrot.slane %v2333, 4
      %v2451 = vsel %vm2408, %v2448, %v2450
      %v2452 = vrot.slane %v2338, 4
      %v2453 = vsel %vm2408, %v2450, %v2452
      %v2454 = vrot.slane %v2341, 4
      %v2455 = vsel %vm2408, %v2452, %v2454
      %v2456 = vrot.slane %v2346, 4
      %v2457 = vsel %vm2408, %v2454, %v2456
      %v2458 = vrot.slane %v2349, 4
      %v2459 = vsel %vm2408, %v2456, %v2458
      %v2460 = vrot.slane %v2354, 4
      %v2461 = vsel %vm2408, %v2458, %v2460
      %v2462 = vrot.slane %v2357, 4
      %v2463 = vsel %vm2408, %v2460, %v2462
      %v2464 = vrot.slane %v2362, 4
      %v2465 = vsel %vm2408, %v2462, %v2464
      %v2466 = vrot.slane %v2365, 4
      %v2467 = vsel %vm2408, %v2464, %v2466
      %v2468 = vrot.slane %v2370, 4
      %v2469 = vsel %vm2408, %v2466, %v2468
      %v2470 = vrot.slane %v2373, 4
      %v2471 = vsel %vm2408, %v2468, %v2470
      %v2504 = vsel %vm2408, %v2470, 0.0
      %v2505 = vadd.f32 %v2024, %v2411
      %v2506 = vadd.f32 %v2027, %v2413
      %v2507 = vadd.f32 %v2032, %v2415
      %v2508 = vadd.f32 %v2035, %v2417
      %v2509 = vadd.f32 %v2040, %v2419
      %v2510 = vadd.f32 %v2043, %v2421
      %v2511 = vadd.f32 %v2048, %v2423
      %v2512 = vadd.f32 %v2051, %v2425
      %v2513 = vadd.f32 %v2056, %v2427
      %v2514 = vadd.f32 %v2059, %v2429
      %v2515 = vadd.f32 %v2064, %v2431
      %v2516 = vadd.f32 %v2067, %v2433
      %v2517 = vadd.f32 %v2072, %v2435
      %v2518 = vadd.f32 %v2075, %v2437
      %v2519 = vadd.f32 %v2080, %v2439
      %v2520 = vadd.f32 %v2083, %v2441
      %v2521 = vadd.f32 %v2088, %v2443
      %v2522 = vadd.f32 %v2091, %v2445
      %v2523 = vadd.f32 %v2096, %v2447
      %v2524 = vadd.f32 %v2099, %v2449
      %v2525 = vadd.f32 %v2104, %v2451
      %v2526 = vadd.f32 %v2107, %v2453
      %v2527 = vadd.f32 %v2112, %v2455
      %v2528 = vadd.f32 %v2115, %v2457
      %v2529 = vadd.f32 %v2120, %v2459
      %v2530 = vadd.f32 %v2123, %v2461
      %v2531 = vadd.f32 %v2128, %v2463
      %v2532 = vadd.f32 %v2131, %v2465
      %v2533 = vadd.f32 %v2136, %v2467
      %v2534 = vadd.f32 %v2139, %v2469
      %v2535 = vadd.f32 %v2144, %v2471
      %v2536 = vadd.f32 %v2147, %v2504
      %v2537 = vld [vmem:[%s4] sm:$0x1]
      %v2539 = vlaneseq
      %v2540 = vshrl.u32 %v2539, 7
      %v2541 = vsub.s32 0, %v2540
      %v2542 = vrot.slane %v2537, %v2541
      %v2544 = vadd.f32 %v2505, %v2542
      %v2545 = vadd.f32 %v2506, %v2542
      %v2546 = vadd.f32 %v2507, %v2542
      %v2547 = vadd.f32 %v2508, %v2542
      %v2548 = vadd.f32 %v2509, %v2542
      %v2549 = vadd.f32 %v2510, %v2542
      %v2550 = vadd.f32 %v2511, %v2542
      %v2551 = vadd.f32 %v2512, %v2542
      %v2552 = vadd.f32 %v2513, %v2542
      %v2553 = vadd.f32 %v2514, %v2542
      %v2554 = vadd.f32 %v2515, %v2542
      %v2555 = vadd.f32 %v2516, %v2542
      %v2556 = vadd.f32 %v2517, %v2542
      %v2557 = vadd.f32 %v2518, %v2542
      %v2558 = vadd.f32 %v2519, %v2542
      %v2559 = vadd.f32 %v2520, %v2542
      %v2560 = vadd.f32 %v2521, %v2542
      %v2561 = vadd.f32 %v2522, %v2542
      %v2562 = vadd.f32 %v2523, %v2542
      %v2563 = vadd.f32 %v2524, %v2542
      %v2564 = vadd.f32 %v2525, %v2542
      %v2565 = vadd.f32 %v2526, %v2542
      %v2566 = vadd.f32 %v2527, %v2542
      %v2567 = vadd.f32 %v2528, %v2542
      %v2568 = vadd.f32 %v2529, %v2542
      %v2569 = vadd.f32 %v2530, %v2542
      %v2570 = vadd.f32 %v2531, %v2542
      %v2571 = vadd.f32 %v2532, %v2542
      %v2572 = vadd.f32 %v2533, %v2542
      %v2573 = vadd.f32 %v2534, %v2542
      %v2574 = vadd.f32 %v2535, %v2542
      %v2575 = vadd.f32 %v2536, %v2542
      %v2576 = vmax.f32 %v2544, 0.0
      %v2577 = vmax.f32 %v2545, 0.0
      %v2578 = vmax.f32 %v2546, 0.0
      %v2579 = vmax.f32 %v2547, 0.0
      %v2580 = vmax.f32 %v2548, 0.0
      %v2581 = vmax.f32 %v2549, 0.0
      %v2582 = vmax.f32 %v2550, 0.0
      %v2583 = vmax.f32 %v2551, 0.0
      %v2584 = vmax.f32 %v2552, 0.0
      %v2585 = vmax.f32 %v2553, 0.0
      %v2586 = vmax.f32 %v2554, 0.0
      %v2587 = vmax.f32 %v2555, 0.0
      %v2588 = vmax.f32 %v2556, 0.0
      %v2589 = vmax.f32 %v2557, 0.0
      %v2590 = vmax.f32 %v2558, 0.0
      %v2591 = vmax.f32 %v2559, 0.0
      %v2592 = vmax.f32 %v2560, 0.0
      %v2593 = vmax.f32 %v2561, 0.0
      %v2594 = vmax.f32 %v2562, 0.0
      %v2595 = vmax.f32 %v2563, 0.0
      %v2596 = vmax.f32 %v2564, 0.0
      %v2597 = vmax.f32 %v2565, 0.0
      %v2598 = vmax.f32 %v2566, 0.0
      %v2599 = vmax.f32 %v2567, 0.0
      %v2600 = vmax.f32 %v2568, 0.0
      %v2601 = vmax.f32 %v2569, 0.0
      %v2602 = vmax.f32 %v2570, 0.0
      %v2603 = vmax.f32 %v2571, 0.0
      %v2604 = vmax.f32 %v2572, 0.0
      %v2605 = vmax.f32 %v2573, 0.0
      %v2606 = vmax.f32 %v2574, 0.0
      %v2607 = vmax.f32 %v2575, 0.0
      %v2608 = vlaneseq
      %v2609 = vshrl.u32 %v2608, 7
      %v2610 = vadd.s32 %v2609, 8
      %vm2611 = vcmp.lt.s32.totalorder %v2609, 8
      %vm2612 = vcmp.lt.s32.totalorder %v2610, 8
      %vm2613 = vcmp.lt.s32.totalorder %v2609, 0
      %v2614 = vsub.s32 0, %v2609
      %v2615 = vsel %vm2613, %v2614, %v2609
      %v2616 = vshrl.u32 %v2615, 1
      %v2617 = vand.u32 %v2615, 1
      %v2618 = vsub.s32 0, %v2617
      %v2619 = vsel %vm2613, %v2618, %v2617
      %vm2620 = vcmp.lt.s32.totalorder %v2610, 0
      %v2621 = vsub.s32 0, %v2610
      %v2622 = vsel %vm2620, %v2621, %v2610
      %v2623 = vshrl.u32 %v2622, 1
      %v2624 = vand.u32 %v2622, 1
      %v2625 = vsub.s32 0, %v2624
      %v2626 = vsel %vm2620, %v2625, %v2624
      %vm2627 = vcmp.ne.s32.totalorder %v2619, 0
      %vm2628 = vcmp.ne.s32.totalorder %v2626, 0
      %vm2629 = vcmp.lt.s32.totalorder %v2619, 0
      %vm2630 = vcmp.lt.s32.totalorder %v2626, 0
      %vm2631 = vmand %vm2629, %vm2627
      %vm2632 = vmand %vm2630, %vm2628
      %v2633 = vadd.s32 %v2619, 2
      %v2634 = vadd.s32 %v2626, 2
      %v2635 = vsel %vm2631, %v2633, %v2619
      %v2636 = vsel %vm2632, %v2634, %v2626
      %vm2637 = vcmp.eq.s32.totalorder %v2635, 0
      %vm2638 = vcmp.eq.s32.totalorder %v2636, 0
      %vm2639 = vmand %vm2611, %vm2637
      %vm2640 = vmand %vm2612, %vm2638
      %v2641 = vsel %vm2639, 1, 0
      %v2642 = vsel %vm2640, 1, 0
      %vm2643 = vcmp.eq.s32.totalorder %v2641, 1
      %vm2644 = vcmp.eq.s32.totalorder %v2642, 1
      %v2645 = vsel %vm2643, %v2576, 0.0
      %v2646 = vsel %vm2644, %v2577, 0.0
      %v2647 = vsel %vm2643, %v2578, 0.0
      %v2648 = vsel %vm2644, %v2579, 0.0
      %v2649 = vsel %vm2643, %v2580, 0.0
      %v2650 = vsel %vm2644, %v2581, 0.0
      %v2651 = vsel %vm2643, %v2582, 0.0
      %v2652 = vsel %vm2644, %v2583, 0.0
      %v2653 = vsel %vm2643, %v2584, 0.0
      %v2654 = vsel %vm2644, %v2585, 0.0
      %v2655 = vsel %vm2643, %v2586, 0.0
      %v2656 = vsel %vm2644, %v2587, 0.0
      %v2657 = vsel %vm2643, %v2588, 0.0
      %v2658 = vsel %vm2644, %v2589, 0.0
      %v2659 = vsel %vm2643, %v2590, 0.0
      %v2660 = vsel %vm2644, %v2591, 0.0
      %v2661 = vsel %vm2643, %v2592, 0.0
      %v2662 = vsel %vm2644, %v2593, 0.0
      %v2663 = vsel %vm2643, %v2594, 0.0
      %v2664 = vsel %vm2644, %v2595, 0.0
      %v2665 = vsel %vm2643, %v2596, 0.0
      %v2666 = vsel %vm2644, %v2597, 0.0
      %v2667 = vsel %vm2643, %v2598, 0.0
      %v2668 = vsel %vm2644, %v2599, 0.0
      %v2669 = vsel %vm2643, %v2600, 0.0
      %v2670 = vsel %vm2644, %v2601, 0.0
      %v2671 = vsel %vm2643, %v2602, 0.0
      %v2672 = vsel %vm2644, %v2603, 0.0
      %v2673 = vsel %vm2643, %v2604, 0.0
      %v2674 = vsel %vm2644, %v2605, 0.0
      %v2675 = vsel %vm2643, %v2606, 0.0
      %v2676 = vsel %vm2644, %v2607, 0.0
      %v2677 = vmax.f32 %v2645, %v2646
      %v2678 = vrot.slane %v2677, 4
      %v2679 = vmax.f32 %v2677, %v2678
      %v2680 = vrot.slane %v2679, 2
      %v2681 = vmax.f32 %v2679, %v2680
      %v2682 = vrot.slane %v2681, 1
      %v2683 = vmax.f32 %v2681, %v2682
      %v2684 = vmax.f32 %v2647, %v2648
      %v2685 = vrot.slane %v2684, 4
      %v2686 = vmax.f32 %v2684, %v2685
      %v2687 = vrot.slane %v2686, 2
      %v2688 = vmax.f32 %v2686, %v2687
      %v2689 = vrot.slane %v2688, 1
      %v2690 = vmax.f32 %v2688, %v2689
      %v2691 = vmax.f32 %v2649, %v2650
      %v2692 = vrot.slane %v2691, 4
      %v2693 = vmax.f32 %v2691, %v2692
      %v2694 = vrot.slane %v2693, 2
      %v2695 = vmax.f32 %v2693, %v2694
      %v2696 = vrot.slane %v2695, 1
      %v2697 = vmax.f32 %v2695, %v2696
      %v2698 = vmax.f32 %v2651, %v2652
      %v2699 = vrot.slane %v2698, 4
      %v2700 = vmax.f32 %v2698, %v2699
      %v2701 = vrot.slane %v2700, 2
      %v2702 = vmax.f32 %v2700, %v2701
      %v2703 = vrot.slane %v2702, 1
      %v2704 = vmax.f32 %v2702, %v2703
      %v2705 = vmax.f32 %v2653, %v2654
      %v2706 = vrot.slane %v2705, 4
      %v2707 = vmax.f32 %v2705, %v2706
      %v2708 = vrot.slane %v2707, 2
      %v2709 = vmax.f32 %v2707, %v2708
      %v2710 = vrot.slane %v2709, 1
      %v2711 = vmax.f32 %v2709, %v2710
      %v2712 = vmax.f32 %v2655, %v2656
      %v2713 = vrot.slane %v2712, 4
      %v2714 = vmax.f32 %v2712, %v2713
      %v2715 = vrot.slane %v2714, 2
      %v2716 = vmax.f32 %v2714, %v2715
      %v2717 = vrot.slane %v2716, 1
      %v2718 = vmax.f32 %v2716, %v2717
      %v2719 = vmax.f32 %v2657, %v2658
      %v2720 = vrot.slane %v2719, 4
      %v2721 = vmax.f32 %v2719, %v2720
      %v2722 = vrot.slane %v2721, 2
      %v2723 = vmax.f32 %v2721, %v2722
      %v2724 = vrot.slane %v2723, 1
      %v2725 = vmax.f32 %v2723, %v2724
      %v2726 = vmax.f32 %v2659, %v2660
      %v2727 = vrot.slane %v2726, 4
      %v2728 = vmax.f32 %v2726, %v2727
      %v2729 = vrot.slane %v2728, 2
      %v2730 = vmax.f32 %v2728, %v2729
      %v2731 = vrot.slane %v2730, 1
      %v2732 = vmax.f32 %v2730, %v2731
      %v2733 = vmax.f32 %v2661, %v2662
      %v2734 = vrot.slane %v2733, 4
      %v2735 = vmax.f32 %v2733, %v2734
      %v2736 = vrot.slane %v2735, 2
      %v2737 = vmax.f32 %v2735, %v2736
      %v2738 = vrot.slane %v2737, 1
      %v2739 = vmax.f32 %v2737, %v2738
      %v2740 = vmax.f32 %v2663, %v2664
      %v2741 = vrot.slane %v2740, 4
      %v2742 = vmax.f32 %v2740, %v2741
      %v2743 = vrot.slane %v2742, 2
      %v2744 = vmax.f32 %v2742, %v2743
      %v2745 = vrot.slane %v2744, 1
      %v2746 = vmax.f32 %v2744, %v2745
      %v2747 = vmax.f32 %v2665, %v2666
      %v2748 = vrot.slane %v2747, 4
      %v2749 = vmax.f32 %v2747, %v2748
      %v2750 = vrot.slane %v2749, 2
      %v2751 = vmax.f32 %v2749, %v2750
      %v2752 = vrot.slane %v2751, 1
      %v2753 = vmax.f32 %v2751, %v2752
      %v2754 = vmax.f32 %v2667, %v2668
      %v2755 = vrot.slane %v2754, 4
      %v2756 = vmax.f32 %v2754, %v2755
      %v2757 = vrot.slane %v2756, 2
      %v2758 = vmax.f32 %v2756, %v2757
      %v2759 = vrot.slane %v2758, 1
      %v2760 = vmax.f32 %v2758, %v2759
      %v2761 = vmax.f32 %v2669, %v2670
      %v2762 = vrot.slane %v2761, 4
      %v2763 = vmax.f32 %v2761, %v2762
      %v2764 = vrot.slane %v2763, 2
      %v2765 = vmax.f32 %v2763, %v2764
      %v2766 = vrot.slane %v2765, 1
      %v2767 = vmax.f32 %v2765, %v2766
      %v2768 = vmax.f32 %v2671, %v2672
      %v2769 = vrot.slane %v2768, 4
      %v2770 = vmax.f32 %v2768, %v2769
      %v2771 = vrot.slane %v2770, 2
      %v2772 = vmax.f32 %v2770, %v2771
      %v2773 = vrot.slane %v2772, 1
      %v2774 = vmax.f32 %v2772, %v2773
      %v2775 = vmax.f32 %v2673, %v2674
      %v2776 = vrot.slane %v2775, 4
      %v2777 = vmax.f32 %v2775, %v2776
      %v2778 = vrot.slane %v2777, 2
      %v2779 = vmax.f32 %v2777, %v2778
      %v2780 = vrot.slane %v2779, 1
      %v2781 = vmax.f32 %v2779, %v2780
      %v2782 = vmax.f32 %v2675, %v2676
      %v2783 = vrot.slane %v2782, 4
      %v2784 = vmax.f32 %v2782, %v2783
      %v2785 = vrot.slane %v2784, 2
      %v2786 = vmax.f32 %v2784, %v2785
      %v2787 = vrot.slane %v2786, 1
      %v2788 = vmax.f32 %v2786, %v2787
      %vm2805 = vcmask 1041409
      %v2806 = vsel %vm2805, %v2690, %v2683
      %vm2807 = vcmask 1042434
      %v2808 = vsel %vm2807, %v2697, %v2806
      %vm2809 = vcmask 1043459
      %v2810 = vsel %vm2809, %v2704, %v2808
      %vm2811 = vcmask 1044484
      %v2812 = vsel %vm2811, %v2711, %v2810
      %vm2813 = vcmask 1045509
      %v2814 = vsel %vm2813, %v2718, %v2812
      %vm2815 = vcmask 1046534
      %v2816 = vsel %vm2815, %v2725, %v2814
      %vm2817 = vcmask 1047559
      %v2818 = vsel %vm2817, %v2732, %v2816
      %v2819 = vsel %vm2805, %v2746, %v2739
      %v2820 = vsel %vm2807, %v2753, %v2819
      %v2821 = vsel %vm2809, %v2760, %v2820
      %v2822 = vsel %vm2811, %v2767, %v2821
      %v2823 = vsel %vm2813, %v2774, %v2822
      %v2824 = vsel %vm2815, %v2781, %v2823
      %v2825 = vsel %vm2817, %v2788, %v2824
      %2828 = vst [vmem:[%s226] sm:$0xff] %v2818
      %2829 = vst [vmem:[%s226 + $0x8] sm:$0xff] %v2825
      %s2830 = smul.u32 2, %s16
      %p2831 = scmp.lt.s32.totalorder %s2830, 3
      %s2832 = scalar_select %p2831, %s2830, 3
      %s2833 = smul.addr %s2832, 8
      %s2834 = scalar_lea.vmem %s5, %s2833
      // Predicated region
      $region41: #{model_forward.2} parent=39 // pred_check
        %p2835 = pneg %p144
      $region42: #{model_forward.2} parent=39 // pred_check_branch
        %2837 = sbr.rel (%p2835) target = $region44
      $region43: #{model_forward.2} parent=39 // pred_region
        %s2838 = smul.u32 2, %s16
      $region44: #{model_forward.2} parent=39 // pred_fallthru
        _
    $region40: #{model_forward.2} parent=5 // pred_fallthru
      _
    %p2839 = scmp.le.s32.totalorder 2, %s11
    // Predicated region
    $region45: #{model_forward.2} parent=5 // pred_check
      %p2840 = pneg %p2839
    $region46: #{model_forward.2} parent=5 // pred_check_branch
      %2842 = sbr.rel (%p2840) target = $region48
    $region47: #{model_forward.2} parent=5 // pred_region
      %s2843 = ssub.s32 %s11, 2
      // Predicated region
      $region49: #{model_forward.2} parent=47 // pred_check
        %p2844 = pneg %p150
      $region50: #{model_forward.2} parent=47 // pred_check_branch
        %2846 = sbr.rel (%p2844) target = $region52
      $region51: #{model_forward.2} parent=47 // pred_region
        %s2847 = smul.u32 2, %s17
        %p2848 = scmp.lt.s32.totalorder %s2847, 3
        %s2849 = scalar_select %p2848, %s2847, 3
        %s2850 = smul.addr %s2849, 8
        %s2851 = scalar_lea.vmem %s5, %s2850
      $region52: #{model_forward.2} parent=47 // pred_fallthru
        _
    $region48: #{model_forward.2} parent=5 // pred_fallthru
      _
  $region6: #{model_forward.2} parent=0 // loop_footer
    %s15 = sadd.s32 1, %s11
  $region7: #{model_forward.2} parent=0 // loop_footer_branch
    %10 = sbr.rel target = $region3
  $region8: #{model_forward.2} parent=0 // loop_exit
    _

</llo_original>
